<compile_context>
chip_gen: v5e
topology: v5e:2x2
jax: 0.10.0
libtpu: 0.0.40
codegen_flags: <defaults>
</compile_context>

<pallas_src>
import jax
import jax.numpy as jnp
from jax.experimental import pallas as pl
from jax.experimental.pallas import tpu as pltpu

NUM_RELATION = 7        # GearNet num_relation
NUM_ANGLE_BIN = 8       # GearNet num_angle_bin
EDGE_INPUT_DIM = 59     # GearNet edge_input_dim
BN_EPS = 1e-5           # torch.nn.BatchNorm1d default eps
DPAD = 128              # lane-dense padded output-feature width


def _round_up(v, m):
    return (v + m - 1) // m * m


def _bn_train(x, gamma, beta):
    """BatchNorm1d (training mode), single-pass statistics.
    var = E[x^2] - mean^2, clamped at 0."""
    inv_n = 1.0 / x.shape[0]
    mean = jnp.sum(x, axis=0, keepdims=True) * inv_n
    ex2 = jnp.sum(x * x, axis=0, keepdims=True) * inv_n
    var = jnp.maximum(ex2 - mean * mean, 0.0)
    return gamma * (x - mean) * jax.lax.rsqrt(var + BN_EPS) + beta


# ----------------------------------------------------------------------------
# Pallas kernel: all layers + readout, grid axis = layer index
# ----------------------------------------------------------------------------
def gearnet_fused_kernel(
    sc_ref,                                       # scalar-prefetch (L,) int32 short-cut flags
    x0_ref, e0_ref, adjm_ref, snodem_ref, mlinem_ref, n2g_ref,
    wlin_ref, wself_ref, ewlin_ref, ewself_ref, vecs_ref,
    hid_ref, gf_ref,
    cur_x, cur_e):
    """One grid step == one GearNet layer (node relational conv + line-graph
    edge conv + edge-message update + batch norms + ReLU + shortcut) plus the
    per-layer sum readout.  Layer state is carried in VMEM scratch."""
    f32 = jnp.float32
    l = pl.program_id(0)

    @pl.when(l == 0)
    def _():
        cur_x[...] = x0_ref[...]
        cur_e[...] = e0_ref[...]

    x = cur_x[...]                                # (N, DPAD) f32
    e_in = cur_e[...]                             # (E, KE)   f32
    N = x.shape[0]
    E = e_in.shape[0]
    KE = e_in.shape[1]

    wlin = wlin_ref[0]                            # (R*KN, DPAD)  dense-K packed
    wself = wself_ref[0]                          # (KN, DPAD)
    ewlin = ewlin_ref[0]                          # (A*KE, DPAD)  dense-K packed
    ewself = ewself_ref[0]                        # (KE, DPAD)
    KN = wself.shape[0]

    vecs = vecs_ref[...]                          # (1, 10, DPAD)

    def vrow(k):
        return vecs[:, k, :]                      # (1, DPAD)

    b_lin, b_self = vrow(0), vrow(1)
    bn1_g, bn1_b = vrow(2), vrow(3)
    eb_lin, eb_self = vrow(4), vrow(5)
    bn2_g, bn2_b = vrow(6), vrow(7)
    bn3_g, bn3_b = vrow(8), vrow(9)

    op_dt = adjm_ref.dtype                        # bf16 operators fed straight to MXU

    # ---- edge conv on the spatial line graph (runs first so its output can
    #      share the wlin weight contraction with the node conv below) ----
    eagg = jnp.dot(mlinem_ref[...], e_in.astype(op_dt),     # (A*E, KE), M-stacked
                   preferred_element_type=f32)
    elin = jnp.zeros((E, DPAD), f32)
    for a in range(NUM_ANGLE_BIN):                # dense-K contraction, no VMEM slab
        elin += jnp.dot(eagg[a * E:(a + 1) * E, :],
                        ewlin[a * KE:(a + 1) * KE, :],
                        preferred_element_type=f32)
    edge_h = (elin + eb_lin
              + jnp.dot(e_in, ewself, preferred_element_type=f32) + eb_self)
    edge_h = jnp.maximum(_bn_train(edge_h, bn2_g, bn2_b), 0.0)

    # ---- node relational conv + edge-message update (share wlin) ----
    x_k = x[:, :KN]
    agg1 = jnp.dot(adjm_ref[...], x_k.astype(op_dt),               # (R*N, KN)
                   preferred_element_type=f32)
    agg2 = jnp.dot(snodem_ref[...], edge_h[:, :KN].astype(op_dt),  # (R*N, KN)
                   preferred_element_type=f32)
    both = jnp.zeros((2 * N, DPAD), f32)
    for r in range(NUM_RELATION):                 # one M=2N dot per relation
        lhs = jnp.concatenate(
            [agg1[r * N:(r + 1) * N, :], agg2[r * N:(r + 1) * N, :]], axis=0)
        both += jnp.dot(lhs, wlin[r * KN:(r + 1) * KN, :],
                        preferred_element_type=f32)
    lin, lin2 = both[:N, :], both[N:, :]

    node_h = (lin + b_lin
              + jnp.dot(x_k, wself, preferred_element_type=f32) + b_self)
    node_h = jnp.maximum(_bn_train(node_h, bn1_g, bn1_b), 0.0)     # conv BN + ReLU
    sc = sc_ref[l].astype(f32)                    # 1.0 iff short_cut and shapes match
    hidden = node_h + sc * x
    hidden = hidden + jnp.maximum(lin2 + b_lin, 0.0)               # edge-message update
    hidden = _bn_train(hidden, bn3_g, bn3_b)                       # outer GearNet BN

    # carry state to the next layer + per-layer outputs (bf16 writeback)
    cur_x[...] = hidden
    cur_e[...] = edge_h[:, :KE]
    hid_ref[0] = hidden.astype(hid_ref.dtype)
    gf_ref[0] = jnp.dot(n2g_ref[...], hidden,
                        preferred_element_type=f32).astype(gf_ref.dtype)


# ----------------------------------------------------------------------------
# pallas_call wrapper
# ----------------------------------------------------------------------------
def gearnet_forward_fused(x0p, e0p, adjm, snodem, mlinem, n2g, stacked, sc_flags):
    L = int(sc_flags.shape[0])
    N, E, B = x0p.shape[0], e0p.shape[0], n2g.shape[0]
    KE = e0p.shape[1]
    KN = stacked["wself"].shape[1]
    R, A = NUM_RELATION, NUM_ANGLE_BIN

    def resident(shape):                  # same block every layer -> DMA'd once
        nd = len(shape)
        return pl.BlockSpec(tuple(shape), lambda l, sc: (0,) * nd)

    def per_layer(shape):                 # one block per layer along the leading axis
        nd = len(shape)
        return pl.BlockSpec((1,) + tuple(shape), lambda l, sc: (l,) + (0,) * nd)

    grid_spec = pltpu.PrefetchScalarGridSpec(
        num_scalar_prefetch=1,
        grid=(L,),
        in_specs=[
            resident((N, DPAD)),          # x0 (padded)
            resident((E, KE)),            # e0 (padded)
            resident((R * N, N)),         # adjM   bf16
            resident((R * N, E)),         # snodeM bf16
            resident((A * E, E)),         # mlineM bf16
            resident((B, N)),             # node->graph pooling
            per_layer((R * KN, DPAD)),    # wlin  (dense K)
            per_layer((KN, DPAD)),        # wself
            per_layer((A * KE, DPAD)),    # ewlin (dense K)
            per_layer((KE, DPAD)),        # ewself
            per_layer((10, DPAD)),        # biases / BN params
        ],
        out_specs=(per_layer((N, DPAD)), per_layer((B, DPAD))),
        scratch_shapes=[
            pltpu.VMEM((N, DPAD), jnp.float32),   # cur_x (layer carry)
            pltpu.VMEM((E, KE), jnp.float32),     # cur_e (layer carry)
        ],
    )
    out_shape = (jax.ShapeDtypeStruct((L, N, DPAD), jnp.bfloat16),
                 jax.ShapeDtypeStruct((L, B, DPAD), jnp.bfloat16))

    # Explicit VMEM budget from the actual resident + per-layer footprint
    # (x2 for default double-buffering) plus headroom for live intermediates.
    def nbytes(a):
        return int(a.size) * a.dtype.itemsize
    resident_b = sum(nbytes(a) for a in (x0p, e0p, adjm, snodem, mlinem, n2g))
    weight_b = sum(nbytes(stacked[k]) // L
                   for k in ("wlin", "wself", "ewlin", "ewself", "vecs"))
    out_b = (N * DPAD + B * DPAD) * 2
    scratch_b = (N * DPAD + E * KE) * 4
    interm_b = (A * E * KE + 2 * R * N * KN + 2 * N * DPAD
                + 4 * E * DPAD + 4 * N * DPAD) * 4
    vmem_limit = int(min(2 * (resident_b + weight_b + out_b)
                         + scratch_b + interm_b + (8 << 20), 96 << 20))

    return pl.pallas_call(
        gearnet_fused_kernel,
        grid_spec=grid_spec,
        out_shape=out_shape,
        compiler_params=pltpu.CompilerParams(
            dimension_semantics=("arbitrary",),   # layers are inherently sequential
            vmem_limit_bytes=vmem_limit),
    )(sc_flags, x0p, e0p, adjm, snodem, mlinem, n2g,
      stacked["wlin"], stacked["wself"], stacked["ewlin"], stacked["ewself"],
      stacked["vecs"])


# ----------------------------------------------------------------------------
# Graph glue (dense operator construction; plain JAX, computed once per graph)
# ----------------------------------------------------------------------------
def build_dense_operators(graph):
    """Dense, M-stacked equivalents of torchdrug's gather/scatter and
    SpatialLineGraph(8): adjM (R*N, N), snodeM (R*N, E), mlineM (A*E, E)."""
    N = graph["num_node"]
    edge_list = graph["edge_list"]
    node_in, node_out, rel = edge_list[:, 0], edge_list[:, 1], edge_list[:, 2]
    ew = graph["edge_weight"]
    E = edge_list.shape[0]

    gnode = jax.nn.one_hot(node_in, N, dtype=jnp.float32)                 # (E, N) gather
    onehot_out = jax.nn.one_hot(node_out, N, dtype=jnp.float32)           # (E, N)
    rel_onehot = jax.nn.one_hot(rel, NUM_RELATION, dtype=jnp.float32)     # (E, R)
    snode = jnp.einsum("er,en,e->rne", rel_onehot, onehot_out, ew)        # (R, N, E) scatter
    adj = jnp.einsum("rme,en->rmn", snode, gnode)                         # (R, N, N)

    # SpatialLineGraph: line edge (a -> b) exists iff node_out[a] == node_in[b];
    # relation = floor(angle(v_b, -v_a) / pi * num_angle_bin); line edge_weight = 1.
    pos = graph["node_position"]
    v = pos[node_out] - pos[node_in]                                      # (E, 3)
    dot = -(v @ v.T)                                                      # [b, a]
    cross = jnp.cross(v[:, None, :], -v[None, :, :])                      # [b, a, 3]
    y = jnp.sqrt(jnp.sum(cross * cross, axis=-1))
    angle = jnp.arctan2(y, dot)
    # TODO(synk): torchdrug leaves the (measure-zero) exactly-antiparallel case
    # unclamped; we clip the bin into [0, A-1] for safety.
    bins = jnp.clip((angle / jnp.pi * NUM_ANGLE_BIN).astype(jnp.int32),
                    0, NUM_ANGLE_BIN - 1)
    exists = (node_in[:, None] == node_out[None, :]).astype(jnp.float32)  # [b, a]
    mline = exists[None] * (bins[None] ==
                            jnp.arange(NUM_ANGLE_BIN)[:, None, None]).astype(jnp.float32)

    n2g = jax.nn.one_hot(graph["node2graph"], graph["num_graphs"],
                         dtype=jnp.float32).T                             # (B, N)

    # 0/1/edge-weight operators; exact in bf16 for the unit toy edge weights.
    # TODO(synk): keep adjM/snodeM in f32 when edge_weight is not exactly
    # representable in bfloat16.
    adjm = adj.reshape(NUM_RELATION * N, N).astype(jnp.bfloat16)
    snodem = snode.reshape(NUM_RELATION * N, E).astype(jnp.bfloat16)
    mlinem = mline.reshape(NUM_ANGLE_BIN * E, E).astype(jnp.bfloat16)
    return adjm, snodem, mlinem, n2g


# ----------------------------------------------------------------------------
# Parameter packing: dense K (multiple of 8), output dim lane-padded to 128
# ----------------------------------------------------------------------------
def _pad2(x, rows, cols):
    return jnp.pad(x, ((0, rows - x.shape[0]), (0, cols - x.shape[1])))


def pack_params(params, kn, ke):
    layers = params["layers"]
    L = len(layers)
    R, A = NUM_RELATION, NUM_ANGLE_BIN
    wlin = jnp.zeros((L, R * kn, DPAD), jnp.float32)
    wself = jnp.zeros((L, kn, DPAD), jnp.float32)
    ewlin = jnp.zeros((L, A * ke, DPAD), jnp.float32)
    ewself = jnp.zeros((L, ke, DPAD), jnp.float32)
    vecs = jnp.zeros((L, 10, DPAD), jnp.float32)
    for i, p in enumerate(layers):
        d_in, d_out = p["d_in"], p["d_out"]
        de_in, de_out = p["de_in"], p["de_out"]
        w = p["w_lin"].reshape(R, d_in, d_out)
        w = jnp.pad(w, ((0, 0), (0, kn - d_in), (0, DPAD - d_out)))
        wlin = wlin.at[i].set(w.reshape(R * kn, DPAD))
        wself = wself.at[i].set(_pad2(p["w_self"], kn, DPAD))
        ew = p["ew_lin"].reshape(A, de_in, de_out)
        ew = jnp.pad(ew, ((0, 0), (0, ke - de_in), (0, DPAD - de_out)))
        ewlin = ewlin.at[i].set(ew.reshape(A * ke, DPAD))
        ewself = ewself.at[i].set(_pad2(p["ew_self"], ke, DPAD))
        row = jnp.stack([
            _pad2(p["b_lin"], 1, DPAD)[0], _pad2(p["b_self"], 1, DPAD)[0],
            _pad2(p["bn1_g"], 1, DPAD)[0], _pad2(p["bn1_b"], 1, DPAD)[0],
            _pad2(p["eb_lin"], 1, DPAD)[0], _pad2(p["eb_self"], 1, DPAD)[0],
            _pad2(p["bn2_g"], 1, DPAD)[0], _pad2(p["bn2_b"], 1, DPAD)[0],
            _pad2(p["bn3_g"], 1, DPAD)[0], _pad2(p["bn3_b"], 1, DPAD)[0],
        ])
        vecs = vecs.at[i].set(row)
    return dict(wlin=wlin, wself=wself, ewlin=ewlin, ewself=ewself, vecs=vecs)


def gearnet_wrap_forward(graph, node_input, params):
    """GearNetWrapModel.forward -> {"graph_feature", "node_feature"}."""
    layers = params["layers"]
    L = len(layers)
    hidden_dims = [p["d_out"] for p in layers]

    # Dense-K packing widths (sublane-aligned); output width lane-padded to DPAD.
    KN = _round_up(max(p["d_in"] for p in layers), 8)
    KE = _round_up(max(max(p["de_in"], p["de_out"]) for p in layers), 8)
    assert KN <= DPAD and KE <= DPAD and max(hidden_dims) <= DPAD

    adjm, snodem, mlinem, n2g = build_dense_operators(graph)
    x0p = jnp.pad(node_input, ((0, 0), (0, DPAD - node_input.shape[1])))
    e0p = jnp.pad(graph["edge_feature"],
                  ((0, 0), (0, KE - graph["edge_feature"].shape[1])))
    stacked = pack_params(params, KN, KE)

    # short_cut active when hidden shape matches the layer input shape
    dims = [node_input.shape[1]] + hidden_dims
    sc_flags = jnp.array([1 if dims[i] == dims[i + 1] else 0 for i in range(L)],
                         jnp.int32)

    hid_all, gf_all = gearnet_forward_fused(x0p, e0p, adjm, snodem, mlinem, n2g,
                                            stacked, sc_flags)
    # concat_hidden=True: strip lane padding and concatenate per-layer features
    node_feature = jnp.concatenate(
        [hid_all[i, :, :hd].astype(jnp.float32) for i, hd in enumerate(hidden_dims)],
        axis=-1)
    graph_feature = jnp.concatenate(
        [gf_all[i, :, :hd].astype(jnp.float32) for i, hd in enumerate(hidden_dims)],
        axis=-1)
    return {"graph_feature": graph_feature, "node_feature": node_feature}


# ----------------------------------------------------------------------------
# Deterministic parameter / input construction
# ----------------------------------------------------------------------------
def _linear_init(key, fan_in, fan_out):
    kw, kb = jax.random.split(key)
    bound = 1.0 / (fan_in ** 0.5)
    w = jax.random.uniform(kw, (fan_in, fan_out), jnp.float32, -bound, bound)
    b = jax.random.uniform(kb, (1, fan_out), jnp.float32, -bound, bound)
    return w, b


def init_params(key, input_dim, hidden_dims):
    dims = [input_dim] + list(hidden_dims)
    edge_dims = [EDGE_INPUT_DIM] + dims[:-1]
    layers = []
    for i in range(len(hidden_dims)):
        d_in, d_out = dims[i], dims[i + 1]
        de_in, de_out = edge_dims[i], edge_dims[i + 1]   # de_out == d_in
        key, k1, k2, k3, k4, k5, k6, k7, k8, k9, k10 = jax.random.split(key, 11)
        w_lin, b_lin = _linear_init(k1, NUM_RELATION * d_in, d_out)
        w_self, b_self = _linear_init(k2, d_in, d_out)
        ew_lin, eb_lin = _linear_init(k3, NUM_ANGLE_BIN * de_in, de_out)
        ew_self, eb_self = _linear_init(k4, de_in, de_out)
        layers.append(dict(
            d_in=d_in, d_out=d_out, de_in=de_in, de_out=de_out,
            w_lin=w_lin, b_lin=b_lin, w_self=w_self, b_self=b_self,
            bn1_g=1.0 + 0.1 * jax.random.normal(k5, (1, d_out), jnp.float32),
            bn1_b=0.1 * jax.random.normal(k6, (1, d_out), jnp.float32),
            ew_lin=ew_lin, eb_lin=eb_lin, ew_self=ew_self, eb_self=eb_self,
            bn2_g=1.0 + 0.1 * jax.random.normal(k7, (1, de_out), jnp.float32),
            bn2_b=0.1 * jax.random.normal(k8, (1, de_out), jnp.float32),
            bn3_g=1.0 + 0.1 * jax.random.normal(k9, (1, d_out), jnp.float32),
            bn3_b=0.1 * jax.random.normal(k10, (1, d_out), jnp.float32),
        ))
    return {"layers": layers}


def make_graph(key, nodes_per_graph=16, num_graphs=2):
    N = nodes_per_graph * num_graphs
    edges = []
    for g in range(num_graphs):
        base = g * nodes_per_graph
        for i in range(nodes_per_graph):
            for k in (1, 2, 3):
                j = (i + k) % nodes_per_graph
                r = (i + 2 * j + k) % NUM_RELATION
                edges.append((base + i, base + j, r))
    edge_list = jnp.array(edges, dtype=jnp.int32)
    E = edge_list.shape[0]
    k1, k2 = jax.random.split(key)
    node_position = 3.0 * jax.random.normal(k1, (N, 3), jnp.float32)
    edge_feature = jax.random.normal(k2, (E, EDGE_INPUT_DIM), jnp.float32)
    return dict(edge_list=edge_list,
                edge_weight=jnp.ones((E,), jnp.float32),
                edge_feature=edge_feature,
                node_position=node_position,
                node2graph=jnp.repeat(jnp.arange(num_graphs, dtype=jnp.int32),
                                      nodes_per_graph),
                num_graphs=num_graphs,
                num_node=N)


if __name__ == "__main__":
    key = jax.random.PRNGKey(0)
    kg, kx, kp = jax.random.split(key, 3)

    input_dim = 24
    hidden_dims = (32, 32, 32)               # output_dim = sum(hidden_dims) = 96

    graph = make_graph(kg)                   # 2 graphs, 32 nodes, 96 edges
    x = jax.random.normal(kx, (graph["num_node"], input_dim), jnp.float32)
    params = init_params(kp, input_dim, hidden_dims)

    out = gearnet_wrap_forward(graph, x, params)
    jax.block_until_ready(out["graph_feature"])
    jax.block_until_ready(out["node_feature"])

    assert out["node_feature"].shape == (graph["num_node"], sum(hidden_dims))
    assert out["graph_feature"].shape == (graph["num_graphs"], sum(hidden_dims))
    assert bool(jnp.all(jnp.isfinite(out["graph_feature"])))
    assert bool(jnp.all(jnp.isfinite(out["node_feature"])))
    print("KERNEL_OK")
</pallas_src>

<mosaic_0001>
module attributes {stable_mosaic.version = 11 : i64} {
  func.func @gearnet_fused_kernel(%arg0: i32, %arg1: memref<3xi32, #tpu.memory_space<smem>>, %arg2: memref<32x128xf32, #tpu.memory_space<vmem>>, %arg3: memref<96x64xf32, #tpu.memory_space<vmem>>, %arg4: memref<224x32xbf16, #tpu.memory_space<vmem>>, %arg5: memref<224x96xbf16, #tpu.memory_space<vmem>>, %arg6: memref<768x96xbf16, #tpu.memory_space<vmem>>, %arg7: memref<2x32xf32, #tpu.memory_space<vmem>>, %arg8: memref<1x224x128xf32, #tpu.memory_space<vmem>>, %arg9: memref<1x32x128xf32, #tpu.memory_space<vmem>>, %arg10: memref<1x512x128xf32, #tpu.memory_space<vmem>>, %arg11: memref<1x64x128xf32, #tpu.memory_space<vmem>>, %arg12: memref<1x10x128xf32, #tpu.memory_space<vmem>>, %arg13: memref<1x32x128xbf16, #tpu.memory_space<vmem>>, %arg14: memref<1x2x128xbf16, #tpu.memory_space<vmem>>, %arg15: memref<32x128xf32, #tpu.memory_space<vmem>>, %arg16: memref<96x64xf32, #tpu.memory_space<vmem>>) attributes {dimension_semantics = [#tpu.dimension_semantics<arbitrary>], iteration_bounds = array<i64: 3>, scalar_prefetch = 1 : i64, scratch_operands = 2 : i64, tpu.core_type = #tpu.core_type<tc>, window_params = [{pipeline_mode = #tpu.pipeline_mode<synchronous>, transform_indices = @transform_0, window_bounds = array<i64: 32, 128>}, {pipeline_mode = #tpu.pipeline_mode<synchronous>, transform_indices = @transform_1, window_bounds = array<i64: 96, 64>}, {pipeline_mode = #tpu.pipeline_mode<synchronous>, transform_indices = @transform_2, window_bounds = array<i64: 224, 32>}, {pipeline_mode = #tpu.pipeline_mode<synchronous>, transform_indices = @transform_3, window_bounds = array<i64: 224, 96>}, {pipeline_mode = #tpu.pipeline_mode<synchronous>, transform_indices = @transform_4, window_bounds = array<i64: 768, 96>}, {pipeline_mode = #tpu.pipeline_mode<synchronous>, transform_indices = @transform_5, window_bounds = array<i64: 2, 32>}, {transform_indices = @transform_6, window_bounds = array<i64: 1, 224, 128>}, {transform_indices = @transform_7, window_bounds = array<i64: 1, 32, 128>}, {transform_indices = @transform_8, window_bounds = array<i64: 1, 512, 128>}, {transform_indices = @transform_9, window_bounds = array<i64: 1, 64, 128>}, {transform_indices = @transform_10, window_bounds = array<i64: 1, 10, 128>}, {transform_indices = @transform_11, window_bounds = array<i64: 1, 32, 128>}, {transform_indices = @transform_12, window_bounds = array<i64: 1, 2, 128>}]} {
    %c0_i32 = arith.constant 0 : i32
    %0 = arith.cmpi eq, %arg0, %c0_i32 : i32
    %1 = arith.extui %0 : i1 to i32
    %c0_i32_0 = arith.constant 0 : i32
    %2 = arith.cmpi ne, %1, %c0_i32_0 : i32
    scf.if %2 {
      %c0_80 = arith.constant 0 : index
      %c0_81 = arith.constant 0 : index
      %235 = vector.load %arg2[%c0_80, %c0_81] : memref<32x128xf32, #tpu.memory_space<vmem>>, vector<32x128xf32>
      %c0_82 = arith.constant 0 : index
      %c0_83 = arith.constant 0 : index
      %236 = vector.load %arg15[%c0_82, %c0_83] : memref<32x128xf32, #tpu.memory_space<vmem>>, vector<32x128xf32>
      tpu.vector_store %arg15[%c0_82, %c0_83], %235 {strides = array<i32>} : memref<32x128xf32, #tpu.memory_space<vmem>>, vector<32x128xf32>,
      %c0_84 = arith.constant 0 : index
      %c0_85 = arith.constant 0 : index
      %237 = vector.load %arg3[%c0_84, %c0_85] : memref<96x64xf32, #tpu.memory_space<vmem>>, vector<96x64xf32>
      %c0_86 = arith.constant 0 : index
      %c0_87 = arith.constant 0 : index
      %238 = vector.load %arg16[%c0_86, %c0_87] : memref<96x64xf32, #tpu.memory_space<vmem>>, vector<96x64xf32>
      tpu.vector_store %arg16[%c0_86, %c0_87], %237 {strides = array<i32>} : memref<96x64xf32, #tpu.memory_space<vmem>>, vector<96x64xf32>,
    } else {
    }
    %c0 = arith.constant 0 : index
    %c0_1 = arith.constant 0 : index
    %3 = vector.load %arg15[%c0, %c0_1] : memref<32x128xf32, #tpu.memory_space<vmem>>, vector<32x128xf32>
    %c0_2 = arith.constant 0 : index
    %c0_3 = arith.constant 0 : index
    %4 = vector.load %arg16[%c0_2, %c0_3] : memref<96x64xf32, #tpu.memory_space<vmem>>, vector<96x64xf32>
    %c0_4 = arith.constant 0 : index
    %c0_5 = arith.constant 0 : index
    %c0_6 = arith.constant 0 : index
    %5 = vector.load %arg8[%c0_4, %c0_5, %c0_6] : memref<1x224x128xf32, #tpu.memory_space<vmem>>, vector<1x224x128xf32>
    %6 = vector.shape_cast %5 : vector<1x224x128xf32> to vector<224x128xf32>
    %c0_7 = arith.constant 0 : index
    %c0_8 = arith.constant 0 : index
    %c0_9 = arith.constant 0 : index
    %7 = vector.load %arg9[%c0_7, %c0_8, %c0_9] : memref<1x32x128xf32, #tpu.memory_space<vmem>>, vector<1x32x128xf32>
    %8 = vector.shape_cast %7 : vector<1x32x128xf32> to vector<32x128xf32>
    %c0_10 = arith.constant 0 : index
    %c0_11 = arith.constant 0 : index
    %c0_12 = arith.constant 0 : index
    %9 = vector.load %arg10[%c0_10, %c0_11, %c0_12] : memref<1x512x128xf32, #tpu.memory_space<vmem>>, vector<1x512x128xf32>
    %10 = vector.shape_cast %9 : vector<1x512x128xf32> to vector<512x128xf32>
    %c0_13 = arith.constant 0 : index
    %c0_14 = arith.constant 0 : index
    %c0_15 = arith.constant 0 : index
    %11 = vector.load %arg11[%c0_13, %c0_14, %c0_15] : memref<1x64x128xf32, #tpu.memory_space<vmem>>, vector<1x64x128xf32>
    %12 = vector.shape_cast %11 : vector<1x64x128xf32> to vector<64x128xf32>
    %c0_16 = arith.constant 0 : index
    %c0_17 = arith.constant 0 : index
    %c0_18 = arith.constant 0 : index
    %13 = vector.load %arg12[%c0_16, %c0_17, %c0_18] : memref<1x10x128xf32, #tpu.memory_space<vmem>>, vector<1x10x128xf32>
    %14 = vector.extract_strided_slice %13 {offsets = [0, 0, 0], sizes = [1, 1, 128], strides = [1, 1, 1]} : vector<1x10x128xf32> to vector<1x1x128xf32>
    %15 = vector.shape_cast %14 : vector<1x1x128xf32> to vector<1x128xf32>
    %16 = vector.extract_strided_slice %13 {offsets = [0, 1, 0], sizes = [1, 1, 128], strides = [1, 1, 1]} : vector<1x10x128xf32> to vector<1x1x128xf32>
    %17 = vector.shape_cast %16 : vector<1x1x128xf32> to vector<1x128xf32>
    %18 = vector.extract_strided_slice %13 {offsets = [0, 2, 0], sizes = [1, 1, 128], strides = [1, 1, 1]} : vector<1x10x128xf32> to vector<1x1x128xf32>
    %19 = vector.shape_cast %18 : vector<1x1x128xf32> to vector<1x128xf32>
    %20 = vector.extract_strided_slice %13 {offsets = [0, 3, 0], sizes = [1, 1, 128], strides = [1, 1, 1]} : vector<1x10x128xf32> to vector<1x1x128xf32>
    %21 = vector.shape_cast %20 : vector<1x1x128xf32> to vector<1x128xf32>
    %22 = vector.extract_strided_slice %13 {offsets = [0, 4, 0], sizes = [1, 1, 128], strides = [1, 1, 1]} : vector<1x10x128xf32> to vector<1x1x128xf32>
    %23 = vector.shape_cast %22 : vector<1x1x128xf32> to vector<1x128xf32>
    %24 = vector.extract_strided_slice %13 {offsets = [0, 5, 0], sizes = [1, 1, 128], strides = [1, 1, 1]} : vector<1x10x128xf32> to vector<1x1x128xf32>
    %25 = vector.shape_cast %24 : vector<1x1x128xf32> to vector<1x128xf32>
    %26 = vector.extract_strided_slice %13 {offsets = [0, 6, 0], sizes = [1, 1, 128], strides = [1, 1, 1]} : vector<1x10x128xf32> to vector<1x1x128xf32>
    %27 = vector.shape_cast %26 : vector<1x1x128xf32> to vector<1x128xf32>
    %28 = vector.extract_strided_slice %13 {offsets = [0, 7, 0], sizes = [1, 1, 128], strides = [1, 1, 1]} : vector<1x10x128xf32> to vector<1x1x128xf32>
    %29 = vector.shape_cast %28 : vector<1x1x128xf32> to vector<1x128xf32>
    %30 = vector.extract_strided_slice %13 {offsets = [0, 8, 0], sizes = [1, 1, 128], strides = [1, 1, 1]} : vector<1x10x128xf32> to vector<1x1x128xf32>
    %31 = vector.shape_cast %30 : vector<1x1x128xf32> to vector<1x128xf32>
    %32 = vector.extract_strided_slice %13 {offsets = [0, 9, 0], sizes = [1, 1, 128], strides = [1, 1, 1]} : vector<1x10x128xf32> to vector<1x1x128xf32>
    %33 = vector.shape_cast %32 : vector<1x1x128xf32> to vector<1x128xf32>
    %c0_19 = arith.constant 0 : index
    %c0_20 = arith.constant 0 : index
    %34 = vector.load %arg6[%c0_19, %c0_20] : memref<768x96xbf16, #tpu.memory_space<vmem>>, vector<768x96xbf16>
    %35 = arith.truncf %4 : vector<96x64xf32> to vector<96x64xbf16>
    %cst = arith.constant dense<0.000000e+00> : vector<768x64xf32>
    %36 = tpu.matmul %34, %35, %cst {dimension_numbers = #tpu.dot_dimension_numbers<[1], [0], [0], [1], [0, 0, 1, 1], [], []>} : vector<768x96xbf16>, vector<96x64xbf16>, vector<768x64xf32> -> vector<768x64xf32>
    %cst_21 = arith.constant 0.000000e+00 : f32
    %37 = vector.broadcast %cst_21 : f32 to vector<96x128xf32>
    %38 = vector.extract_strided_slice %36 {offsets = [0, 0], sizes = [96, 64], strides = [1, 1]} : vector<768x64xf32> to vector<96x64xf32>
    %39 = vector.extract_strided_slice %10 {offsets = [0, 0], sizes = [64, 128], strides = [1, 1]} : vector<512x128xf32> to vector<64x128xf32>
    %cst_22 = arith.constant dense<0.000000e+00> : vector<96x128xf32>
    %40 = tpu.matmul %38, %39, %cst_22 {dimension_numbers = #tpu.dot_dimension_numbers<[1], [0], [0], [1], [0, 0, 1, 1], [], []>} : vector<96x64xf32>, vector<64x128xf32>, vector<96x128xf32> -> vector<96x128xf32>
    %41 = arith.addf %37, %40 : vector<96x128xf32>
    %42 = vector.extract_strided_slice %36 {offsets = [96, 0], sizes = [96, 64], strides = [1, 1]} : vector<768x64xf32> to vector<96x64xf32>
    %43 = vector.extract_strided_slice %10 {offsets = [64, 0], sizes = [64, 128], strides = [1, 1]} : vector<512x128xf32> to vector<64x128xf32>
    %cst_23 = arith.constant dense<0.000000e+00> : vector<96x128xf32>
    %44 = tpu.matmul %42, %43, %cst_23 {dimension_numbers = #tpu.dot_dimension_numbers<[1], [0], [0], [1], [0, 0, 1, 1], [], []>} : vector<96x64xf32>, vector<64x128xf32>, vector<96x128xf32> -> vector<96x128xf32>
    %45 = arith.addf %41, %44 : vector<96x128xf32>
    %46 = vector.extract_strided_slice %36 {offsets = [192, 0], sizes = [96, 64], strides = [1, 1]} : vector<768x64xf32> to vector<96x64xf32>
    %47 = vector.extract_strided_slice %10 {offsets = [128, 0], sizes = [64, 128], strides = [1, 1]} : vector<512x128xf32> to vector<64x128xf32>
    %cst_24 = arith.constant dense<0.000000e+00> : vector<96x128xf32>
    %48 = tpu.matmul %46, %47, %cst_24 {dimension_numbers = #tpu.dot_dimension_numbers<[1], [0], [0], [1], [0, 0, 1, 1], [], []>} : vector<96x64xf32>, vector<64x128xf32>, vector<96x128xf32> -> vector<96x128xf32>
    %49 = arith.addf %45, %48 : vector<96x128xf32>
    %50 = vector.extract_strided_slice %36 {offsets = [288, 0], sizes = [96, 64], strides = [1, 1]} : vector<768x64xf32> to vector<96x64xf32>
    %51 = vector.extract_strided_slice %10 {offsets = [192, 0], sizes = [64, 128], strides = [1, 1]} : vector<512x128xf32> to vector<64x128xf32>
    %cst_25 = arith.constant dense<0.000000e+00> : vector<96x128xf32>
    %52 = tpu.matmul %50, %51, %cst_25 {dimension_numbers = #tpu.dot_dimension_numbers<[1], [0], [0], [1], [0, 0, 1, 1], [], []>} : vector<96x64xf32>, vector<64x128xf32>, vector<96x128xf32> -> vector<96x128xf32>
    %53 = arith.addf %49, %52 : vector<96x128xf32>
    %54 = vector.extract_strided_slice %36 {offsets = [384, 0], sizes = [96, 64], strides = [1, 1]} : vector<768x64xf32> to vector<96x64xf32>
    %55 = vector.extract_strided_slice %10 {offsets = [256, 0], sizes = [64, 128], strides = [1, 1]} : vector<512x128xf32> to vector<64x128xf32>
    %cst_26 = arith.constant dense<0.000000e+00> : vector<96x128xf32>
    %56 = tpu.matmul %54, %55, %cst_26 {dimension_numbers = #tpu.dot_dimension_numbers<[1], [0], [0], [1], [0, 0, 1, 1], [], []>} : vector<96x64xf32>, vector<64x128xf32>, vector<96x128xf32> -> vector<96x128xf32>
    %57 = arith.addf %53, %56 : vector<96x128xf32>
    %58 = vector.extract_strided_slice %36 {offsets = [480, 0], sizes = [96, 64], strides = [1, 1]} : vector<768x64xf32> to vector<96x64xf32>
    %59 = vector.extract_strided_slice %10 {offsets = [320, 0], sizes = [64, 128], strides = [1, 1]} : vector<512x128xf32> to vector<64x128xf32>
    %cst_27 = arith.constant dense<0.000000e+00> : vector<96x128xf32>
    %60 = tpu.matmul %58, %59, %cst_27 {dimension_numbers = #tpu.dot_dimension_numbers<[1], [0], [0], [1], [0, 0, 1, 1], [], []>} : vector<96x64xf32>, vector<64x128xf32>, vector<96x128xf32> -> vector<96x128xf32>
    %61 = arith.addf %57, %60 : vector<96x128xf32>
    %62 = vector.extract_strided_slice %36 {offsets = [576, 0], sizes = [96, 64], strides = [1, 1]} : vector<768x64xf32> to vector<96x64xf32>
    %63 = vector.extract_strided_slice %10 {offsets = [384, 0], sizes = [64, 128], strides = [1, 1]} : vector<512x128xf32> to vector<64x128xf32>
    %cst_28 = arith.constant dense<0.000000e+00> : vector<96x128xf32>
    %64 = tpu.matmul %62, %63, %cst_28 {dimension_numbers = #tpu.dot_dimension_numbers<[1], [0], [0], [1], [0, 0, 1, 1], [], []>} : vector<96x64xf32>, vector<64x128xf32>, vector<96x128xf32> -> vector<96x128xf32>
    %65 = arith.addf %61, %64 : vector<96x128xf32>
    %66 = vector.extract_strided_slice %36 {offsets = [672, 0], sizes = [96, 64], strides = [1, 1]} : vector<768x64xf32> to vector<96x64xf32>
    %67 = vector.extract_strided_slice %10 {offsets = [448, 0], sizes = [64, 128], strides = [1, 1]} : vector<512x128xf32> to vector<64x128xf32>
    %cst_29 = arith.constant dense<0.000000e+00> : vector<96x128xf32>
    %68 = tpu.matmul %66, %67, %cst_29 {dimension_numbers = #tpu.dot_dimension_numbers<[1], [0], [0], [1], [0, 0, 1, 1], [], []>} : vector<96x64xf32>, vector<64x128xf32>, vector<96x128xf32> -> vector<96x128xf32>
    %69 = arith.addf %65, %68 : vector<96x128xf32>
    %70 = vector.broadcast %23 : vector<1x128xf32> to vector<96x128xf32>
    %71 = arith.addf %69, %70 : vector<96x128xf32>
    %cst_30 = arith.constant dense<0.000000e+00> : vector<96x128xf32>
    %72 = tpu.matmul %4, %12, %cst_30 {dimension_numbers = #tpu.dot_dimension_numbers<[1], [0], [0], [1], [0, 0, 1, 1], [], []>} : vector<96x64xf32>, vector<64x128xf32>, vector<96x128xf32> -> vector<96x128xf32>
    %73 = arith.addf %71, %72 : vector<96x128xf32>
    %74 = vector.broadcast %25 : vector<1x128xf32> to vector<96x128xf32>
    %75 = arith.addf %73, %74 : vector<96x128xf32>
    %cst_31 = arith.constant dense<0.000000e+00> : vector<128xf32>
    %76 = vector.multi_reduction <add>, %75, %cst_31 [0] : vector<96x128xf32> to vector<128xf32>
    %77 = vector.shape_cast %76 : vector<128xf32> to vector<1x128xf32>
    %cst_32 = arith.constant 0.010416667 : f32
    %78 = vector.broadcast %cst_32 : f32 to vector<1x128xf32>
    %79 = arith.mulf %77, %78 : vector<1x128xf32>
    %80 = arith.mulf %75, %75 : vector<96x128xf32>
    %cst_33 = arith.constant dense<0.000000e+00> : vector<128xf32>
    %81 = vector.multi_reduction <add>, %80, %cst_33 [0] : vector<96x128xf32> to vector<128xf32>
    %82 = vector.shape_cast %81 : vector<128xf32> to vector<1x128xf32>
    %cst_34 = arith.constant 0.010416667 : f32
    %83 = vector.broadcast %cst_34 : f32 to vector<1x128xf32>
    %84 = arith.mulf %82, %83 : vector<1x128xf32>
    %85 = arith.mulf %79, %79 : vector<1x128xf32>
    %86 = arith.subf %84, %85 : vector<1x128xf32>
    %cst_35 = arith.constant 0.000000e+00 : f32
    %87 = vector.broadcast %cst_35 : f32 to vector<1x128xf32>
    %88 = arith.maximumf %86, %87 : vector<1x128xf32>
    %89 = vector.broadcast %79 : vector<1x128xf32> to vector<96x128xf32>
    %90 = arith.subf %75, %89 : vector<96x128xf32>
    %91 = vector.broadcast %27 : vector<1x128xf32> to vector<96x128xf32>
    %92 = arith.mulf %91, %90 : vector<96x128xf32>
    %cst_36 = arith.constant 9.99999974E-6 : f32
    %93 = vector.broadcast %cst_36 : f32 to vector<1x128xf32>
    %94 = arith.addf %88, %93 : vector<1x128xf32>
    %95 = math.rsqrt %94 : vector<1x128xf32>
    %96 = vector.broadcast %95 : vector<1x128xf32> to vector<96x128xf32>
    %97 = arith.mulf %92, %96 : vector<96x128xf32>
    %98 = vector.broadcast %29 : vector<1x128xf32> to vector<96x128xf32>
    %99 = arith.addf %97, %98 : vector<96x128xf32>
    %cst_37 = arith.constant 0.000000e+00 : f32
    %100 = vector.broadcast %cst_37 : f32 to vector<96x128xf32>
    %101 = arith.maximumf %99, %100 : vector<96x128xf32>
    %102 = vector.extract_strided_slice %3 {offsets = [0, 0], sizes = [32, 32], strides = [1, 1]} : vector<32x128xf32> to vector<32x32xf32>
    %c0_38 = arith.constant 0 : index
    %c0_39 = arith.constant 0 : index
    %103 = vector.load %arg4[%c0_38, %c0_39] : memref<224x32xbf16, #tpu.memory_space<vmem>>, vector<224x32xbf16>
    %104 = arith.truncf %102 : vector<32x32xf32> to vector<32x32xbf16>
    %cst_40 = arith.constant dense<0.000000e+00> : vector<224x32xf32>
    %105 = tpu.matmul %103, %104, %cst_40 {dimension_numbers = #tpu.dot_dimension_numbers<[1], [0], [0], [1], [0, 0, 1, 1], [], []>} : vector<224x32xbf16>, vector<32x32xbf16>, vector<224x32xf32> -> vector<224x32xf32>
    %c0_41 = arith.constant 0 : index
    %c0_42 = arith.constant 0 : index
    %106 = vector.load %arg5[%c0_41, %c0_42] : memref<224x96xbf16, #tpu.memory_space<vmem>>, vector<224x96xbf16>
    %107 = vector.extract_strided_slice %101 {offsets = [0, 0], sizes = [96, 32], strides = [1, 1]} : vector<96x128xf32> to vector<96x32xf32>
    %108 = arith.truncf %107 : vector<96x32xf32> to vector<96x32xbf16>
    %cst_43 = arith.constant dense<0.000000e+00> : vector<224x32xf32>
    %109 = tpu.matmul %106, %108, %cst_43 {dimension_numbers = #tpu.dot_dimension_numbers<[1], [0], [0], [1], [0, 0, 1, 1], [], []>} : vector<224x96xbf16>, vector<96x32xbf16>, vector<224x32xf32> -> vector<224x32xf32>
    %cst_44 = arith.constant 0.000000e+00 : f32
    %110 = vector.broadcast %cst_44 : f32 to vector<64x128xf32>
    %111 = vector.extract_strided_slice %105 {offsets = [0, 0], sizes = [32, 32], strides = [1, 1]} : vector<224x32xf32> to vector<32x32xf32>
    %112 = vector.extract_strided_slice %109 {offsets = [0, 0], sizes = [32, 32], strides = [1, 1]} : vector<224x32xf32> to vector<32x32xf32>
    %113 = tpu.concatenate %111, %112 in 0 : vector<32x32xf32>, vector<32x32xf32> -> vector<64x32xf32>
    %114 = vector.extract_strided_slice %6 {offsets = [0, 0], sizes = [32, 128], strides = [1, 1]} : vector<224x128xf32> to vector<32x128xf32>
    %cst_45 = arith.constant dense<0.000000e+00> : vector<64x128xf32>
    %115 = tpu.matmul %113, %114, %cst_45 {dimension_numbers = #tpu.dot_dimension_numbers<[1], [0], [0], [1], [0, 0, 1, 1], [], []>} : vector<64x32xf32>, vector<32x128xf32>, vector<64x128xf32> -> vector<64x128xf32>
    %116 = arith.addf %110, %115 : vector<64x128xf32>
    %117 = vector.extract_strided_slice %105 {offsets = [32, 0], sizes = [32, 32], strides = [1, 1]} : vector<224x32xf32> to vector<32x32xf32>
    %118 = vector.extract_strided_slice %109 {offsets = [32, 0], sizes = [32, 32], strides = [1, 1]} : vector<224x32xf32> to vector<32x32xf32>
    %119 = tpu.concatenate %117, %118 in 0 : vector<32x32xf32>, vector<32x32xf32> -> vector<64x32xf32>
    %120 = vector.extract_strided_slice %6 {offsets = [32, 0], sizes = [32, 128], strides = [1, 1]} : vector<224x128xf32> to vector<32x128xf32>
    %cst_46 = arith.constant dense<0.000000e+00> : vector<64x128xf32>
    %121 = tpu.matmul %119, %120, %cst_46 {dimension_numbers = #tpu.dot_dimension_numbers<[1], [0], [0], [1], [0, 0, 1, 1], [], []>} : vector<64x32xf32>, vector<32x128xf32>, vector<64x128xf32> -> vector<64x128xf32>
    %122 = arith.addf %116, %121 : vector<64x128xf32>
    %123 = vector.extract_strided_slice %105 {offsets = [64, 0], sizes = [32, 32], strides = [1, 1]} : vector<224x32xf32> to vector<32x32xf32>
    %124 = vector.extract_strided_slice %109 {offsets = [64, 0], sizes = [32, 32], strides = [1, 1]} : vector<224x32xf32> to vector<32x32xf32>
    %125 = tpu.concatenate %123, %124 in 0 : vector<32x32xf32>, vector<32x32xf32> -> vector<64x32xf32>
    %126 = vector.extract_strided_slice %6 {offsets = [64, 0], sizes = [32, 128], strides = [1, 1]} : vector<224x128xf32> to vector<32x128xf32>
    %cst_47 = arith.constant dense<0.000000e+00> : vector<64x128xf32>
    %127 = tpu.matmul %125, %126, %cst_47 {dimension_numbers = #tpu.dot_dimension_numbers<[1], [0], [0], [1], [0, 0, 1, 1], [], []>} : vector<64x32xf32>, vector<32x128xf32>, vector<64x128xf32> -> vector<64x128xf32>
    %128 = arith.addf %122, %127 : vector<64x128xf32>
    %129 = vector.extract_strided_slice %105 {offsets = [96, 0], sizes = [32, 32], strides = [1, 1]} : vector<224x32xf32> to vector<32x32xf32>
    %130 = vector.extract_strided_slice %109 {offsets = [96, 0], sizes = [32, 32], strides = [1, 1]} : vector<224x32xf32> to vector<32x32xf32>
    %131 = tpu.concatenate %129, %130 in 0 : vector<32x32xf32>, vector<32x32xf32> -> vector<64x32xf32>
    %132 = vector.extract_strided_slice %6 {offsets = [96, 0], sizes = [32, 128], strides = [1, 1]} : vector<224x128xf32> to vector<32x128xf32>
    %cst_48 = arith.constant dense<0.000000e+00> : vector<64x128xf32>
    %133 = tpu.matmul %131, %132, %cst_48 {dimension_numbers = #tpu.dot_dimension_numbers<[1], [0], [0], [1], [0, 0, 1, 1], [], []>} : vector<64x32xf32>, vector<32x128xf32>, vector<64x128xf32> -> vector<64x128xf32>
    %134 = arith.addf %128, %133 : vector<64x128xf32>
    %135 = vector.extract_strided_slice %105 {offsets = [128, 0], sizes = [32, 32], strides = [1, 1]} : vector<224x32xf32> to vector<32x32xf32>
    %136 = vector.extract_strided_slice %109 {offsets = [128, 0], sizes = [32, 32], strides = [1, 1]} : vector<224x32xf32> to vector<32x32xf32>
    %137 = tpu.concatenate %135, %136 in 0 : vector<32x32xf32>, vector<32x32xf32> -> vector<64x32xf32>
    %138 = vector.extract_strided_slice %6 {offsets = [128, 0], sizes = [32, 128], strides = [1, 1]} : vector<224x128xf32> to vector<32x128xf32>
    %cst_49 = arith.constant dense<0.000000e+00> : vector<64x128xf32>
    %139 = tpu.matmul %137, %138, %cst_49 {dimension_numbers = #tpu.dot_dimension_numbers<[1], [0], [0], [1], [0, 0, 1, 1], [], []>} : vector<64x32xf32>, vector<32x128xf32>, vector<64x128xf32> -> vector<64x128xf32>
    %140 = arith.addf %134, %139 : vector<64x128xf32>
    %141 = vector.extract_strided_slice %105 {offsets = [160, 0], sizes = [32, 32], strides = [1, 1]} : vector<224x32xf32> to vector<32x32xf32>
    %142 = vector.extract_strided_slice %109 {offsets = [160, 0], sizes = [32, 32], strides = [1, 1]} : vector<224x32xf32> to vector<32x32xf32>
    %143 = tpu.concatenate %141, %142 in 0 : vector<32x32xf32>, vector<32x32xf32> -> vector<64x32xf32>
    %144 = vector.extract_strided_slice %6 {offsets = [160, 0], sizes = [32, 128], strides = [1, 1]} : vector<224x128xf32> to vector<32x128xf32>
    %cst_50 = arith.constant dense<0.000000e+00> : vector<64x128xf32>
    %145 = tpu.matmul %143, %144, %cst_50 {dimension_numbers = #tpu.dot_dimension_numbers<[1], [0], [0], [1], [0, 0, 1, 1], [], []>} : vector<64x32xf32>, vector<32x128xf32>, vector<64x128xf32> -> vector<64x128xf32>
    %146 = arith.addf %140, %145 : vector<64x128xf32>
    %147 = vector.extract_strided_slice %105 {offsets = [192, 0], sizes = [32, 32], strides = [1, 1]} : vector<224x32xf32> to vector<32x32xf32>
    %148 = vector.extract_strided_slice %109 {offsets = [192, 0], sizes = [32, 32], strides = [1, 1]} : vector<224x32xf32> to vector<32x32xf32>
    %149 = tpu.concatenate %147, %148 in 0 : vector<32x32xf32>, vector<32x32xf32> -> vector<64x32xf32>
    %150 = vector.extract_strided_slice %6 {offsets = [192, 0], sizes = [32, 128], strides = [1, 1]} : vector<224x128xf32> to vector<32x128xf32>
    %cst_51 = arith.constant dense<0.000000e+00> : vector<64x128xf32>
    %151 = tpu.matmul %149, %150, %cst_51 {dimension_numbers = #tpu.dot_dimension_numbers<[1], [0], [0], [1], [0, 0, 1, 1], [], []>} : vector<64x32xf32>, vector<32x128xf32>, vector<64x128xf32> -> vector<64x128xf32>
    %152 = arith.addf %146, %151 : vector<64x128xf32>
    %153 = vector.extract_strided_slice %152 {offsets = [0, 0], sizes = [32, 128], strides = [1, 1]} : vector<64x128xf32> to vector<32x128xf32>
    %154 = vector.extract_strided_slice %152 {offsets = [32, 0], sizes = [32, 128], strides = [1, 1]} : vector<64x128xf32> to vector<32x128xf32>
    %155 = vector.broadcast %15 : vector<1x128xf32> to vector<32x128xf32>
    %156 = arith.addf %153, %155 : vector<32x128xf32>
    %cst_52 = arith.constant dense<0.000000e+00> : vector<32x128xf32>
    %157 = tpu.matmul %102, %8, %cst_52 {dimension_numbers = #tpu.dot_dimension_numbers<[1], [0], [0], [1], [0, 0, 1, 1], [], []>} : vector<32x32xf32>, vector<32x128xf32>, vector<32x128xf32> -> vector<32x128xf32>
    %158 = arith.addf %156, %157 : vector<32x128xf32>
    %159 = vector.broadcast %17 : vector<1x128xf32> to vector<32x128xf32>
    %160 = arith.addf %158, %159 : vector<32x128xf32>
    %cst_53 = arith.constant dense<0.000000e+00> : vector<128xf32>
    %161 = vector.multi_reduction <add>, %160, %cst_53 [0] : vector<32x128xf32> to vector<128xf32>
    %162 = vector.shape_cast %161 : vector<128xf32> to vector<1x128xf32>
    %cst_54 = arith.constant 3.125000e-02 : f32
    %163 = vector.broadcast %cst_54 : f32 to vector<1x128xf32>
    %164 = arith.mulf %162, %163 : vector<1x128xf32>
    %165 = arith.mulf %160, %160 : vector<32x128xf32>
    %cst_55 = arith.constant dense<0.000000e+00> : vector<128xf32>
    %166 = vector.multi_reduction <add>, %165, %cst_55 [0] : vector<32x128xf32> to vector<128xf32>
    %167 = vector.shape_cast %166 : vector<128xf32> to vector<1x128xf32>
    %cst_56 = arith.constant 3.125000e-02 : f32
    %168 = vector.broadcast %cst_56 : f32 to vector<1x128xf32>
    %169 = arith.mulf %167, %168 : vector<1x128xf32>
    %170 = arith.mulf %164, %164 : vector<1x128xf32>
    %171 = arith.subf %169, %170 : vector<1x128xf32>
    %cst_57 = arith.constant 0.000000e+00 : f32
    %172 = vector.broadcast %cst_57 : f32 to vector<1x128xf32>
    %173 = arith.maximumf %171, %172 : vector<1x128xf32>
    %174 = vector.broadcast %164 : vector<1x128xf32> to vector<32x128xf32>
    %175 = arith.subf %160, %174 : vector<32x128xf32>
    %176 = vector.broadcast %19 : vector<1x128xf32> to vector<32x128xf32>
    %177 = arith.mulf %176, %175 : vector<32x128xf32>
    %cst_58 = arith.constant 9.99999974E-6 : f32
    %178 = vector.broadcast %cst_58 : f32 to vector<1x128xf32>
    %179 = arith.addf %173, %178 : vector<1x128xf32>
    %180 = math.rsqrt %179 : vector<1x128xf32>
    %181 = vector.broadcast %180 : vector<1x128xf32> to vector<32x128xf32>
    %182 = arith.mulf %177, %181 : vector<32x128xf32>
    %183 = vector.broadcast %21 : vector<1x128xf32> to vector<32x128xf32>
    %184 = arith.addf %182, %183 : vector<32x128xf32>
    %cst_59 = arith.constant 0.000000e+00 : f32
    %185 = vector.broadcast %cst_59 : f32 to vector<32x128xf32>
    %186 = arith.maximumf %184, %185 : vector<32x128xf32>
    %187 = arith.index_cast %arg0 : i32 to index
    %188 = memref.load %arg1[%187] : memref<3xi32, #tpu.memory_space<smem>>
    %189 = arith.sitofp %188 : i32 to f32
    %190 = vector.broadcast %189 : f32 to vector<32x128xf32>
    %191 = arith.mulf %190, %3 : vector<32x128xf32>
    %192 = arith.addf %186, %191 : vector<32x128xf32>
    %193 = vector.broadcast %15 : vector<1x128xf32> to vector<32x128xf32>
    %194 = arith.addf %154, %193 : vector<32x128xf32>
    %cst_60 = arith.constant 0.000000e+00 : f32
    %195 = vector.broadcast %cst_60 : f32 to vector<32x128xf32>
    %196 = arith.maximumf %194, %195 : vector<32x128xf32>
    %197 = arith.addf %192, %196 : vector<32x128xf32>
    %cst_61 = arith.constant dense<0.000000e+00> : vector<128xf32>
    %198 = vector.multi_reduction <add>, %197, %cst_61 [0] : vector<32x128xf32> to vector<128xf32>
    %199 = vector.shape_cast %198 : vector<128xf32> to vector<1x128xf32>
    %cst_62 = arith.constant 3.125000e-02 : f32
    %200 = vector.broadcast %cst_62 : f32 to vector<1x128xf32>
    %201 = arith.mulf %199, %200 : vector<1x128xf32>
    %202 = arith.mulf %197, %197 : vector<32x128xf32>
    %cst_63 = arith.constant dense<0.000000e+00> : vector<128xf32>
    %203 = vector.multi_reduction <add>, %202, %cst_63 [0] : vector<32x128xf32> to vector<128xf32>
    %204 = vector.shape_cast %203 : vector<128xf32> to vector<1x128xf32>
    %cst_64 = arith.constant 3.125000e-02 : f32
    %205 = vector.broadcast %cst_64 : f32 to vector<1x128xf32>
    %206 = arith.mulf %204, %205 : vector<1x128xf32>
    %207 = arith.mulf %201, %201 : vector<1x128xf32>
    %208 = arith.subf %206, %207 : vector<1x128xf32>
    %cst_65 = arith.constant 0.000000e+00 : f32
    %209 = vector.broadcast %cst_65 : f32 to vector<1x128xf32>
    %210 = arith.maximumf %208, %209 : vector<1x128xf32>
    %211 = vector.broadcast %201 : vector<1x128xf32> to vector<32x128xf32>
    %212 = arith.subf %197, %211 : vector<32x128xf32>
    %213 = vector.broadcast %31 : vector<1x128xf32> to vector<32x128xf32>
    %214 = arith.mulf %213, %212 : vector<32x128xf32>
    %cst_66 = arith.constant 9.99999974E-6 : f32
    %215 = vector.broadcast %cst_66 : f32 to vector<1x128xf32>
    %216 = arith.addf %210, %215 : vector<1x128xf32>
    %217 = math.rsqrt %216 : vector<1x128xf32>
    %218 = vector.broadcast %217 : vector<1x128xf32> to vector<32x128xf32>
    %219 = arith.mulf %214, %218 : vector<32x128xf32>
    %220 = vector.broadcast %33 : vector<1x128xf32> to vector<32x128xf32>
    %221 = arith.addf %219, %220 : vector<32x128xf32>
    %c0_67 = arith.constant 0 : index
    %c0_68 = arith.constant 0 : index
    %222 = vector.load %arg15[%c0_67, %c0_68] : memref<32x128xf32, #tpu.memory_space<vmem>>, vector<32x128xf32>
    tpu.vector_store %arg15[%c0_67, %c0_68], %221 {strides = array<i32>} : memref<32x128xf32, #tpu.memory_space<vmem>>, vector<32x128xf32>,
    %223 = vector.extract_strided_slice %101 {offsets = [0, 0], sizes = [96, 64], strides = [1, 1]} : vector<96x128xf32> to vector<96x64xf32>
    %c0_69 = arith.constant 0 : index
    %c0_70 = arith.constant 0 : index
    %224 = vector.load %arg16[%c0_69, %c0_70] : memref<96x64xf32, #tpu.memory_space<vmem>>, vector<96x64xf32>
    tpu.vector_store %arg16[%c0_69, %c0_70], %223 {strides = array<i32>} : memref<96x64xf32, #tpu.memory_space<vmem>>, vector<96x64xf32>,
    %225 = arith.truncf %221 : vector<32x128xf32> to vector<32x128xbf16>
    %c0_71 = arith.constant 0 : index
    %c0_72 = arith.constant 0 : index
    %c0_73 = arith.constant 0 : index
    %226 = vector.load %arg13[%c0_71, %c0_72, %c0_73] : memref<1x32x128xbf16, #tpu.memory_space<vmem>>, vector<1x32x128xbf16>
    %227 = vector.shape_cast %226 : vector<1x32x128xbf16> to vector<32x128xbf16>
    %228 = vector.shape_cast %225 : vector<32x128xbf16> to vector<1x32x128xbf16>
    tpu.vector_store %arg13[%c0_71, %c0_72, %c0_73], %228 {strides = array<i32>} : memref<1x32x128xbf16, #tpu.memory_space<vmem>>, vector<1x32x128xbf16>,
    %c0_74 = arith.constant 0 : index
    %c0_75 = arith.constant 0 : index
    %229 = vector.load %arg7[%c0_74, %c0_75] : memref<2x32xf32, #tpu.memory_space<vmem>>, vector<2x32xf32>
    %cst_76 = arith.constant dense<0.000000e+00> : vector<2x128xf32>
    %230 = tpu.matmul %229, %221, %cst_76 {dimension_numbers = #tpu.dot_dimension_numbers<[1], [0], [0], [1], [0, 0, 1, 1], [], []>} : vector<2x32xf32>, vector<32x128xf32>, vector<2x128xf32> -> vector<2x128xf32>
    %231 = arith.truncf %230 : vector<2x128xf32> to vector<2x128xbf16>
    %c0_77 = arith.constant 0 : index
    %c0_78 = arith.constant 0 : index
    %c0_79 = arith.constant 0 : index
    %232 = vector.load %arg14[%c0_77, %c0_78, %c0_79] : memref<1x2x128xbf16, #tpu.memory_space<vmem>>, vector<1x2x128xbf16>
    %233 = vector.shape_cast %232 : vector<1x2x128xbf16> to vector<2x128xbf16>
    %234 = vector.shape_cast %231 : vector<2x128xbf16> to vector<1x2x128xbf16>
    tpu.vector_store %arg14[%c0_77, %c0_78, %c0_79], %234 {strides = array<i32>} : memref<1x2x128xbf16, #tpu.memory_space<vmem>>, vector<1x2x128xbf16>,
    return
  }
  func.func @transform_0(%arg0: i32, %arg1: memref<3xi32, #tpu.memory_space<smem>>) -> (i32, i32) {
    %c0_i32 = arith.constant 0 : i32
    %c0_i32_0 = arith.constant 0 : i32
    %c0_i32_1 = arith.constant 0 : i32
    return %c0_i32, %c0_i32_0 : i32, i32
  }
  func.func @transform_1(%arg0: i32, %arg1: memref<3xi32, #tpu.memory_space<smem>>) -> (i32, i32) {
    %c0_i32 = arith.constant 0 : i32
    %c0_i32_0 = arith.constant 0 : i32
    %c0_i32_1 = arith.constant 0 : i32
    return %c0_i32, %c0_i32_0 : i32, i32
  }
  func.func @transform_2(%arg0: i32, %arg1: memref<3xi32, #tpu.memory_space<smem>>) -> (i32, i32) {
    %c0_i32 = arith.constant 0 : i32
    %c0_i32_0 = arith.constant 0 : i32
    %c0_i32_1 = arith.constant 0 : i32
    return %c0_i32, %c0_i32_0 : i32, i32
  }
  func.func @transform_3(%arg0: i32, %arg1: memref<3xi32, #tpu.memory_space<smem>>) -> (i32, i32) {
    %c0_i32 = arith.constant 0 : i32
    %c0_i32_0 = arith.constant 0 : i32
    %c0_i32_1 = arith.constant 0 : i32
    return %c0_i32, %c0_i32_0 : i32, i32
  }
  func.func @transform_4(%arg0: i32, %arg1: memref<3xi32, #tpu.memory_space<smem>>) -> (i32, i32) {
    %c0_i32 = arith.constant 0 : i32
    %c0_i32_0 = arith.constant 0 : i32
    %c0_i32_1 = arith.constant 0 : i32
    return %c0_i32, %c0_i32_0 : i32, i32
  }
  func.func @transform_5(%arg0: i32, %arg1: memref<3xi32, #tpu.memory_space<smem>>) -> (i32, i32) {
    %c0_i32 = arith.constant 0 : i32
    %c0_i32_0 = arith.constant 0 : i32
    %c0_i32_1 = arith.constant 0 : i32
    return %c0_i32, %c0_i32_0 : i32, i32
  }
  func.func @transform_6(%arg0: i32, %arg1: memref<3xi32, #tpu.memory_space<smem>>) -> (i32, i32, i32) {
    %c0_i32 = arith.constant 0 : i32
    %c0_i32_0 = arith.constant 0 : i32
    %c0_i32_1 = arith.constant 0 : i32
    return %arg0, %c0_i32, %c0_i32_0 : i32, i32, i32
  }
  func.func @transform_7(%arg0: i32, %arg1: memref<3xi32, #tpu.memory_space<smem>>) -> (i32, i32, i32) {
    %c0_i32 = arith.constant 0 : i32
    %c0_i32_0 = arith.constant 0 : i32
    %c0_i32_1 = arith.constant 0 : i32
    return %arg0, %c0_i32, %c0_i32_0 : i32, i32, i32
  }
  func.func @transform_8(%arg0: i32, %arg1: memref<3xi32, #tpu.memory_space<smem>>) -> (i32, i32, i32) {
    %c0_i32 = arith.constant 0 : i32
    %c0_i32_0 = arith.constant 0 : i32
    %c0_i32_1 = arith.constant 0 : i32
    return %arg0, %c0_i32, %c0_i32_0 : i32, i32, i32
  }
  func.func @transform_9(%arg0: i32, %arg1: memref<3xi32, #tpu.memory_space<smem>>) -> (i32, i32, i32) {
    %c0_i32 = arith.constant 0 : i32
    %c0_i32_0 = arith.constant 0 : i32
    %c0_i32_1 = arith.constant 0 : i32
    return %arg0, %c0_i32, %c0_i32_0 : i32, i32, i32
  }
  func.func @transform_10(%arg0: i32, %arg1: memref<3xi32, #tpu.memory_space<smem>>) -> (i32, i32, i32) {
    %c0_i32 = arith.constant 0 : i32
    %c0_i32_0 = arith.constant 0 : i32
    %c0_i32_1 = arith.constant 0 : i32
    return %arg0, %c0_i32, %c0_i32_0 : i32, i32, i32
  }
  func.func @transform_11(%arg0: i32, %arg1: memref<3xi32, #tpu.memory_space<smem>>) -> (i32, i32, i32) {
    %c0_i32 = arith.constant 0 : i32
    %c0_i32_0 = arith.constant 0 : i32
    %c0_i32_1 = arith.constant 0 : i32
    return %arg0, %c0_i32, %c0_i32_0 : i32, i32, i32
  }
  func.func @transform_12(%arg0: i32, %arg1: memref<3xi32, #tpu.memory_space<smem>>) -> (i32, i32, i32) {
    %c0_i32 = arith.constant 0 : i32
    %c0_i32_0 = arith.constant 0 : i32
    %c0_i32_1 = arith.constant 0 : i32
    return %arg0, %c0_i32, %c0_i32_0 : i32, i32, i32
  }
}

</mosaic_0001>

<llo_original>
// kernel: tpu_custom_call.1
$region0: #{tpu_custom_call.1}
  #allocation0 [shape = 'u32[]', space=smem, size = 0x4, offset = 0x4, fixed_abs, tag = 'smem constant byte address 0x4 - core index']
  #allocation1 [shape = 'u32[72,128]{1,0:T(1,128)}', space=vmem, size = 0x9000, scoped, tag = 'internal scratch']
  #allocation2 [shape = 'f32[32,128]{1,0:T(8,128)}', space=vmem, size = 0x4000, scoped, tag = 'scratch operand']
  #allocation3 [shape = 'f32[96,64]{1,0:T(8,128)}', space=vmem, size = 0xc000, scoped, tag = 'scratch operand']
  #allocation4 [shape = 's32[1]{0}', space=sflag, size = 0x4, scoped, tag = 'scoped memory for tpu_custom_call.1']
  #allocation5 [shape = 'u8[512]{0}', space=smem, size = 0x200, scoped, tag = 'prefetched SMEM operand 0']
  %s0 = inlined_call_operand.vmem [shape: s32[3], index: 0, kind: input, shape index: {}]
  %s1 = inlined_call_operand.hbm [shape: f32[32,128], index: 1, kind: input, shape index: {}]
  %s2 = inlined_call_operand.vmem [shape: f32[96,64], index: 2, kind: input, shape index: {}]
  %s3 = inlined_call_operand.vmem [shape: bf16[224,32], index: 3, kind: input, shape index: {}]
  %s4 = inlined_call_operand.vmem [shape: bf16[224,96], index: 4, kind: input, shape index: {}]
  %s5 = inlined_call_operand.vmem [shape: bf16[768,96], index: 5, kind: input, shape index: {}]
  %s6 = inlined_call_operand.vmem [shape: f32[2,32], index: 6, kind: input, shape index: {}]
  %s7 = inlined_call_operand.vmem [shape: f32[3,224,128], index: 7, kind: input, shape index: {}]
  %s8 = inlined_call_operand.hbm [shape: f32[3,32,128], index: 8, kind: input, shape index: {}]
  %s9 = inlined_call_operand.hbm [shape: f32[3,512,128], index: 9, kind: input, shape index: {}]
  %s10 = inlined_call_operand.vmem [shape: f32[3,64,128], index: 10, kind: input, shape index: {}]
  %s11 = inlined_call_operand.vmem [shape: f32[3,10,128], index: 11, kind: input, shape index: {}]
  %s12 = inlined_call_operand.hbm [shape: bf16[3,32,128], index: 12, kind: output, shape index: {0}]
  %s13 = inlined_call_operand.hbm [shape: bf16[3,2,128], index: 13, kind: output, shape index: {1}]
  %14 = xla_tuple %s12, %s13
  %s15 = sld [smem:[#allocation0]]
  $region101: #{tpu_custom_call.1} parent=0
    _
  %s17 = ssub.s32 1, %s15
  %s18 = scalar_select 0, %s17, %s15
  %s20 = sshll.u32 %s0, 4
  %s21 = int_to_ptr.vmem [resolvable:$true] %s20
  %23 = dma.vmem_to_smem %s21, 16, [#allocation5], [#allocation4]
  %25 = dma.done [#allocation4], 16
  %26 = sfence
  $region1: #{tpu_custom_call.1} parent=0
    #allocation6 [shape = 'u8[16384]{0}', space=vmem, size = 0x4000, scoped, tag = 'input window, operand 1, single buffered']
    #allocation7 [shape = 's32[2]{0}', space=sflag, size = 0x8, scoped, tag = 'scoped memory for tpu_custom_call.1']
    #allocation8 [shape = 's32[2]{0}', space=sflag, size = 0x8, scoped, tag = 'scoped memory for tpu_custom_call.1']
    #allocation9 [shape = 'u8[32768]{0}', space=vmem, size = 0x8000, scoped, tag = 'input window, operand 8']
    #allocation10 [shape = 's32[2]{0}', space=sflag, size = 0x8, scoped, tag = 'scoped memory for tpu_custom_call.1']
    #allocation11 [shape = 'u8[524288]{0}', space=vmem, size = 0x80000, scoped, tag = 'input window, operand 9']
    #allocation12 [shape = 'u8[16384]{0}', space=vmem, size = 0x4000, scoped, tag = 'output window, operand 0']
    #allocation13 [shape = 'u8[1024]{0}', space=vmem, size = 0x400, scoped, tag = 'output window, operand 1']
    #allocation14 [shape = 's32[2]{0}', space=sflag, size = 0x8, scoped, tag = 'scoped memory for tpu_custom_call.1']
    %27 = vsyncpa [#allocation7], 0
    %28 = vsyncpa [#allocation10], 0
    %s29 = scalar_lea.sflag [#allocation10], 1
    %30 = vsyncpa %s29, 0
    %31 = vsyncpa [#allocation8], 0
    %s32 = scalar_lea.sflag [#allocation8], 1
    %33 = vsyncpa %s32, 0
    %34 = vsyncpa [#allocation14], 0
    %s35 = scalar_lea.sflag [#allocation14], 1
    %36 = vsyncpa %s35, 0
    loop: start=0, step=1, limit=5
    $region2: #{tpu_custom_call.1} parent=1 // loop_pre_header
      _
    $region3: #{tpu_custom_call.1} parent=1 // loop_header
      %s38 = sphi 0, %s42
      %p39 = scmp.ge.s32.totalorder %s38, 5
      %s46 = sphi 0, %s46
      %s48 = sphi 0, %s46
      %s49 = sphi 0, %s48
      %s63 = sphi 0, %s49
      %s67 = sphi 0, %s67
      %s69 = sphi 0, %s67
      %s70 = sphi 0, %s69
      %s84 = sphi 0, %s70
      %s88 = sphi 0, %s88
      %s90 = sphi 0, %s88
      %s91 = sphi 0, %s90
      %s105 = sphi 0, %s91
      %s109 = sphi 0, %s109
      %s111 = sphi 0, %s109
      %s112 = sphi 0, %s111
      %s126 = sphi 0, %s112
      %s130 = sphi 0, %s130
      %s132 = sphi 0, %s130
      %s133 = sphi 0, %s132
      %s147 = sphi 0, %s133
      %s151 = sphi 0, %s151
      %s153 = sphi 0, %s151
      %s154 = sphi 0, %s153
      %s168 = sphi 0, %s154
      %s174 = sphi 0, %s176
      %s177 = sphi 0, %s174
      %s178 = sphi 0, %s177
      %s194 = sphi 0, %s178
      %s200 = sphi 0, %s202
      %s203 = sphi 0, %s200
      %s204 = sphi 0, %s203
      %s220 = sphi 0, %s204
      %s226 = sphi 0, %s228
      %s229 = sphi 0, %s226
      %s230 = sphi 0, %s229
      %s246 = sphi 0, %s230
      %s252 = sphi 0, %s254
      %s255 = sphi 0, %s252
      %s256 = sphi 0, %s255
      %s272 = sphi 0, %s256
      %s278 = sphi 0, %s280
      %s281 = sphi 0, %s278
      %s282 = sphi 0, %s281
      %s298 = sphi 0, %s282
      %s304 = sphi 0, %s306
      %s307 = sphi 0, %s304
      %s308 = sphi 0, %s307
      %s324 = sphi 0, %s308
      %s330 = sphi 0, %s332
      %s333 = sphi 0, %s330
      %s334 = sphi 0, %s333
      %s350 = sphi 0, %s334
    $region4: #{tpu_custom_call.1} parent=1 // loop_header_branch
      %41 = sbr.rel (%p39) target = $region8
    $region5: #{tpu_custom_call.1} parent=1 // loop_body
      %s43 = ssub.s32 %s38, 1
      %s44 = ssub.s32 %s38, 2
      %s45 = sadd.s32 %s38, 1
      %s47 = sadd.s32 %s46, 1
      %p50 = scmp.eq.s32.totalorder %s38, 2
      %p51 = scmp.ne.s32.totalorder %s46, %s48
      %p52 = scmp.eq.s32.totalorder %s38, 0
      %p53 = por %p51, %p52
      %p54 = scmp.ne.s32.totalorder %s46, %s48
      %p55 = scmp.eq.s32.totalorder %s43, 2
      %p56 = por %p54, %p55
      %p57 = scmp.ne.s32.totalorder %s48, %s49
      %p58 = scmp.eq.s32.totalorder %s43, 0
      %p59 = por %p57, %p58
      %p60 = scmp.ne.s32.totalorder %s48, %s49
      %p61 = scmp.eq.s32.totalorder %s44, 2
      %p62 = por %p60, %p61
      %p64 = scmp.ne.s32.totalorder %s49, %s63
      %p65 = scmp.eq.s32.totalorder %s44, 0
      %p66 = por %p64, %p65
      %s68 = sadd.s32 %s67, 1
      %p71 = scmp.eq.s32.totalorder %s38, 2
      %p72 = scmp.ne.s32.totalorder %s67, %s69
      %p73 = scmp.eq.s32.totalorder %s38, 0
      %p74 = por %p72, %p73
      %p75 = scmp.ne.s32.totalorder %s67, %s69
      %p76 = scmp.eq.s32.totalorder %s43, 2
      %p77 = por %p75, %p76
      %p78 = scmp.ne.s32.totalorder %s69, %s70
      %p79 = scmp.eq.s32.totalorder %s43, 0
      %p80 = por %p78, %p79
      %p81 = scmp.ne.s32.totalorder %s69, %s70
      %p82 = scmp.eq.s32.totalorder %s44, 2
      %p83 = por %p81, %p82
      %p85 = scmp.ne.s32.totalorder %s70, %s84
      %p86 = scmp.eq.s32.totalorder %s44, 0
      %p87 = por %p85, %p86
      %s89 = sadd.s32 %s88, 1
      %p92 = scmp.eq.s32.totalorder %s38, 2
      %p93 = scmp.ne.s32.totalorder %s88, %s90
      %p94 = scmp.eq.s32.totalorder %s38, 0
      %p95 = por %p93, %p94
      %p96 = scmp.ne.s32.totalorder %s88, %s90
      %p97 = scmp.eq.s32.totalorder %s43, 2
      %p98 = por %p96, %p97
      %p99 = scmp.ne.s32.totalorder %s90, %s91
      %p100 = scmp.eq.s32.totalorder %s43, 0
      %p101 = por %p99, %p100
      %p102 = scmp.ne.s32.totalorder %s90, %s91
      %p103 = scmp.eq.s32.totalorder %s44, 2
      %p104 = por %p102, %p103
      %p106 = scmp.ne.s32.totalorder %s91, %s105
      %p107 = scmp.eq.s32.totalorder %s44, 0
      %p108 = por %p106, %p107
      %s110 = sadd.s32 %s109, 1
      %p113 = scmp.eq.s32.totalorder %s38, 2
      %p114 = scmp.ne.s32.totalorder %s109, %s111
      %p115 = scmp.eq.s32.totalorder %s38, 0
      %p116 = por %p114, %p115
      %p117 = scmp.ne.s32.totalorder %s109, %s111
      %p118 = scmp.eq.s32.totalorder %s43, 2
      %p119 = por %p117, %p118
      %p120 = scmp.ne.s32.totalorder %s111, %s112
      %p121 = scmp.eq.s32.totalorder %s43, 0
      %p122 = por %p120, %p121
      %p123 = scmp.ne.s32.totalorder %s111, %s112
      %p124 = scmp.eq.s32.totalorder %s44, 2
      %p125 = por %p123, %p124
      %p127 = scmp.ne.s32.totalorder %s112, %s126
      %p128 = scmp.eq.s32.totalorder %s44, 0
      %p129 = por %p127, %p128
      %s131 = sadd.s32 %s130, 1
      %p134 = scmp.eq.s32.totalorder %s38, 2
      %p135 = scmp.ne.s32.totalorder %s130, %s132
      %p136 = scmp.eq.s32.totalorder %s38, 0
      %p137 = por %p135, %p136
      %p138 = scmp.ne.s32.totalorder %s130, %s132
      %p139 = scmp.eq.s32.totalorder %s43, 2
      %p140 = por %p138, %p139
      %p141 = scmp.ne.s32.totalorder %s132, %s133
      %p142 = scmp.eq.s32.totalorder %s43, 0
      %p143 = por %p141, %p142
      %p144 = scmp.ne.s32.totalorder %s132, %s133
      %p145 = scmp.eq.s32.totalorder %s44, 2
      %p146 = por %p144, %p145
      %p148 = scmp.ne.s32.totalorder %s133, %s147
      %p149 = scmp.eq.s32.totalorder %s44, 0
      %p150 = por %p148, %p149
      %s152 = sadd.s32 %s151, 1
      %p155 = scmp.eq.s32.totalorder %s38, 2
      %p156 = scmp.ne.s32.totalorder %s151, %s153
      %p157 = scmp.eq.s32.totalorder %s38, 0
      %p158 = por %p156, %p157
      %p159 = scmp.ne.s32.totalorder %s151, %s153
      %p160 = scmp.eq.s32.totalorder %s43, 2
      %p161 = por %p159, %p160
      %p162 = scmp.ne.s32.totalorder %s153, %s154
      %p163 = scmp.eq.s32.totalorder %s43, 0
      %p164 = por %p162, %p163
      %p165 = scmp.ne.s32.totalorder %s153, %s154
      %p166 = scmp.eq.s32.totalorder %s44, 2
      %p167 = por %p165, %p166
      %p169 = scmp.ne.s32.totalorder %s154, %s168
      %p170 = scmp.eq.s32.totalorder %s44, 0
      %p171 = por %p169, %p170
      %s172 = ssub.s32 %s38, %s45
      %p173 = scmp.eq.s32.totalorder %s172, 0
      %s175 = sadd.s32 %s174, 1
      %s176 = scalar_select %p173, %s174, %s175
      %p179 = pneg %p173
      %p180 = scmp.eq.s32.totalorder %s38, 2
      %p181 = por %p179, %p180
      %p182 = scmp.ne.s32.totalorder %s174, %s177
      %p183 = scmp.eq.s32.totalorder %s38, 0
      %p184 = por %p182, %p183
      %p185 = scmp.ne.s32.totalorder %s174, %s177
      %p186 = scmp.eq.s32.totalorder %s43, 2
      %p187 = por %p185, %p186
      %p188 = scmp.ne.s32.totalorder %s177, %s178
      %p189 = scmp.eq.s32.totalorder %s43, 0
      %p190 = por %p188, %p189
      %p191 = scmp.ne.s32.totalorder %s177, %s178
      %p192 = scmp.eq.s32.totalorder %s44, 2
      %p193 = por %p191, %p192
      %p195 = scmp.ne.s32.totalorder %s178, %s194
      %p196 = scmp.eq.s32.totalorder %s44, 0
      %p197 = por %p195, %p196
      %s198 = ssub.s32 %s38, %s45
      %p199 = scmp.eq.s32.totalorder %s198, 0
      %s201 = sadd.s32 %s200, 1
      %s202 = scalar_select %p199, %s200, %s201
      %p205 = pneg %p199
      %p206 = scmp.eq.s32.totalorder %s38, 2
      %p207 = por %p205, %p206
      %p208 = scmp.ne.s32.totalorder %s200, %s203
      %p209 = scmp.eq.s32.totalorder %s38, 0
      %p210 = por %p208, %p209
      %p211 = scmp.ne.s32.totalorder %s200, %s203
      %p212 = scmp.eq.s32.totalorder %s43, 2
      %p213 = por %p211, %p212
      %p214 = scmp.ne.s32.totalorder %s203, %s204
      %p215 = scmp.eq.s32.totalorder %s43, 0
      %p216 = por %p214, %p215
      %p217 = scmp.ne.s32.totalorder %s203, %s204
      %p218 = scmp.eq.s32.totalorder %s44, 2
      %p219 = por %p217, %p218
      %p221 = scmp.ne.s32.totalorder %s204, %s220
      %p222 = scmp.eq.s32.totalorder %s44, 0
      %p223 = por %p221, %p222
      %s224 = ssub.s32 %s38, %s45
      %p225 = scmp.eq.s32.totalorder %s224, 0
      %s227 = sadd.s32 %s226, 1
      %s228 = scalar_select %p225, %s226, %s227
      %p231 = pneg %p225
      %p232 = scmp.eq.s32.totalorder %s38, 2
      %p233 = por %p231, %p232
      %p234 = scmp.ne.s32.totalorder %s226, %s229
      %p235 = scmp.eq.s32.totalorder %s38, 0
      %p236 = por %p234, %p235
      %p237 = scmp.ne.s32.totalorder %s226, %s229
      %p238 = scmp.eq.s32.totalorder %s43, 2
      %p239 = por %p237, %p238
      %p240 = scmp.ne.s32.totalorder %s229, %s230
      %p241 = scmp.eq.s32.totalorder %s43, 0
      %p242 = por %p240, %p241
      %p243 = scmp.ne.s32.totalorder %s229, %s230
      %p244 = scmp.eq.s32.totalorder %s44, 2
      %p245 = por %p243, %p244
      %p247 = scmp.ne.s32.totalorder %s230, %s246
      %p248 = scmp.eq.s32.totalorder %s44, 0
      %p249 = por %p247, %p248
      %s250 = ssub.s32 %s38, %s45
      %p251 = scmp.eq.s32.totalorder %s250, 0
      %s253 = sadd.s32 %s252, 1
      %s254 = scalar_select %p251, %s252, %s253
      %p257 = pneg %p251
      %p258 = scmp.eq.s32.totalorder %s38, 2
      %p259 = por %p257, %p258
      %p260 = scmp.ne.s32.totalorder %s252, %s255
      %p261 = scmp.eq.s32.totalorder %s38, 0
      %p262 = por %p260, %p261
      %p263 = scmp.ne.s32.totalorder %s252, %s255
      %p264 = scmp.eq.s32.totalorder %s43, 2
      %p265 = por %p263, %p264
      %p266 = scmp.ne.s32.totalorder %s255, %s256
      %p267 = scmp.eq.s32.totalorder %s43, 0
      %p268 = por %p266, %p267
      %p269 = scmp.ne.s32.totalorder %s255, %s256
      %p270 = scmp.eq.s32.totalorder %s44, 2
      %p271 = por %p269, %p270
      %p273 = scmp.ne.s32.totalorder %s256, %s272
      %p274 = scmp.eq.s32.totalorder %s44, 0
      %p275 = por %p273, %p274
      %s276 = ssub.s32 %s38, %s45
      %p277 = scmp.eq.s32.totalorder %s276, 0
      %s279 = sadd.s32 %s278, 1
      %s280 = scalar_select %p277, %s278, %s279
      %p283 = pneg %p277
      %p284 = scmp.eq.s32.totalorder %s38, 2
      %p285 = por %p283, %p284
      %p286 = scmp.ne.s32.totalorder %s278, %s281
      %p287 = scmp.eq.s32.totalorder %s38, 0
      %p288 = por %p286, %p287
      %p289 = scmp.ne.s32.totalorder %s278, %s281
      %p290 = scmp.eq.s32.totalorder %s43, 2
      %p291 = por %p289, %p290
      %p292 = scmp.ne.s32.totalorder %s281, %s282
      %p293 = scmp.eq.s32.totalorder %s43, 0
      %p294 = por %p292, %p293
      %p295 = scmp.ne.s32.totalorder %s281, %s282
      %p296 = scmp.eq.s32.totalorder %s44, 2
      %p297 = por %p295, %p296
      %p299 = scmp.ne.s32.totalorder %s282, %s298
      %p300 = scmp.eq.s32.totalorder %s44, 0
      %p301 = por %p299, %p300
      %s302 = ssub.s32 %s38, %s45
      %p303 = scmp.eq.s32.totalorder %s302, 0
      %s305 = sadd.s32 %s304, 1
      %s306 = scalar_select %p303, %s304, %s305
      %p309 = pneg %p303
      %p310 = scmp.eq.s32.totalorder %s38, 2
      %p311 = por %p309, %p310
      %p312 = scmp.ne.s32.totalorder %s304, %s307
      %p313 = scmp.eq.s32.totalorder %s38, 0
      %p314 = por %p312, %p313
      %p315 = scmp.ne.s32.totalorder %s304, %s307
      %p316 = scmp.eq.s32.totalorder %s43, 2
      %p317 = por %p315, %p316
      %p318 = scmp.ne.s32.totalorder %s307, %s308
      %p319 = scmp.eq.s32.totalorder %s43, 0
      %p320 = por %p318, %p319
      %p321 = scmp.ne.s32.totalorder %s307, %s308
      %p322 = scmp.eq.s32.totalorder %s44, 2
      %p323 = por %p321, %p322
      %p325 = scmp.ne.s32.totalorder %s308, %s324
      %p326 = scmp.eq.s32.totalorder %s44, 0
      %p327 = por %p325, %p326
      %s328 = ssub.s32 %s38, %s45
      %p329 = scmp.eq.s32.totalorder %s328, 0
      %s331 = sadd.s32 %s330, 1
      %s332 = scalar_select %p329, %s330, %s331
      %p335 = pneg %p329
      %p336 = scmp.eq.s32.totalorder %s38, 2
      %p337 = por %p335, %p336
      %p338 = scmp.ne.s32.totalorder %s330, %s333
      %p339 = scmp.eq.s32.totalorder %s38, 0
      %p340 = por %p338, %p339
      %p341 = scmp.ne.s32.totalorder %s330, %s333
      %p342 = scmp.eq.s32.totalorder %s43, 2
      %p343 = por %p341, %p342
      %p344 = scmp.ne.s32.totalorder %s333, %s334
      %p345 = scmp.eq.s32.totalorder %s43, 0
      %p346 = por %p344, %p345
      %p347 = scmp.ne.s32.totalorder %s333, %s334
      %p348 = scmp.eq.s32.totalorder %s44, 2
      %p349 = por %p347, %p348
      %p351 = scmp.ne.s32.totalorder %s334, %s350
      %p352 = scmp.eq.s32.totalorder %s44, 0
      %p353 = por %p351, %p352
      %p354 = scmp.le.s32.totalorder 1, %s38
      %p355 = scmp.lt.s32.totalorder %s38, 4
      %p356 = pnand %p354, %p355
      %p357 = pneg %p356
      // Predicated region
      $region9: #{tpu_custom_call.1} parent=5 // pred_check
        _
      $region10: #{tpu_custom_call.1} parent=5 // pred_check_branch
        %359 = sbr.rel (%p356) target = $region12
      $region11: #{tpu_custom_call.1} parent=5 // pred_region
        %s360 = ssub.s32 %s38, 1
        // Predicated region
        $region13: #{tpu_custom_call.1} parent=11 // pred_check
          %p361 = pneg %p59
        $region14: #{tpu_custom_call.1} parent=11 // pred_check_branch
          %363 = sbr.rel (%p361) target = $region16
        $region15: #{tpu_custom_call.1} parent=11 // pred_region
          %365 = vsyncadd [#allocation7], 0
          %s366 = sshll.u32 %s1, 4
          %s367 = int_to_ptr.hbm [resolvable:$true] %s366
          %s368 = sshll.u32 [#allocation6], 4
          %s369 = int_to_ptr.vmem [resolvable:$true] %s368
          %374 = dma.hbm_to_vmem [thread:$0]  %s367, 512, %s369, [#allocation7], 128, 128, 8
        $region16: #{tpu_custom_call.1} parent=11 // pred_fallthru
          _
        // Predicated region
        $region17: #{tpu_custom_call.1} parent=11 // pred_check
          %p375 = pneg %p80
        $region18: #{tpu_custom_call.1} parent=11 // pred_check_branch
          %377 = sbr.rel (%p375) target = $region20
        $region19: #{tpu_custom_call.1} parent=11 // pred_region
          _
        $region20: #{tpu_custom_call.1} parent=11 // pred_fallthru
          _
        // Predicated region
        $region21: #{tpu_custom_call.1} parent=11 // pred_check
          %p378 = pneg %p101
        $region22: #{tpu_custom_call.1} parent=11 // pred_check_branch
          %380 = sbr.rel (%p378) target = $region24
        $region23: #{tpu_custom_call.1} parent=11 // pred_region
          _
        $region24: #{tpu_custom_call.1} parent=11 // pred_fallthru
          _
        // Predicated region
        $region25: #{tpu_custom_call.1} parent=11 // pred_check
          %p381 = pneg %p122
        $region26: #{tpu_custom_call.1} parent=11 // pred_check_branch
          %383 = sbr.rel (%p381) target = $region28
        $region27: #{tpu_custom_call.1} parent=11 // pred_region
          _
        $region28: #{tpu_custom_call.1} parent=11 // pred_fallthru
          _
        // Predicated region
        $region29: #{tpu_custom_call.1} parent=11 // pred_check
          %p384 = pneg %p143
        $region30: #{tpu_custom_call.1} parent=11 // pred_check_branch
          %386 = sbr.rel (%p384) target = $region32
        $region31: #{tpu_custom_call.1} parent=11 // pred_region
          _
        $region32: #{tpu_custom_call.1} parent=11 // pred_fallthru
          _
        // Predicated region
        $region33: #{tpu_custom_call.1} parent=11 // pred_check
          %p387 = pneg %p164
        $region34: #{tpu_custom_call.1} parent=11 // pred_check_branch
          %389 = sbr.rel (%p387) target = $region36
        $region35: #{tpu_custom_call.1} parent=11 // pred_region
          _
        $region36: #{tpu_custom_call.1} parent=11 // pred_fallthru
          _
      $region12: #{tpu_custom_call.1} parent=5 // pred_fallthru
        _
      %p390 = scmp.lt.s32.totalorder %s38, 3
      // Predicated region
      $region37: #{tpu_custom_call.1} parent=5 // pred_check
        %p391 = pneg %p390
      $region38: #{tpu_custom_call.1} parent=5 // pred_check_branch
        %393 = sbr.rel (%p391) target = $region40
      $region39: #{tpu_custom_call.1} parent=5 // pred_region
        // Predicated region
        $region41: #{tpu_custom_call.1} parent=39 // pred_check
          %p394 = pneg %p184
        $region42: #{tpu_custom_call.1} parent=39 // pred_check_branch
          %396 = sbr.rel (%p394) target = $region44
        $region43: #{tpu_custom_call.1} parent=39 // pred_region
          %p397 = scmp.lt.s32.totalorder %s38, 2
          %s398 = scalar_select %p397, %s38, 2
          %s399 = smul.addr %s398, 28
          %s400 = smul.addr %s399, 8
          %s401 = scalar_lea.vmem %s7, %s400
        $region44: #{tpu_custom_call.1} parent=39 // pred_fallthru
          _
        // Predicated region
        $region45: #{tpu_custom_call.1} parent=39 // pred_check
          %p402 = pneg %p210
        $region46: #{tpu_custom_call.1} parent=39 // pred_check_branch
          %404 = sbr.rel (%p402) target = $region48
        $region47: #{tpu_custom_call.1} parent=39 // pred_region
          %s405 = sand.u32 %s38, 1
          %s406 = scalar_lea.sflag [#allocation10], %s405
          %s407 = sand.u32 %s200, 1
          %s408 = smul.addr %s407, 32
          %s409 = scalar_lea.vmem [#allocation9], %s408
          %411 = vsyncadd %s406, 0
          %s412 = smul.addr %s38, 4
          %s413 = smul.addr %s412, 8
          %s414 = scalar_lea.hbm %s8, %s413
          %s415 = sshll.u32 %s414, 4
          %s416 = int_to_ptr.hbm [resolvable:$true] %s415
          %s417 = sshll.u32 %s409, 4
          %s418 = int_to_ptr.vmem [resolvable:$true] %s417
          %423 = dma.hbm_to_vmem [thread:$0]  %s416, 512, %s418, %s406, 128, 128, 8
        $region48: #{tpu_custom_call.1} parent=39 // pred_fallthru
          _
        // Predicated region
        $region49: #{tpu_custom_call.1} parent=39 // pred_check
          %p424 = pneg %p236
        $region50: #{tpu_custom_call.1} parent=39 // pred_check_branch
          %426 = sbr.rel (%p424) target = $region52
        $region51: #{tpu_custom_call.1} parent=39 // pred_region
          %s427 = sand.u32 %s38, 1
          %s428 = scalar_lea.sflag [#allocation10], %s427
          %s429 = sand.u32 %s226, 1
          %s430 = smul.addr %s429, 512
          %s431 = scalar_lea.vmem [#allocation11], %s430
          %433 = vsyncadd %s428, 0
          %s434 = smul.addr %s38, 64
          %s435 = smul.addr %s434, 8
          %s436 = scalar_lea.hbm %s9, %s435
          %s437 = sshll.u32 %s436, 4
          %s438 = int_to_ptr.hbm [resolvable:$true] %s437
          %s439 = sshll.u32 %s431, 4
          %s440 = int_to_ptr.vmem [resolvable:$true] %s439
          %445 = dma.hbm_to_vmem [thread:$0]  %s438, 8192, %s440, %s428, 128, 128, 8
        $region52: #{tpu_custom_call.1} parent=39 // pred_fallthru
          _
        // Predicated region
        $region53: #{tpu_custom_call.1} parent=39 // pred_check
          %p446 = pneg %p262
        $region54: #{tpu_custom_call.1} parent=39 // pred_check_branch
          %448 = sbr.rel (%p446) target = $region56
        $region55: #{tpu_custom_call.1} parent=39 // pred_region
          %p449 = scmp.lt.s32.totalorder %s38, 2
          %s450 = scalar_select %p449, %s38, 2
          %s451 = smul.addr %s450, 8
          %s452 = smul.addr %s451, 8
          %s453 = scalar_lea.vmem %s10, %s452
        $region56: #{tpu_custom_call.1} parent=39 // pred_fallthru
          _
        // Predicated region
        $region57: #{tpu_custom_call.1} parent=39 // pred_check
          %p454 = pneg %p288
        $region58: #{tpu_custom_call.1} parent=39 // pred_check_branch
          %456 = sbr.rel (%p454) target = $region60
        $region59: #{tpu_custom_call.1} parent=39 // pred_region
          %p457 = scmp.lt.s32.totalorder %s38, 2
          %s458 = scalar_select %p457, %s38, 2
          %s459 = smul.addr %s458, 2
          %s460 = smul.addr %s459, 8
          %s461 = scalar_lea.vmem %s11, %s460
        $region60: #{tpu_custom_call.1} parent=39 // pred_fallthru
          _
      $region40: #{tpu_custom_call.1} parent=5 // pred_fallthru
        _
      %p462 = scmp.le.s32.totalorder 1, %s38
      %p463 = scmp.lt.s32.totalorder %s38, 4
      %p464 = pnand %p462, %p463
      %p465 = pneg %p464
      // Predicated region
      $region61: #{tpu_custom_call.1} parent=5 // pred_check
        _
      $region62: #{tpu_custom_call.1} parent=5 // pred_check_branch
        %467 = sbr.rel (%p464) target = $region64
      $region63: #{tpu_custom_call.1} parent=5 // pred_region
        %s468 = ssub.s32 %s38, 1
        // Predicated region
        $region65: #{tpu_custom_call.1} parent=63 // pred_check
          %p469 = pneg %p59
        $region66: #{tpu_custom_call.1} parent=63 // pred_check_branch
          %471 = sbr.rel (%p469) target = $region68
        $region67: #{tpu_custom_call.1} parent=63 // pred_region
          %473 = dma.done [#allocation7], 512
        $region68: #{tpu_custom_call.1} parent=63 // pred_fallthru
          _
        %s474 = sand.u32 %s43, 1
        %s475 = scalar_lea.sflag [#allocation10], %s474
        %s476 = sand.u32 %s203, 1
        %s477 = smul.addr %s476, 32
        %s478 = scalar_lea.vmem [#allocation9], %s477
        // Predicated region
        $region69: #{tpu_custom_call.1} parent=63 // pred_check
          %p479 = pneg %p216
        $region70: #{tpu_custom_call.1} parent=63 // pred_check_branch
          %481 = sbr.rel (%p479) target = $region72
        $region71: #{tpu_custom_call.1} parent=63 // pred_region
          %483 = dma.done %s475, 512
        $region72: #{tpu_custom_call.1} parent=63 // pred_fallthru
          _
        %s484 = sand.u32 %s43, 1
        %s485 = scalar_lea.sflag [#allocation10], %s484
        %s486 = sand.u32 %s229, 1
        %s487 = smul.addr %s486, 512
        %s488 = scalar_lea.vmem [#allocation11], %s487
        // Predicated region
        $region73: #{tpu_custom_call.1} parent=63 // pred_check
          %p489 = pneg %p242
        $region74: #{tpu_custom_call.1} parent=63 // pred_check_branch
          %491 = sbr.rel (%p489) target = $region76
        $region75: #{tpu_custom_call.1} parent=63 // pred_region
          %493 = dma.done %s485, 8192
        $region76: #{tpu_custom_call.1} parent=63 // pred_fallthru
          _
        %p494 = pneg %p59
        %p495 = pneg %p56
        %p496 = pneg %p80
        %p497 = pneg %p77
        %p498 = pneg %p101
        %p499 = pneg %p98
        %p500 = pneg %p122
        %p501 = pneg %p119
        %p502 = pneg %p143
        %p503 = pneg %p140
        %p504 = pneg %p164
        %p505 = pneg %p161
        %p506 = scmp.lt.s32.totalorder %s43, 2
        %s507 = scalar_select %p506, %s43, 2
        %s508 = smul.addr %s507, 28
        %s509 = smul.addr %s508, 8
        %s510 = scalar_lea.vmem %s7, %s509
        %p511 = pneg %p190
        %p512 = pneg %p187
        %s513 = sand.u32 %s43, 1
        %s514 = scalar_lea.sflag [#allocation10], %s513
        %s515 = sand.u32 %s203, 1
        %s516 = smul.addr %s515, 32
        %s517 = scalar_lea.vmem [#allocation9], %s516
        %p518 = pneg %p216
        %p519 = pneg %p213
        %s520 = sand.u32 %s43, 1
        %s521 = scalar_lea.sflag [#allocation10], %s520
        %s522 = sand.u32 %s229, 1
        %s523 = smul.addr %s522, 512
        %s524 = scalar_lea.vmem [#allocation11], %s523
        %p525 = pneg %p242
        %p526 = pneg %p239
        %p527 = scmp.lt.s32.totalorder %s43, 2
        %s528 = scalar_select %p527, %s43, 2
        %s529 = smul.addr %s528, 8
        %s530 = smul.addr %s529, 8
        %s531 = scalar_lea.vmem %s10, %s530
        %p532 = pneg %p268
        %p533 = pneg %p265
        %p534 = scmp.lt.s32.totalorder %s43, 2
        %s535 = scalar_select %p534, %s43, 2
        %s536 = smul.addr %s535, 2
        %s537 = smul.addr %s536, 8
        %s538 = scalar_lea.vmem %s11, %s537
        %p539 = pneg %p294
        %p540 = pneg %p291
        %p541 = pneg %p320
        %p542 = pneg %p317
        %s543 = sand.u32 %s307, 1
        %s544 = scalar_lea.sflag [#allocation8], %s543
        %s545 = sand.u32 %s307, 1
        %s546 = smul.addr %s545, 16
        %s547 = scalar_lea.vmem [#allocation12], %s546
        %p548 = pneg %p346
        %p549 = pneg %p343
        %s550 = sand.u32 %s333, 1
        %s551 = scalar_lea.sflag [#allocation14], %s550
        %s552 = sand.u32 %s333, 1
        %s553 = scalar_lea.vmem [#allocation13], %s552
        %p554 = scmp.lt.s32.totalorder %s43, 2
        %s555 = scalar_select %p554, %s43, 2
        %s556 = smul.addr %s555, 28
        %s557 = smul.addr %s556, 8
        %s558 = scalar_lea.vmem %s7, %s557
        %p559 = scmp.lt.s32.totalorder %s43, 2
        %s560 = scalar_select %p559, %s43, 2
        %s561 = smul.addr %s560, 8
        %s562 = smul.addr %s561, 8
        %s563 = scalar_lea.vmem %s10, %s562
        %p564 = scmp.lt.s32.totalorder %s43, 2
        %s565 = scalar_select %p564, %s43, 2
        %s566 = smul.addr %s565, 2
        %s567 = smul.addr %s566, 8
        %s568 = scalar_lea.vmem %s11, %s567
        %p570 = scmp.eq.s32.totalorder %s43, 0
        // Predicated region
        $region77: #{tpu_custom_call.1} parent=63 // pred_check
          %p571 = pneg %p570
        $region78: #{tpu_custom_call.1} parent=63 // pred_check_branch
          %573 = sbr.rel (%p571) target = $region80
        $region79: #{tpu_custom_call.1} parent=63 // pred_region
          %v574 = vld [vmem:[#allocation6] sm:$0xff]
          %v575 = vld [vmem:[#allocation6 + $0x8] sm:$0xff]
          %v576 = vld [vmem:[#allocation6 + $0x10] sm:$0xff]
          %v577 = vld [vmem:[#allocation6 + $0x18] sm:$0xff]
          %578 = vst [vmem:[#allocation2] sm:$0xff] %v574
          %579 = vst [vmem:[#allocation2 + $0x8] sm:$0xff] %v575
          %580 = vst [vmem:[#allocation2 + $0x10] sm:$0xff] %v576
          %581 = vst [vmem:[#allocation2 + $0x18] sm:$0xff] %v577
          %v582 = vld [vmem:[%s2] sm:$0xff]
          %v583 = vld [vmem:[%s2 + $0x8] sm:$0xff]
          %v584 = vld [vmem:[%s2 + $0x10] sm:$0xff]
          %v585 = vld [vmem:[%s2 + $0x18] sm:$0xff]
          %v586 = vld [vmem:[%s2 + $0x20] sm:$0xff]
          %v587 = vld [vmem:[%s2 + $0x28] sm:$0xff]
          %v588 = vld [vmem:[%s2 + $0x30] sm:$0xff]
          %v589 = vld [vmem:[%s2 + $0x38] sm:$0xff]
          %v590 = vld [vmem:[%s2 + $0x40] sm:$0xff]
          %v591 = vld [vmem:[%s2 + $0x48] sm:$0xff]
          %v592 = vld [vmem:[%s2 + $0x50] sm:$0xff]
          %v593 = vld [vmem:[%s2 + $0x58] sm:$0xff]
          %vm594 = vcmask 523264
          %595 = vst.msk [vmem:[#allocation3] sm:$0xff] %vm594, %v582
          %596 = vst.msk [vmem:[#allocation3 + $0x8] sm:$0xff] %vm594, %v583
          %597 = vst.msk [vmem:[#allocation3 + $0x10] sm:$0xff] %vm594, %v584
          %598 = vst.msk [vmem:[#allocation3 + $0x18] sm:$0xff] %vm594, %v585
          %599 = vst.msk [vmem:[#allocation3 + $0x20] sm:$0xff] %vm594, %v586
          %600 = vst.msk [vmem:[#allocation3 + $0x28] sm:$0xff] %vm594, %v587
          %601 = vst.msk [vmem:[#allocation3 + $0x30] sm:$0xff] %vm594, %v588
          %602 = vst.msk [vmem:[#allocation3 + $0x38] sm:$0xff] %vm594, %v589
          %603 = vst.msk [vmem:[#allocation3 + $0x40] sm:$0xff] %vm594, %v590
          %604 = vst.msk [vmem:[#allocation3 + $0x48] sm:$0xff] %vm594, %v591
          %605 = vst.msk [vmem:[#allocation3 + $0x50] sm:$0xff] %vm594, %v592
          %606 = vst.msk [vmem:[#allocation3 + $0x58] sm:$0xff] %vm594, %v593
        $region80: #{tpu_custom_call.1} parent=63 // pred_fallthru
          _
        %v607 = vld [vmem:[#allocation2] sm:$0xff]
        %v608 = vld [vmem:[#allocation2 + $0x8] sm:$0xff]
        %v609 = vld [vmem:[#allocation2 + $0x10] sm:$0xff]
        %v610 = vld [vmem:[#allocation2 + $0x18] sm:$0xff]
        %v611 = vld [vmem:[#allocation3] sm:$0xff]
        %v612 = vld [vmem:[#allocation3 + $0x8] sm:$0xff]
        %v613 = vld [vmem:[#allocation3 + $0x10] sm:$0xff]
        %v614 = vld [vmem:[#allocation3 + $0x18] sm:$0xff]
        %v615 = vld [vmem:[#allocation3 + $0x20] sm:$0xff]
        %v616 = vld [vmem:[#allocation3 + $0x28] sm:$0xff]
        %v617 = vld [vmem:[#allocation3 + $0x30] sm:$0xff]
        %v618 = vld [vmem:[#allocation3 + $0x38] sm:$0xff]
        %v619 = vld [vmem:[#allocation3 + $0x40] sm:$0xff]
        %v620 = vld [vmem:[#allocation3 + $0x48] sm:$0xff]
        %v621 = vld [vmem:[#allocation3 + $0x50] sm:$0xff]
        %v622 = vld [vmem:[#allocation3 + $0x58] sm:$0xff]
        %v623 = vld [vmem:[%s558] sm:$0xff]
        %v624 = vld [vmem:[%s558 + $0x8] sm:$0xff]
        %v625 = vld [vmem:[%s558 + $0x10] sm:$0xff]
        %v626 = vld [vmem:[%s558 + $0x18] sm:$0xff]
        %v627 = vld [vmem:[%s558 + $0x20] sm:$0xff]
        %v628 = vld [vmem:[%s558 + $0x28] sm:$0xff]
        %v629 = vld [vmem:[%s558 + $0x30] sm:$0xff]
        %v630 = vld [vmem:[%s558 + $0x38] sm:$0xff]
        %v631 = vld [vmem:[%s558 + $0x40] sm:$0xff]
        %v632 = vld [vmem:[%s558 + $0x48] sm:$0xff]
        %v633 = vld [vmem:[%s558 + $0x50] sm:$0xff]
        %v634 = vld [vmem:[%s558 + $0x58] sm:$0xff]
        %v635 = vld [vmem:[%s558 + $0x60] sm:$0xff]
        %v636 = vld [vmem:[%s558 + $0x68] sm:$0xff]
        %v637 = vld [vmem:[%s558 + $0x70] sm:$0xff]
        %v638 = vld [vmem:[%s558 + $0x78] sm:$0xff]
        %v639 = vld [vmem:[%s558 + $0x80] sm:$0xff]
        %v640 = vld [vmem:[%s558 + $0x88] sm:$0xff]
        %v641 = vld [vmem:[%s558 + $0x90] sm:$0xff]
        %v642 = vld [vmem:[%s558 + $0x98] sm:$0xff]
        %v643 = vld [vmem:[%s558 + $0xa0] sm:$0xff]
        %v644 = vld [vmem:[%s558 + $0xa8] sm:$0xff]
        %v645 = vld [vmem:[%s558 + $0xb0] sm:$0xff]
        %v646 = vld [vmem:[%s558 + $0xb8] sm:$0xff]
        %v647 = vld [vmem:[%s558 + $0xc0] sm:$0xff]
        %v648 = vld [vmem:[%s558 + $0xc8] sm:$0xff]
        %v649 = vld [vmem:[%s558 + $0xd0] sm:$0xff]
        %v650 = vld [vmem:[%s558 + $0xd8] sm:$0xff]
        %v651 = vld [vmem:[%s478] sm:$0xff]
        %v652 = vld [vmem:[%s478 + $0x8] sm:$0xff]
        %v653 = vld [vmem:[%s478 + $0x10] sm:$0xff]
        %v654 = vld [vmem:[%s478 + $0x18] sm:$0xff]
        %v655 = vld [vmem:[%s488] sm:$0xff]
        %v656 = vld [vmem:[%s488 + $0x8] sm:$0xff]
        %v657 = vld [vmem:[%s488 + $0x10] sm:$0xff]
        %v658 = vld [vmem:[%s488 + $0x18] sm:$0xff]
        %v659 = vld [vmem:[%s488 + $0x20] sm:$0xff]
        %v660 = vld [vmem:[%s488 + $0x28] sm:$0xff]
        %v661 = vld [vmem:[%s488 + $0x30] sm:$0xff]
        %v662 = vld [vmem:[%s488 + $0x38] sm:$0xff]
        %v663 = vld [vmem:[%s488 + $0x40] sm:$0xff]
        %v664 = vld [vmem:[%s488 + $0x48] sm:$0xff]
        %v665 = vld [vmem:[%s488 + $0x50] sm:$0xff]
        %v666 = vld [vmem:[%s488 + $0x58] sm:$0xff]
        %v667 = vld [vmem:[%s488 + $0x60] sm:$0xff]
        %v668 = vld [vmem:[%s488 + $0x68] sm:$0xff]
        %v669 = vld [vmem:[%s488 + $0x70] sm:$0xff]
        %v670 = vld [vmem:[%s488 + $0x78] sm:$0xff]
        %v671 = vld [vmem:[%s488 + $0x80] sm:$0xff]
        %v672 = vld [vmem:[%s488 + $0x88] sm:$0xff]
        %v673 = vld [vmem:[%s488 + $0x90] sm:$0xff]
        %v674 = vld [vmem:[%s488 + $0x98] sm:$0xff]
        %v675 = vld [vmem:[%s488 + $0xa0] sm:$0xff]
        %v676 = vld [vmem:[%s488 + $0xa8] sm:$0xff]
        %v677 = vld [vmem:[%s488 + $0xb0] sm:$0xff]
        %v678 = vld [vmem:[%s488 + $0xb8] sm:$0xff]
        %v679 = vld [vmem:[%s488 + $0xc0] sm:$0xff]
        %v680 = vld [vmem:[%s488 + $0xc8] sm:$0xff]
        %v681 = vld [vmem:[%s488 + $0xd0] sm:$0xff]
        %v682 = vld [vmem:[%s488 + $0xd8] sm:$0xff]
        %v683 = vld [vmem:[%s488 + $0xe0] sm:$0xff]
        %v684 = vld [vmem:[%s488 + $0xe8] sm:$0xff]
        %v685 = vld [vmem:[%s488 + $0xf0] sm:$0xff]
        %v686 = vld [vmem:[%s488 + $0xf8] sm:$0xff]
        %v687 = vld [vmem:[%s488 + $0x100] sm:$0xff]
        %v688 = vld [vmem:[%s488 + $0x108] sm:$0xff]
        %v689 = vld [vmem:[%s488 + $0x110] sm:$0xff]
        %v690 = vld [vmem:[%s488 + $0x118] sm:$0xff]
        %v691 = vld [vmem:[%s488 + $0x120] sm:$0xff]
        %v692 = vld [vmem:[%s488 + $0x128] sm:$0xff]
        %v693 = vld [vmem:[%s488 + $0x130] sm:$0xff]
        %v694 = vld [vmem:[%s488 + $0x138] sm:$0xff]
        %v695 = vld [vmem:[%s488 + $0x140] sm:$0xff]
        %v696 = vld [vmem:[%s488 + $0x148] sm:$0xff]
        %v697 = vld [vmem:[%s488 + $0x150] sm:$0xff]
        %v698 = vld [vmem:[%s488 + $0x158] sm:$0xff]
        %v699 = vld [vmem:[%s488 + $0x160] sm:$0xff]
        %v700 = vld [vmem:[%s488 + $0x168] sm:$0xff]
        %v701 = vld [vmem:[%s488 + $0x170] sm:$0xff]
        %v702 = vld [vmem:[%s488 + $0x178] sm:$0xff]
        %v703 = vld [vmem:[%s488 + $0x180] sm:$0xff]
        %v704 = vld [vmem:[%s488 + $0x188] sm:$0xff]
        %v705 = vld [vmem:[%s488 + $0x190] sm:$0xff]
        %v706 = vld [vmem:[%s488 + $0x198] sm:$0xff]
        %v707 = vld [vmem:[%s488 + $0x1a0] sm:$0xff]
        %v708 = vld [vmem:[%s488 + $0x1a8] sm:$0xff]
        %v709 = vld [vmem:[%s488 + $0x1b0] sm:$0xff]
        %v710 = vld [vmem:[%s488 + $0x1b8] sm:$0xff]
        %v711 = vld [vmem:[%s488 + $0x1c0] sm:$0xff]
        %v712 = vld [vmem:[%s488 + $0x1c8] sm:$0xff]
        %v713 = vld [vmem:[%s488 + $0x1d0] sm:$0xff]
        %v714 = vld [vmem:[%s488 + $0x1d8] sm:$0xff]
        %v715 = vld [vmem:[%s488 + $0x1e0] sm:$0xff]
        %v716 = vld [vmem:[%s488 + $0x1e8] sm:$0xff]
        %v717 = vld [vmem:[%s488 + $0x1f0] sm:$0xff]
        %v718 = vld [vmem:[%s488 + $0x1f8] sm:$0xff]
        %v719 = vld [vmem:[%s563] sm:$0xff]
        %v720 = vld [vmem:[%s563 + $0x8] sm:$0xff]
        %v721 = vld [vmem:[%s563 + $0x10] sm:$0xff]
        %v722 = vld [vmem:[%s563 + $0x18] sm:$0xff]
        %v723 = vld [vmem:[%s563 + $0x20] sm:$0xff]
        %v724 = vld [vmem:[%s563 + $0x28] sm:$0xff]
        %v725 = vld [vmem:[%s563 + $0x30] sm:$0xff]
        %v726 = vld [vmem:[%s563 + $0x38] sm:$0xff]
        %v727 = vld [vmem:[%s568] sm:$0xff]
        %v728 = vld [vmem:[%s568 + $0x8] sm:$0x3]
        %v729 = vld [vmem:[%s5] sm:$0xf]
        %v730 = vld [vmem:[%s5 + $0x4] sm:$0xf]
        %v731 = vld [vmem:[%s5 + $0x8] sm:$0xf]
        %v732 = vld [vmem:[%s5 + $0xc] sm:$0xf]
        %v733 = vld [vmem:[%s5 + $0x10] sm:$0xf]
        %v734 = vld [vmem:[%s5 + $0x14] sm:$0xf]
        %v735 = vld [vmem:[%s5 + $0x18] sm:$0xf]
        %v736 = vld [vmem:[%s5 + $0x1c] sm:$0xf]
        %v737 = vld [vmem:[%s5 + $0x20] sm:$0xf]
        %v738 = vld [vmem:[%s5 + $0x24] sm:$0xf]
        %v739 = vld [vmem:[%s5 + $0x28] sm:$0xf]
        %v740 = vld [vmem:[%s5 + $0x2c] sm:$0xf]
        %v741 = vld [vmem:[%s5 + $0x30] sm:$0xf]
        %v742 = vld [vmem:[%s5 + $0x34] sm:$0xf]
        %v743 = vld [vmem:[%s5 + $0x38] sm:$0xf]
        %v744 = vld [vmem:[%s5 + $0x3c] sm:$0xf]
        %v745 = vld [vmem:[%s5 + $0x40] sm:$0xf]
        %v746 = vld [vmem:[%s5 + $0x44] sm:$0xf]
        %v747 = vld [vmem:[%s5 + $0x48] sm:$0xf]
        %v748 = vld [vmem:[%s5 + $0x4c] sm:$0xf]
        %v749 = vld [vmem:[%s5 + $0x50] sm:$0xf]
        %v750 = vld [vmem:[%s5 + $0x54] sm:$0xf]
        %v751 = vld [vmem:[%s5 + $0x58] sm:$0xf]
        %v752 = vld [vmem:[%s5 + $0x5c] sm:$0xf]
        %v753 = vld [vmem:[%s5 + $0x60] sm:$0xf]
        %v754 = vld [vmem:[%s5 + $0x64] sm:$0xf]
        %v755 = vld [vmem:[%s5 + $0x68] sm:$0xf]
        %v756 = vld [vmem:[%s5 + $0x6c] sm:$0xf]
        %v757 = vld [vmem:[%s5 + $0x70] sm:$0xf]
        %v758 = vld [vmem:[%s5 + $0x74] sm:$0xf]
        %v759 = vld [vmem:[%s5 + $0x78] sm:$0xf]
        %v760 = vld [vmem:[%s5 + $0x7c] sm:$0xf]
        %v761 = vld [vmem:[%s5 + $0x80] sm:$0xf]
        %v762 = vld [vmem:[%s5 + $0x84] sm:$0xf]
        %v763 = vld [vmem:[%s5 + $0x88] sm:$0xf]
        %v764 = vld [vmem:[%s5 + $0x8c] sm:$0xf]
        %v765 = vld [vmem:[%s5 + $0x90] sm:$0xf]
        %v766 = vld [vmem:[%s5 + $0x94] sm:$0xf]
        %v767 = vld [vmem:[%s5 + $0x98] sm:$0xf]
        %v768 = vld [vmem:[%s5 + $0x9c] sm:$0xf]
        %v769 = vld [vmem:[%s5 + $0xa0] sm:$0xf]
        %v770 = vld [vmem:[%s5 + $0xa4] sm:$0xf]
        %v771 = vld [vmem:[%s5 + $0xa8] sm:$0xf]
        %v772 = vld [vmem:[%s5 + $0xac] sm:$0xf]
        %v773 = vld [vmem:[%s5 + $0xb0] sm:$0xf]
        %v774 = vld [vmem:[%s5 + $0xb4] sm:$0xf]
        %v775 = vld [vmem:[%s5 + $0xb8] sm:$0xf]
        %v776 = vld [vmem:[%s5 + $0xbc] sm:$0xf]
        %v777 = vld [vmem:[%s5 + $0xc0] sm:$0xf]
        %v778 = vld [vmem:[%s5 + $0xc4] sm:$0xf]
        %v779 = vld [vmem:[%s5 + $0xc8] sm:$0xf]
        %v780 = vld [vmem:[%s5 + $0xcc] sm:$0xf]
        %v781 = vld [vmem:[%s5 + $0xd0] sm:$0xf]
        %v782 = vld [vmem:[%s5 + $0xd4] sm:$0xf]
        %v783 = vld [vmem:[%s5 + $0xd8] sm:$0xf]
        %v784 = vld [vmem:[%s5 + $0xdc] sm:$0xf]
        %v785 = vld [vmem:[%s5 + $0xe0] sm:$0xf]
        %v786 = vld [vmem:[%s5 + $0xe4] sm:$0xf]
        %v787 = vld [vmem:[%s5 + $0xe8] sm:$0xf]
        %v788 = vld [vmem:[%s5 + $0xec] sm:$0xf]
        %v789 = vld [vmem:[%s5 + $0xf0] sm:$0xf]
        %v790 = vld [vmem:[%s5 + $0xf4] sm:$0xf]
        %v791 = vld [vmem:[%s5 + $0xf8] sm:$0xf]
        %v792 = vld [vmem:[%s5 + $0xfc] sm:$0xf]
        %v793 = vld [vmem:[%s5 + $0x100] sm:$0xf]
        %v794 = vld [vmem:[%s5 + $0x104] sm:$0xf]
        %v795 = vld [vmem:[%s5 + $0x108] sm:$0xf]
        %v796 = vld [vmem:[%s5 + $0x10c] sm:$0xf]
        %v797 = vld [vmem:[%s5 + $0x110] sm:$0xf]
        %v798 = vld [vmem:[%s5 + $0x114] sm:$0xf]
        %v799 = vld [vmem:[%s5 + $0x118] sm:$0xf]
        %v800 = vld [vmem:[%s5 + $0x11c] sm:$0xf]
        %v801 = vld [vmem:[%s5 + $0x120] sm:$0xf]
        %v802 = vld [vmem:[%s5 + $0x124] sm:$0xf]
        %v803 = vld [vmem:[%s5 + $0x128] sm:$0xf]
        %v804 = vld [vmem:[%s5 + $0x12c] sm:$0xf]
        %v805 = vld [vmem:[%s5 + $0x130] sm:$0xf]
        %v806 = vld [vmem:[%s5 + $0x134] sm:$0xf]
        %v807 = vld [vmem:[%s5 + $0x138] sm:$0xf]
        %v808 = vld [vmem:[%s5 + $0x13c] sm:$0xf]
        %v809 = vld [vmem:[%s5 + $0x140] sm:$0xf]
        %v810 = vld [vmem:[%s5 + $0x144] sm:$0xf]
        %v811 = vld [vmem:[%s5 + $0x148] sm:$0xf]
        %v812 = vld [vmem:[%s5 + $0x14c] sm:$0xf]
        %v813 = vld [vmem:[%s5 + $0x150] sm:$0xf]
        %v814 = vld [vmem:[%s5 + $0x154] sm:$0xf]
        %v815 = vld [vmem:[%s5 + $0x158] sm:$0xf]
        %v816 = vld [vmem:[%s5 + $0x15c] sm:$0xf]
        %v817 = vld [vmem:[%s5 + $0x160] sm:$0xf]
        %v818 = vld [vmem:[%s5 + $0x164] sm:$0xf]
        %v819 = vld [vmem:[%s5 + $0x168] sm:$0xf]
        %v820 = vld [vmem:[%s5 + $0x16c] sm:$0xf]
        %v821 = vld [vmem:[%s5 + $0x170] sm:$0xf]
        %v822 = vld [vmem:[%s5 + $0x174] sm:$0xf]
        %v823 = vld [vmem:[%s5 + $0x178] sm:$0xf]
        %v824 = vld [vmem:[%s5 + $0x17c] sm:$0xf]
        %v825 = vpack.c.bf16 %v612, %v611
        %v826 = vpack.c.bf16 %v614, %v613
        %v827 = vpack.c.bf16 %v616, %v615
        %v828 = vpack.c.bf16 %v618, %v617
        %v829 = vpack.c.bf16 %v620, %v619
        %v830 = vpack.c.bf16 %v622, %v621
        %v927 = vunpack.c.l.b16 %v729
        %v928 = vunpack.c.l.b16 %v730
        %v929 = vunpack.c.l.b16 %v731
        %v930 = vunpack.c.l.b16 %v732
        %v931 = vunpack.c.l.b16 %v733
        %v932 = vunpack.c.l.b16 %v734
        %v933 = vunpack.c.l.b16 %v735
        %v934 = vunpack.c.l.b16 %v736
        %v935 = vunpack.c.l.b16 %v737
        %v936 = vunpack.c.l.b16 %v738
        %v937 = vunpack.c.l.b16 %v739
        %v938 = vunpack.c.l.b16 %v740
        %v939 = vunpack.c.l.b16 %v741
        %v940 = vunpack.c.l.b16 %v742
        %v941 = vunpack.c.l.b16 %v743
        %v942 = vunpack.c.l.b16 %v744
        %v943 = vunpack.c.l.b16 %v745
        %v944 = vunpack.c.l.b16 %v746
        %v945 = vunpack.c.l.b16 %v747
        %v946 = vunpack.c.l.b16 %v748
        %v947 = vunpack.c.l.b16 %v749
        %v948 = vunpack.c.l.b16 %v750
        %v949 = vunpack.c.l.b16 %v751
        %v950 = vunpack.c.l.b16 %v752
        %v951 = vunpack.c.l.b16 %v753
        %v952 = vunpack.c.l.b16 %v754
        %v953 = vunpack.c.l.b16 %v755
        %v954 = vunpack.c.l.b16 %v756
        %v955 = vunpack.c.l.b16 %v757
        %v956 = vunpack.c.l.b16 %v758
        %v957 = vunpack.c.l.b16 %v759
        %v958 = vunpack.c.l.b16 %v760
        %v959 = vunpack.c.l.b16 %v761
        %v960 = vunpack.c.l.b16 %v762
        %v961 = vunpack.c.l.b16 %v763
        %v962 = vunpack.c.l.b16 %v764
        %v963 = vunpack.c.l.b16 %v765
        %v964 = vunpack.c.l.b16 %v766
        %v965 = vunpack.c.l.b16 %v767
        %v966 = vunpack.c.l.b16 %v768
        %v967 = vunpack.c.l.b16 %v769
        %v968 = vunpack.c.l.b16 %v770
        %v969 = vunpack.c.l.b16 %v771
        %v970 = vunpack.c.l.b16 %v772
        %v971 = vunpack.c.l.b16 %v773
        %v972 = vunpack.c.l.b16 %v774
        %v973 = vunpack.c.l.b16 %v775
        %v974 = vunpack.c.l.b16 %v776
        %v975 = vunpack.c.l.b16 %v777
        %v976 = vunpack.c.l.b16 %v778
        %v977 = vunpack.c.l.b16 %v779
        %v978 = vunpack.c.l.b16 %v780
        %v979 = vunpack.c.l.b16 %v781
        %v980 = vunpack.c.l.b16 %v782
        %v981 = vunpack.c.l.b16 %v783
        %v982 = vunpack.c.l.b16 %v784
        %v983 = vunpack.c.l.b16 %v785
        %v984 = vunpack.c.l.b16 %v786
        %v985 = vunpack.c.l.b16 %v787
        %v986 = vunpack.c.l.b16 %v788
        %v987 = vunpack.c.l.b16 %v789
        %v988 = vunpack.c.l.b16 %v790
        %v989 = vunpack.c.l.b16 %v791
        %v990 = vunpack.c.l.b16 %v792
        %v991 = vunpack.c.l.b16 %v793
        %v992 = vunpack.c.l.b16 %v794
        %v993 = vunpack.c.l.b16 %v795
        %v994 = vunpack.c.l.b16 %v796
        %v995 = vunpack.c.l.b16 %v797
        %v996 = vunpack.c.l.b16 %v798
        %v997 = vunpack.c.l.b16 %v799
        %v998 = vunpack.c.l.b16 %v800
        %v999 = vunpack.c.l.b16 %v801
        %v1000 = vunpack.c.l.b16 %v802
        %v1001 = vunpack.c.l.b16 %v803
        %v1002 = vunpack.c.l.b16 %v804
        %v1003 = vunpack.c.l.b16 %v805
        %v1004 = vunpack.c.l.b16 %v806
        %v1005 = vunpack.c.l.b16 %v807
        %v1006 = vunpack.c.l.b16 %v808
        %v1007 = vunpack.c.l.b16 %v809
        %v1008 = vunpack.c.l.b16 %v810
        %v1009 = vunpack.c.l.b16 %v811
        %v1010 = vunpack.c.l.b16 %v812
        %v1011 = vunpack.c.l.b16 %v813
        %v1012 = vunpack.c.l.b16 %v814
        %v1013 = vunpack.c.l.b16 %v815
        %v1014 = vunpack.c.l.b16 %v816
        %v1015 = vunpack.c.l.b16 %v817
        %v1016 = vunpack.c.l.b16 %v818
        %v1017 = vunpack.c.l.b16 %v819
        %v1018 = vunpack.c.l.b16 %v820
        %v1019 = vunpack.c.l.b16 %v821
        %v1020 = vunpack.c.l.b16 %v822
        %v1021 = vunpack.c.l.b16 %v823
        %v1022 = vunpack.c.l.b16 %v824
        %v1023 = vpack.c.b16 %v928, %v927
        %v1024 = vpack.c.b16 %v930, %v929
        %v1025 = vpack.c.b16 %v932, %v931
        %v1026 = vpack.c.b16 %v934, %v933
        %v1027 = vpack.c.b16 %v936, %v935
        %v1028 = vpack.c.b16 %v938, %v937
        %v1029 = vpack.c.b16 %v940, %v939
        %v1030 = vpack.c.b16 %v942, %v941
        %v1031 = vpack.c.b16 %v944, %v943
        %v1032 = vpack.c.b16 %v946, %v945
        %v1033 = vpack.c.b16 %v948, %v947
        %v1034 = vpack.c.b16 %v950, %v949
        %v1035 = vpack.c.b16 %v952, %v951
        %v1036 = vpack.c.b16 %v954, %v953
        %v1037 = vpack.c.b16 %v956, %v955
        %v1038 = vpack.c.b16 %v958, %v957
        %v1039 = vpack.c.b16 %v960, %v959
        %v1040 = vpack.c.b16 %v962, %v961
        %v1041 = vpack.c.b16 %v964, %v963
        %v1042 = vpack.c.b16 %v966, %v965
        %v1043 = vpack.c.b16 %v968, %v967
        %v1044 = vpack.c.b16 %v970, %v969
        %v1045 = vpack.c.b16 %v972, %v971
        %v1046 = vpack.c.b16 %v974, %v973
        %v1047 = vpack.c.b16 %v976, %v975
        %v1048 = vpack.c.b16 %v978, %v977
        %v1049 = vpack.c.b16 %v980, %v979
        %v1050 = vpack.c.b16 %v982, %v981
        %v1051 = vpack.c.b16 %v984, %v983
        %v1052 = vpack.c.b16 %v986, %v985
        %v1053 = vpack.c.b16 %v988, %v987
        %v1054 = vpack.c.b16 %v990, %v989
        %v1055 = vpack.c.b16 %v992, %v991
        %v1056 = vpack.c.b16 %v994, %v993
        %v1057 = vpack.c.b16 %v996, %v995
        %v1058 = vpack.c.b16 %v998, %v997
        %v1059 = vpack.c.b16 %v1000, %v999
        %v1060 = vpack.c.b16 %v1002, %v1001
        %v1061 = vpack.c.b16 %v1004, %v1003
        %v1062 = vpack.c.b16 %v1006, %v1005
        %v1063 = vpack.c.b16 %v1008, %v1007
        %v1064 = vpack.c.b16 %v1010, %v1009
        %v1065 = vpack.c.b16 %v1012, %v1011
        %v1066 = vpack.c.b16 %v1014, %v1013
        %v1067 = vpack.c.b16 %v1016, %v1015
        %v1068 = vpack.c.b16 %v1018, %v1017
        %v1069 = vpack.c.b16 %v1020, %v1019
        %v1070 = vpack.c.b16 %v1022, %v1021
        %vm1071 = vcmask 785408
        %v1073 = vsel %vm1071, %v1023, 0
        %v1076 = vsel %vm1071, %v1024, 0
        %v1079 = vsel %vm1071, %v1025, 0
        %v1082 = vsel %vm1071, %v1026, 0
        %v1085 = vsel %vm1071, %v1027, 0
        %v1088 = vsel %vm1071, %v1028, 0
        %v1091 = vsel %vm1071, %v1029, 0
        %v1094 = vsel %vm1071, %v1030, 0
        %v1097 = vsel %vm1071, %v1031, 0
        %v1100 = vsel %vm1071, %v1032, 0
        %v1103 = vsel %vm1071, %v1033, 0
        %v1106 = vsel %vm1071, %v1034, 0
        %v1109 = vsel %vm1071, %v1035, 0
        %v1112 = vsel %vm1071, %v1036, 0
        %v1115 = vsel %vm1071, %v1037, 0
        %v1118 = vsel %vm1071, %v1038, 0
        %v1121 = vsel %vm1071, %v1039, 0
        %v1124 = vsel %vm1071, %v1040, 0
        %v1127 = vsel %vm1071, %v1041, 0
        %v1130 = vsel %vm1071, %v1042, 0
        %v1133 = vsel %vm1071, %v1043, 0
        %v1136 = vsel %vm1071, %v1044, 0
        %v1139 = vsel %vm1071, %v1045, 0
        %v1142 = vsel %vm1071, %v1046, 0
        %v1145 = vsel %vm1071, %v1047, 0
        %v1148 = vsel %vm1071, %v1048, 0
        %v1151 = vsel %vm1071, %v1049, 0
        %v1154 = vsel %vm1071, %v1050, 0
        %v1157 = vsel %vm1071, %v1051, 0
        %v1160 = vsel %vm1071, %v1052, 0
        %v1163 = vsel %vm1071, %v1053, 0
        %v1166 = vsel %vm1071, %v1054, 0
        %v1169 = vsel %vm1071, %v1055, 0
        %v1172 = vsel %vm1071, %v1056, 0
        %v1175 = vsel %vm1071, %v1057, 0
        %v1178 = vsel %vm1071, %v1058, 0
        %v1181 = vsel %vm1071, %v1059, 0
        %v1184 = vsel %vm1071, %v1060, 0
        %v1187 = vsel %vm1071, %v1061, 0
        %v1190 = vsel %vm1071, %v1062, 0
        %v1193 = vsel %vm1071, %v1063, 0
        %v1196 = vsel %vm1071, %v1064, 0
        %v1199 = vsel %vm1071, %v1065, 0
        %v1202 = vsel %vm1071, %v1066, 0
        %v1205 = vsel %vm1071, %v1067, 0
        %v1208 = vsel %vm1071, %v1068, 0
        %v1211 = vsel %vm1071, %v1069, 0
        %v1214 = vsel %vm1071, %v1070, 0
        %1216 = vmatpush.bf16.msra.mxu0 0
        %1217 = vmatpush.bf16.msra.mxu0 0
        %1218 = vmatpush.bf16.msra.mxu0 %v830
        %1219 = vmatpush.bf16.msra.mxu0 %v829
        %1220 = vmatpush.bf16.msra.mxu0 %v828
        %1221 = vmatpush.bf16.msra.mxu0 %v827
        %1222 = vmatpush.bf16.msra.mxu0 %v826
        %1223 = vmatpush.bf16.msra.mxu0 %v825
        %1224 = vmatmul.bf16.gmra.mxu0 %v1073
        %v1225 = vpop.f32.mrf.mxu0
        %v1226 = vadd.f32 0.0, %v1225
        %v1227 = vpop.f32.mrf.mxu0
        %v1228 = vadd.f32 0.0, %v1227
        %1229 = vmatmul.bf16.gmra.mxu0 %v1076
        %v1230 = vpop.f32.mrf.mxu0
        %v1231 = vadd.f32 0.0, %v1230
        %v1232 = vpop.f32.mrf.mxu0
        %v1233 = vadd.f32 0.0, %v1232
        %1234 = vmatmul.bf16.gmra.mxu0 %v1079
        %v1235 = vpop.f32.mrf.mxu0
        %v1236 = vadd.f32 0.0, %v1235
        %v1237 = vpop.f32.mrf.mxu0
        %v1238 = vadd.f32 0.0, %v1237
        %1239 = vmatmul.bf16.gmra.mxu0 %v1082
        %v1240 = vpop.f32.mrf.mxu0
        %v1241 = vadd.f32 0.0, %v1240
        %v1242 = vpop.f32.mrf.mxu0
        %v1243 = vadd.f32 0.0, %v1242
        %1244 = vmatmul.bf16.gmra.mxu0 %v1085
        %v1245 = vpop.f32.mrf.mxu0
        %v1246 = vadd.f32 0.0, %v1245
        %v1247 = vpop.f32.mrf.mxu0
        %v1248 = vadd.f32 0.0, %v1247
        %1249 = vmatmul.bf16.gmra.mxu0 %v1088
        %v1250 = vpop.f32.mrf.mxu0
        %v1251 = vadd.f32 0.0, %v1250
        %v1252 = vpop.f32.mrf.mxu0
        %v1253 = vadd.f32 0.0, %v1252
        %1254 = vmatmul.bf16.gmra.mxu0 %v1091
        %v1255 = vpop.f32.mrf.mxu0
        %v1256 = vadd.f32 0.0, %v1255
        %v1257 = vpop.f32.mrf.mxu0
        %v1258 = vadd.f32 0.0, %v1257
        %1259 = vmatmul.bf16.gmra.mxu0 %v1094
        %v1260 = vpop.f32.mrf.mxu0
        %v1261 = vadd.f32 0.0, %v1260
        %v1262 = vpop.f32.mrf.mxu0
        %v1263 = vadd.f32 0.0, %v1262
        %1264 = vmatmul.bf16.gmra.mxu0 %v1097
        %v1265 = vpop.f32.mrf.mxu0
        %v1266 = vadd.f32 0.0, %v1265
        %v1267 = vpop.f32.mrf.mxu0
        %v1268 = vadd.f32 0.0, %v1267
        %1269 = vmatmul.bf16.gmra.mxu0 %v1100
        %v1270 = vpop.f32.mrf.mxu0
        %v1271 = vadd.f32 0.0, %v1270
        %v1272 = vpop.f32.mrf.mxu0
        %v1273 = vadd.f32 0.0, %v1272
        %1274 = vmatmul.bf16.gmra.mxu0 %v1103
        %v1275 = vpop.f32.mrf.mxu0
        %v1276 = vadd.f32 0.0, %v1275
        %v1277 = vpop.f32.mrf.mxu0
        %v1278 = vadd.f32 0.0, %v1277
        %1279 = vmatmul.bf16.gmra.mxu0 %v1106
        %v1280 = vpop.f32.mrf.mxu0
        %v1281 = vadd.f32 0.0, %v1280
        %v1282 = vpop.f32.mrf.mxu0
        %v1283 = vadd.f32 0.0, %v1282
        %1284 = vmatmul.bf16.gmra.mxu0 %v1109
        %v1285 = vpop.f32.mrf.mxu0
        %v1286 = vadd.f32 0.0, %v1285
        %v1287 = vpop.f32.mrf.mxu0
        %v1288 = vadd.f32 0.0, %v1287
        %1289 = vmatmul.bf16.gmra.mxu0 %v1112
        %v1290 = vpop.f32.mrf.mxu0
        %v1291 = vadd.f32 0.0, %v1290
        %v1292 = vpop.f32.mrf.mxu0
        %v1293 = vadd.f32 0.0, %v1292
        %1294 = vmatmul.bf16.gmra.mxu0 %v1115
        %v1295 = vpop.f32.mrf.mxu0
        %v1296 = vadd.f32 0.0, %v1295
        %v1297 = vpop.f32.mrf.mxu0
        %v1298 = vadd.f32 0.0, %v1297
        %1299 = vmatmul.bf16.gmra.mxu0 %v1118
        %v1300 = vpop.f32.mrf.mxu0
        %v1301 = vadd.f32 0.0, %v1300
        %v1302 = vpop.f32.mrf.mxu0
        %v1303 = vadd.f32 0.0, %v1302
        %1304 = vmatmul.bf16.gmra.mxu0 %v1121
        %v1305 = vpop.f32.mrf.mxu0
        %v1306 = vadd.f32 0.0, %v1305
        %v1307 = vpop.f32.mrf.mxu0
        %v1308 = vadd.f32 0.0, %v1307
        %1309 = vmatmul.bf16.gmra.mxu0 %v1124
        %v1310 = vpop.f32.mrf.mxu0
        %v1311 = vadd.f32 0.0, %v1310
        %v1312 = vpop.f32.mrf.mxu0
        %v1313 = vadd.f32 0.0, %v1312
        %1314 = vmatmul.bf16.gmra.mxu0 %v1127
        %v1315 = vpop.f32.mrf.mxu0
        %v1316 = vadd.f32 0.0, %v1315
        %v1317 = vpop.f32.mrf.mxu0
        %v1318 = vadd.f32 0.0, %v1317
        %1319 = vmatmul.bf16.gmra.mxu0 %v1130
        %v1320 = vpop.f32.mrf.mxu0
        %v1321 = vadd.f32 0.0, %v1320
        %v1322 = vpop.f32.mrf.mxu0
        %v1323 = vadd.f32 0.0, %v1322
        %1324 = vmatmul.bf16.gmra.mxu0 %v1133
        %v1325 = vpop.f32.mrf.mxu0
        %v1326 = vadd.f32 0.0, %v1325
        %v1327 = vpop.f32.mrf.mxu0
        %v1328 = vadd.f32 0.0, %v1327
        %1329 = vmatmul.bf16.gmra.mxu0 %v1136
        %v1330 = vpop.f32.mrf.mxu0
        %v1331 = vadd.f32 0.0, %v1330
        %v1332 = vpop.f32.mrf.mxu0
        %v1333 = vadd.f32 0.0, %v1332
        %1334 = vmatmul.bf16.gmra.mxu0 %v1139
        %v1335 = vpop.f32.mrf.mxu0
        %v1336 = vadd.f32 0.0, %v1335
        %v1337 = vpop.f32.mrf.mxu0
        %v1338 = vadd.f32 0.0, %v1337
        %1339 = vmatmul.bf16.gmra.mxu0 %v1142
        %v1340 = vpop.f32.mrf.mxu0
        %v1341 = vadd.f32 0.0, %v1340
        %v1342 = vpop.f32.mrf.mxu0
        %v1343 = vadd.f32 0.0, %v1342
        %1344 = vmatmul.bf16.gmra.mxu0 %v1145
        %v1345 = vpop.f32.mrf.mxu0
        %v1346 = vadd.f32 0.0, %v1345
        %v1347 = vpop.f32.mrf.mxu0
        %v1348 = vadd.f32 0.0, %v1347
        %1349 = vmatmul.bf16.gmra.mxu0 %v1148
        %v1350 = vpop.f32.mrf.mxu0
        %v1351 = vadd.f32 0.0, %v1350
        %v1352 = vpop.f32.mrf.mxu0
        %v1353 = vadd.f32 0.0, %v1352
        %1354 = vmatmul.bf16.gmra.mxu0 %v1151
        %v1355 = vpop.f32.mrf.mxu0
        %v1356 = vadd.f32 0.0, %v1355
        %v1357 = vpop.f32.mrf.mxu0
        %v1358 = vadd.f32 0.0, %v1357
        %1359 = vmatmul.bf16.gmra.mxu0 %v1154
        %v1360 = vpop.f32.mrf.mxu0
        %v1361 = vadd.f32 0.0, %v1360
        %v1362 = vpop.f32.mrf.mxu0
        %v1363 = vadd.f32 0.0, %v1362
        %1364 = vmatmul.bf16.gmra.mxu0 %v1157
        %v1365 = vpop.f32.mrf.mxu0
        %v1366 = vadd.f32 0.0, %v1365
        %v1367 = vpop.f32.mrf.mxu0
        %v1368 = vadd.f32 0.0, %v1367
        %1369 = vmatmul.bf16.gmra.mxu0 %v1160
        %v1370 = vpop.f32.mrf.mxu0
        %v1371 = vadd.f32 0.0, %v1370
        %v1372 = vpop.f32.mrf.mxu0
        %v1373 = vadd.f32 0.0, %v1372
        %1374 = vmatmul.bf16.gmra.mxu0 %v1163
        %v1375 = vpop.f32.mrf.mxu0
        %v1376 = vadd.f32 0.0, %v1375
        %v1377 = vpop.f32.mrf.mxu0
        %v1378 = vadd.f32 0.0, %v1377
        %1379 = vmatmul.bf16.gmra.mxu0 %v1166
        %v1380 = vpop.f32.mrf.mxu0
        %v1381 = vadd.f32 0.0, %v1380
        %v1382 = vpop.f32.mrf.mxu0
        %v1383 = vadd.f32 0.0, %v1382
        %1384 = vmatmul.bf16.gmra.mxu0 %v1169
        %v1385 = vpop.f32.mrf.mxu0
        %v1386 = vadd.f32 0.0, %v1385
        %v1387 = vpop.f32.mrf.mxu0
        %v1388 = vadd.f32 0.0, %v1387
        %1389 = vmatmul.bf16.gmra.mxu0 %v1172
        %v1390 = vpop.f32.mrf.mxu0
        %v1391 = vadd.f32 0.0, %v1390
        %v1392 = vpop.f32.mrf.mxu0
        %v1393 = vadd.f32 0.0, %v1392
        %1394 = vmatmul.bf16.gmra.mxu0 %v1175
        %v1395 = vpop.f32.mrf.mxu0
        %v1396 = vadd.f32 0.0, %v1395
        %v1397 = vpop.f32.mrf.mxu0
        %v1398 = vadd.f32 0.0, %v1397
        %1399 = vmatmul.bf16.gmra.mxu0 %v1178
        %v1400 = vpop.f32.mrf.mxu0
        %v1401 = vadd.f32 0.0, %v1400
        %v1402 = vpop.f32.mrf.mxu0
        %v1403 = vadd.f32 0.0, %v1402
        %1404 = vmatmul.bf16.gmra.mxu0 %v1181
        %v1405 = vpop.f32.mrf.mxu0
        %v1406 = vadd.f32 0.0, %v1405
        %v1407 = vpop.f32.mrf.mxu0
        %v1408 = vadd.f32 0.0, %v1407
        %1409 = vmatmul.bf16.gmra.mxu0 %v1184
        %v1410 = vpop.f32.mrf.mxu0
        %v1411 = vadd.f32 0.0, %v1410
        %v1412 = vpop.f32.mrf.mxu0
        %v1413 = vadd.f32 0.0, %v1412
        %1414 = vmatmul.bf16.gmra.mxu0 %v1187
        %v1415 = vpop.f32.mrf.mxu0
        %v1416 = vadd.f32 0.0, %v1415
        %v1417 = vpop.f32.mrf.mxu0
        %v1418 = vadd.f32 0.0, %v1417
        %1419 = vmatmul.bf16.gmra.mxu0 %v1190
        %v1420 = vpop.f32.mrf.mxu0
        %v1421 = vadd.f32 0.0, %v1420
        %v1422 = vpop.f32.mrf.mxu0
        %v1423 = vadd.f32 0.0, %v1422
        %1424 = vmatmul.bf16.gmra.mxu0 %v1193
        %v1425 = vpop.f32.mrf.mxu0
        %v1426 = vadd.f32 0.0, %v1425
        %v1427 = vpop.f32.mrf.mxu0
        %v1428 = vadd.f32 0.0, %v1427
        %1429 = vmatmul.bf16.gmra.mxu0 %v1196
        %v1430 = vpop.f32.mrf.mxu0
        %v1431 = vadd.f32 0.0, %v1430
        %v1432 = vpop.f32.mrf.mxu0
        %v1433 = vadd.f32 0.0, %v1432
        %1434 = vmatmul.bf16.gmra.mxu0 %v1199
        %v1435 = vpop.f32.mrf.mxu0
        %v1436 = vadd.f32 0.0, %v1435
        %v1437 = vpop.f32.mrf.mxu0
        %v1438 = vadd.f32 0.0, %v1437
        %1439 = vmatmul.bf16.gmra.mxu0 %v1202
        %v1440 = vpop.f32.mrf.mxu0
        %v1441 = vadd.f32 0.0, %v1440
        %v1442 = vpop.f32.mrf.mxu0
        %v1443 = vadd.f32 0.0, %v1442
        %1444 = vmatmul.bf16.gmra.mxu0 %v1205
        %v1445 = vpop.f32.mrf.mxu0
        %v1446 = vadd.f32 0.0, %v1445
        %v1447 = vpop.f32.mrf.mxu0
        %v1448 = vadd.f32 0.0, %v1447
        %1449 = vmatmul.bf16.gmra.mxu0 %v1208
        %v1450 = vpop.f32.mrf.mxu0
        %v1451 = vadd.f32 0.0, %v1450
        %v1452 = vpop.f32.mrf.mxu0
        %v1453 = vadd.f32 0.0, %v1452
        %1454 = vmatmul.bf16.gmra.mxu0 %v1211
        %v1455 = vpop.f32.mrf.mxu0
        %v1456 = vadd.f32 0.0, %v1455
        %v1457 = vpop.f32.mrf.mxu0
        %v1458 = vadd.f32 0.0, %v1457
        %1459 = vmatmul.bf16.gmra.mxu0 %v1214
        %v1460 = vpop.f32.mrf.mxu0
        %v1461 = vadd.f32 0.0, %v1460
        %v1462 = vpop.f32.mrf.mxu0
        %v1463 = vadd.f32 0.0, %v1462
        %1464 = vdwg.mxu0
        %vm1465 = vcmask 523264
        %v1467 = vsel %vm1465, %v1256, 0
        %v1470 = vsel %vm1465, %v1258, 0
        %v1473 = vsel %vm1465, %v1261, 0
        %v1476 = vsel %vm1465, %v1263, 0
        %v1479 = vsel %vm1465, %v1266, 0
        %v1482 = vsel %vm1465, %v1268, 0
        %v1485 = vsel %vm1465, %v1271, 0
        %v1488 = vsel %vm1465, %v1273, 0
        %v1491 = vsel %vm1465, %v1276, 0
        %v1494 = vsel %vm1465, %v1278, 0
        %v1497 = vsel %vm1465, %v1281, 0
        %v1500 = vsel %vm1465, %v1283, 0
        %1502 = vmatpush.msra.mxu0 0.0
        %1503 = vmatpush.msra.mxu0 0.0
        %1504 = vmatpush.msra.mxu0 0.0
        %1505 = vmatpush.msra.mxu0 0.0
        %1506 = vmatpush.msra.mxu0 0.0
        %1507 = vmatpush.msra.mxu0 0.0
        %1508 = vmatpush.msra.mxu0 0.0
        %1509 = vmatpush.msra.mxu0 0.0
        %1510 = vmatpush.msra.mxu0 %v670
        %1511 = vmatpush.msra.mxu0 %v669
        %1512 = vmatpush.msra.mxu0 %v668
        %1513 = vmatpush.msra.mxu0 %v667
        %1514 = vmatpush.msra.mxu0 %v666
        %1515 = vmatpush.msra.mxu0 %v665
        %1516 = vmatpush.msra.mxu0 %v664
        %1517 = vmatpush.msra.mxu0 %v663
        %1518 = vmatmul.f32.gmra.mxu0 %v1467
        %v1519 = vpop.f32.mrf.mxu0
        %v1520 = vadd.f32 0.0, %v1519
        %1521 = vmatmul.f32.gmra.mxu0 %v1470
        %v1522 = vpop.f32.mrf.mxu0
        %v1523 = vadd.f32 0.0, %v1522
        %1524 = vmatmul.f32.gmra.mxu0 %v1473
        %v1525 = vpop.f32.mrf.mxu0
        %v1526 = vadd.f32 0.0, %v1525
        %1527 = vmatmul.f32.gmra.mxu0 %v1476
        %v1528 = vpop.f32.mrf.mxu0
        %v1529 = vadd.f32 0.0, %v1528
        %1530 = vmatmul.f32.gmra.mxu0 %v1479
        %v1531 = vpop.f32.mrf.mxu0
        %v1532 = vadd.f32 0.0, %v1531
        %1533 = vmatmul.f32.gmra.mxu0 %v1482
        %v1534 = vpop.f32.mrf.mxu0
        %v1535 = vadd.f32 0.0, %v1534
        %1536 = vmatmul.f32.gmra.mxu0 %v1485
        %v1537 = vpop.f32.mrf.mxu0
        %v1538 = vadd.f32 0.0, %v1537
        %1539 = vmatmul.f32.gmra.mxu0 %v1488
        %v1540 = vpop.f32.mrf.mxu0
        %v1541 = vadd.f32 0.0, %v1540
        %1542 = vmatmul.f32.gmra.mxu0 %v1491
        %v1543 = vpop.f32.mrf.mxu0
        %v1544 = vadd.f32 0.0, %v1543
        %1545 = vmatmul.f32.gmra.mxu0 %v1494
        %v1546 = vpop.f32.mrf.mxu0
        %v1547 = vadd.f32 0.0, %v1546
        %1548 = vmatmul.f32.gmra.mxu0 %v1497
        %v1549 = vpop.f32.mrf.mxu0
        %v1550 = vadd.f32 0.0, %v1549
        %1551 = vmatmul.f32.gmra.mxu0 %v1500
        %v1552 = vpop.f32.mrf.mxu0
        %v1553 = vadd.f32 0.0, %v1552
        %1554 = vdwg.mxu0
        %v1556 = vsel %vm1465, %v1226, 0
        %v1559 = vsel %vm1465, %v1228, 0
        %v1562 = vsel %vm1465, %v1231, 0
        %v1565 = vsel %vm1465, %v1233, 0
        %v1568 = vsel %vm1465, %v1236, 0
        %v1571 = vsel %vm1465, %v1238, 0
        %v1574 = vsel %vm1465, %v1241, 0
        %v1577 = vsel %vm1465, %v1243, 0
        %v1580 = vsel %vm1465, %v1246, 0
        %v1583 = vsel %vm1465, %v1248, 0
        %v1586 = vsel %vm1465, %v1251, 0
        %v1589 = vsel %vm1465, %v1253, 0
        %1591 = vmatpush.msra.mxu0 0.0
        %1592 = vmatpush.msra.mxu0 0.0
        %1593 = vmatpush.msra.mxu0 0.0
        %1594 = vmatpush.msra.mxu0 0.0
        %1595 = vmatpush.msra.mxu0 0.0
        %1596 = vmatpush.msra.mxu0 0.0
        %1597 = vmatpush.msra.mxu0 0.0
        %1598 = vmatpush.msra.mxu0 0.0
        %1599 = vmatpush.msra.mxu0 %v662
        %1600 = vmatpush.msra.mxu0 %v661
        %1601 = vmatpush.msra.mxu0 %v660
        %1602 = vmatpush.msra.mxu0 %v659
        %1603 = vmatpush.msra.mxu0 %v658
        %1604 = vmatpush.msra.mxu0 %v657
        %1605 = vmatpush.msra.mxu0 %v656
        %1606 = vmatpush.msra.mxu0 %v655
        %1607 = vmatmul.f32.gmra.mxu0 %v1556
        %v1608 = vpop.f32.mrf.mxu0
        %v1609 = vadd.f32 %v1520, %v1608
        %1610 = vmatmul.f32.gmra.mxu0 %v1559
        %v1611 = vpop.f32.mrf.mxu0
        %v1612 = vadd.f32 %v1523, %v1611
        %1613 = vmatmul.f32.gmra.mxu0 %v1562
        %v1614 = vpop.f32.mrf.mxu0
        %v1615 = vadd.f32 %v1526, %v1614
        %1616 = vmatmul.f32.gmra.mxu0 %v1565
        %v1617 = vpop.f32.mrf.mxu0
        %v1618 = vadd.f32 %v1529, %v1617
        %1619 = vmatmul.f32.gmra.mxu0 %v1568
        %v1620 = vpop.f32.mrf.mxu0
        %v1621 = vadd.f32 %v1532, %v1620
        %1622 = vmatmul.f32.gmra.mxu0 %v1571
        %v1623 = vpop.f32.mrf.mxu0
        %v1624 = vadd.f32 %v1535, %v1623
        %1625 = vmatmul.f32.gmra.mxu0 %v1574
        %v1626 = vpop.f32.mrf.mxu0
        %v1627 = vadd.f32 %v1538, %v1626
        %1628 = vmatmul.f32.gmra.mxu0 %v1577
        %v1629 = vpop.f32.mrf.mxu0
        %v1630 = vadd.f32 %v1541, %v1629
        %1631 = vmatmul.f32.gmra.mxu0 %v1580
        %v1632 = vpop.f32.mrf.mxu0
        %v1633 = vadd.f32 %v1544, %v1632
        %1634 = vmatmul.f32.gmra.mxu0 %v1583
        %v1635 = vpop.f32.mrf.mxu0
        %v1636 = vadd.f32 %v1547, %v1635
        %1637 = vmatmul.f32.gmra.mxu0 %v1586
        %v1638 = vpop.f32.mrf.mxu0
        %v1639 = vadd.f32 %v1550, %v1638
        %1640 = vmatmul.f32.gmra.mxu0 %v1589
        %v1641 = vpop.f32.mrf.mxu0
        %v1642 = vadd.f32 %v1553, %v1641
        %1643 = vdwg.mxu0
        %v1645 = vsel %vm1465, %v1286, 0
        %v1648 = vsel %vm1465, %v1288, 0
        %v1651 = vsel %vm1465, %v1291, 0
        %v1654 = vsel %vm1465, %v1293, 0
        %v1657 = vsel %vm1465, %v1296, 0
        %v1660 = vsel %vm1465, %v1298, 0
        %v1663 = vsel %vm1465, %v1301, 0
        %v1666 = vsel %vm1465, %v1303, 0
        %v1669 = vsel %vm1465, %v1306, 0
        %v1672 = vsel %vm1465, %v1308, 0
        %v1675 = vsel %vm1465, %v1311, 0
        %v1678 = vsel %vm1465, %v1313, 0
        %1680 = vmatpush.msra.mxu0 0.0
        %1681 = vmatpush.msra.mxu0 0.0
        %1682 = vmatpush.msra.mxu0 0.0
        %1683 = vmatpush.msra.mxu0 0.0
        %1684 = vmatpush.msra.mxu0 0.0
        %1685 = vmatpush.msra.mxu0 0.0
        %1686 = vmatpush.msra.mxu0 0.0
        %1687 = vmatpush.msra.mxu0 0.0
        %1688 = vmatpush.msra.mxu0 %v678
        %1689 = vmatpush.msra.mxu0 %v677
        %1690 = vmatpush.msra.mxu0 %v676
        %1691 = vmatpush.msra.mxu0 %v675
        %1692 = vmatpush.msra.mxu0 %v674
        %1693 = vmatpush.msra.mxu0 %v673
        %1694 = vmatpush.msra.mxu0 %v672
        %1695 = vmatpush.msra.mxu0 %v671
        %1696 = vmatmul.f32.gmra.mxu0 %v1645
        %v1697 = vpop.f32.mrf.mxu0
        %v1698 = vadd.f32 0.0, %v1697
        %1699 = vmatmul.f32.gmra.mxu0 %v1648
        %v1700 = vpop.f32.mrf.mxu0
        %v1701 = vadd.f32 0.0, %v1700
        %1702 = vmatmul.f32.gmra.mxu0 %v1651
        %v1703 = vpop.f32.mrf.mxu0
        %v1704 = vadd.f32 0.0, %v1703
        %1705 = vmatmul.f32.gmra.mxu0 %v1654
        %v1706 = vpop.f32.mrf.mxu0
        %v1707 = vadd.f32 0.0, %v1706
        %1708 = vmatmul.f32.gmra.mxu0 %v1657
        %v1709 = vpop.f32.mrf.mxu0
        %v1710 = vadd.f32 0.0, %v1709
        %1711 = vmatmul.f32.gmra.mxu0 %v1660
        %v1712 = vpop.f32.mrf.mxu0
        %v1713 = vadd.f32 0.0, %v1712
        %1714 = vmatmul.f32.gmra.mxu0 %v1663
        %v1715 = vpop.f32.mrf.mxu0
        %v1716 = vadd.f32 0.0, %v1715
        %1717 = vmatmul.f32.gmra.mxu0 %v1666
        %v1718 = vpop.f32.mrf.mxu0
        %v1719 = vadd.f32 0.0, %v1718
        %1720 = vmatmul.f32.gmra.mxu0 %v1669
        %v1721 = vpop.f32.mrf.mxu0
        %v1722 = vadd.f32 0.0, %v1721
        %1723 = vmatmul.f32.gmra.mxu0 %v1672
        %v1724 = vpop.f32.mrf.mxu0
        %v1725 = vadd.f32 0.0, %v1724
        %1726 = vmatmul.f32.gmra.mxu0 %v1675
        %v1727 = vpop.f32.mrf.mxu0
        %v1728 = vadd.f32 0.0, %v1727
        %1729 = vmatmul.f32.gmra.mxu0 %v1678
        %v1730 = vpop.f32.mrf.mxu0
        %v1731 = vadd.f32 0.0, %v1730
        %1732 = vdwg.mxu0
        %v1733 = vadd.f32 %v1609, %v1698
        %v1734 = vadd.f32 %v1612, %v1701
        %v1735 = vadd.f32 %v1615, %v1704
        %v1736 = vadd.f32 %v1618, %v1707
        %v1737 = vadd.f32 %v1621, %v1710
        %v1738 = vadd.f32 %v1624, %v1713
        %v1739 = vadd.f32 %v1627, %v1716
        %v1740 = vadd.f32 %v1630, %v1719
        %v1741 = vadd.f32 %v1633, %v1722
        %v1742 = vadd.f32 %v1636, %v1725
        %v1743 = vadd.f32 %v1639, %v1728
        %v1744 = vadd.f32 %v1642, %v1731
        %v1746 = vsel %vm1465, %v1316, 0
        %v1749 = vsel %vm1465, %v1318, 0
        %v1752 = vsel %vm1465, %v1321, 0
        %v1755 = vsel %vm1465, %v1323, 0
        %v1758 = vsel %vm1465, %v1326, 0
        %v1761 = vsel %vm1465, %v1328, 0
        %v1764 = vsel %vm1465, %v1331, 0
        %v1767 = vsel %vm1465, %v1333, 0
        %v1770 = vsel %vm1465, %v1336, 0
        %v1773 = vsel %vm1465, %v1338, 0
        %v1776 = vsel %vm1465, %v1341, 0
        %v1779 = vsel %vm1465, %v1343, 0
        %1781 = vmatpush.msra.mxu0 0.0
        %1782 = vmatpush.msra.mxu0 0.0
        %1783 = vmatpush.msra.mxu0 0.0
        %1784 = vmatpush.msra.mxu0 0.0
        %1785 = vmatpush.msra.mxu0 0.0
        %1786 = vmatpush.msra.mxu0 0.0
        %1787 = vmatpush.msra.mxu0 0.0
        %1788 = vmatpush.msra.mxu0 0.0
        %1789 = vmatpush.msra.mxu0 %v686
        %1790 = vmatpush.msra.mxu0 %v685
        %1791 = vmatpush.msra.mxu0 %v684
        %1792 = vmatpush.msra.mxu0 %v683
        %1793 = vmatpush.msra.mxu0 %v682
        %1794 = vmatpush.msra.mxu0 %v681
        %1795 = vmatpush.msra.mxu0 %v680
        %1796 = vmatpush.msra.mxu0 %v679
        %1797 = vmatmul.f32.gmra.mxu0 %v1746
        %v1798 = vpop.f32.mrf.mxu0
        %v1799 = vadd.f32 0.0, %v1798
        %1800 = vmatmul.f32.gmra.mxu0 %v1749
        %v1801 = vpop.f32.mrf.mxu0
        %v1802 = vadd.f32 0.0, %v1801
        %1803 = vmatmul.f32.gmra.mxu0 %v1752
        %v1804 = vpop.f32.mrf.mxu0
        %v1805 = vadd.f32 0.0, %v1804
        %1806 = vmatmul.f32.gmra.mxu0 %v1755
        %v1807 = vpop.f32.mrf.mxu0
        %v1808 = vadd.f32 0.0, %v1807
        %1809 = vmatmul.f32.gmra.mxu0 %v1758
        %v1810 = vpop.f32.mrf.mxu0
        %v1811 = vadd.f32 0.0, %v1810
        %1812 = vmatmul.f32.gmra.mxu0 %v1761
        %v1813 = vpop.f32.mrf.mxu0
        %v1814 = vadd.f32 0.0, %v1813
        %1815 = vmatmul.f32.gmra.mxu0 %v1764
        %v1816 = vpop.f32.mrf.mxu0
        %v1817 = vadd.f32 0.0, %v1816
        %1818 = vmatmul.f32.gmra.mxu0 %v1767
        %v1819 = vpop.f32.mrf.mxu0
        %v1820 = vadd.f32 0.0, %v1819
        %1821 = vmatmul.f32.gmra.mxu0 %v1770
        %v1822 = vpop.f32.mrf.mxu0
        %v1823 = vadd.f32 0.0, %v1822
        %1824 = vmatmul.f32.gmra.mxu0 %v1773
        %v1825 = vpop.f32.mrf.mxu0
        %v1826 = vadd.f32 0.0, %v1825
        %1827 = vmatmul.f32.gmra.mxu0 %v1776
        %v1828 = vpop.f32.mrf.mxu0
        %v1829 = vadd.f32 0.0, %v1828
        %1830 = vmatmul.f32.gmra.mxu0 %v1779
        %v1831 = vpop.f32.mrf.mxu0
        %v1832 = vadd.f32 0.0, %v1831
        %1833 = vdwg.mxu0
        %v1834 = vadd.f32 %v1733, %v1799
        %v1835 = vadd.f32 %v1734, %v1802
        %v1836 = vadd.f32 %v1735, %v1805
        %v1837 = vadd.f32 %v1736, %v1808
        %v1838 = vadd.f32 %v1737, %v1811
        %v1839 = vadd.f32 %v1738, %v1814
        %v1840 = vadd.f32 %v1739, %v1817
        %v1841 = vadd.f32 %v1740, %v1820
        %v1842 = vadd.f32 %v1741, %v1823
        %v1843 = vadd.f32 %v1742, %v1826
        %v1844 = vadd.f32 %v1743, %v1829
        %v1845 = vadd.f32 %v1744, %v1832
        %v1847 = vsel %vm1465, %v1346, 0
        %v1850 = vsel %vm1465, %v1348, 0
        %v1853 = vsel %vm1465, %v1351, 0
        %v1856 = vsel %vm1465, %v1353, 0
        %v1859 = vsel %vm1465, %v1356, 0
        %v1862 = vsel %vm1465, %v1358, 0
        %v1865 = vsel %vm1465, %v1361, 0
        %v1868 = vsel %vm1465, %v1363, 0
        %v1871 = vsel %vm1465, %v1366, 0
        %v1874 = vsel %vm1465, %v1368, 0
        %v1877 = vsel %vm1465, %v1371, 0
        %v1880 = vsel %vm1465, %v1373, 0
        %1882 = vmatpush.msra.mxu0 0.0
        %1883 = vmatpush.msra.mxu0 0.0
        %1884 = vmatpush.msra.mxu0 0.0
        %1885 = vmatpush.msra.mxu0 0.0
        %1886 = vmatpush.msra.mxu0 0.0
        %1887 = vmatpush.msra.mxu0 0.0
        %1888 = vmatpush.msra.mxu0 0.0
        %1889 = vmatpush.msra.mxu0 0.0
        %1890 = vmatpush.msra.mxu0 %v694
        %1891 = vmatpush.msra.mxu0 %v693
        %1892 = vmatpush.msra.mxu0 %v692
        %1893 = vmatpush.msra.mxu0 %v691
        %1894 = vmatpush.msra.mxu0 %v690
        %1895 = vmatpush.msra.mxu0 %v689
        %1896 = vmatpush.msra.mxu0 %v688
        %1897 = vmatpush.msra.mxu0 %v687
        %1898 = vmatmul.f32.gmra.mxu0 %v1847
        %v1899 = vpop.f32.mrf.mxu0
        %v1900 = vadd.f32 0.0, %v1899
        %1901 = vmatmul.f32.gmra.mxu0 %v1850
        %v1902 = vpop.f32.mrf.mxu0
        %v1903 = vadd.f32 0.0, %v1902
        %1904 = vmatmul.f32.gmra.mxu0 %v1853
        %v1905 = vpop.f32.mrf.mxu0
        %v1906 = vadd.f32 0.0, %v1905
        %1907 = vmatmul.f32.gmra.mxu0 %v1856
        %v1908 = vpop.f32.mrf.mxu0
        %v1909 = vadd.f32 0.0, %v1908
        %1910 = vmatmul.f32.gmra.mxu0 %v1859
        %v1911 = vpop.f32.mrf.mxu0
        %v1912 = vadd.f32 0.0, %v1911
        %1913 = vmatmul.f32.gmra.mxu0 %v1862
        %v1914 = vpop.f32.mrf.mxu0
        %v1915 = vadd.f32 0.0, %v1914
        %1916 = vmatmul.f32.gmra.mxu0 %v1865
        %v1917 = vpop.f32.mrf.mxu0
        %v1918 = vadd.f32 0.0, %v1917
        %1919 = vmatmul.f32.gmra.mxu0 %v1868
        %v1920 = vpop.f32.mrf.mxu0
        %v1921 = vadd.f32 0.0, %v1920
        %1922 = vmatmul.f32.gmra.mxu0 %v1871
        %v1923 = vpop.f32.mrf.mxu0
        %v1924 = vadd.f32 0.0, %v1923
        %1925 = vmatmul.f32.gmra.mxu0 %v1874
        %v1926 = vpop.f32.mrf.mxu0
        %v1927 = vadd.f32 0.0, %v1926
        %1928 = vmatmul.f32.gmra.mxu0 %v1877
        %v1929 = vpop.f32.mrf.mxu0
        %v1930 = vadd.f32 0.0, %v1929
        %1931 = vmatmul.f32.gmra.mxu0 %v1880
        %v1932 = vpop.f32.mrf.mxu0
        %v1933 = vadd.f32 0.0, %v1932
        %1934 = vdwg.mxu0
        %v1935 = vadd.f32 %v1834, %v1900
        %v1936 = vadd.f32 %v1835, %v1903
        %v1937 = vadd.f32 %v1836, %v1906
        %v1938 = vadd.f32 %v1837, %v1909
        %v1939 = vadd.f32 %v1838, %v1912
        %v1940 = vadd.f32 %v1839, %v1915
        %v1941 = vadd.f32 %v1840, %v1918
        %v1942 = vadd.f32 %v1841, %v1921
        %v1943 = vadd.f32 %v1842, %v1924
        %v1944 = vadd.f32 %v1843, %v1927
        %v1945 = vadd.f32 %v1844, %v1930
        %v1946 = vadd.f32 %v1845, %v1933
        %v1948 = vsel %vm1465, %v1376, 0
        %v1951 = vsel %vm1465, %v1378, 0
        %v1954 = vsel %vm1465, %v1381, 0
        %v1957 = vsel %vm1465, %v1383, 0
        %v1960 = vsel %vm1465, %v1386, 0
        %v1963 = vsel %vm1465, %v1388, 0
        %v1966 = vsel %vm1465, %v1391, 0
        %v1969 = vsel %vm1465, %v1393, 0
        %v1972 = vsel %vm1465, %v1396, 0
        %v1975 = vsel %vm1465, %v1398, 0
        %v1978 = vsel %vm1465, %v1401, 0
        %v1981 = vsel %vm1465, %v1403, 0
        %1983 = vmatpush.msra.mxu0 0.0
        %1984 = vmatpush.msra.mxu0 0.0
        %1985 = vmatpush.msra.mxu0 0.0
        %1986 = vmatpush.msra.mxu0 0.0
        %1987 = vmatpush.msra.mxu0 0.0
        %1988 = vmatpush.msra.mxu0 0.0
        %1989 = vmatpush.msra.mxu0 0.0
        %1990 = vmatpush.msra.mxu0 0.0
        %1991 = vmatpush.msra.mxu0 %v702
        %1992 = vmatpush.msra.mxu0 %v701
        %1993 = vmatpush.msra.mxu0 %v700
        %1994 = vmatpush.msra.mxu0 %v699
        %1995 = vmatpush.msra.mxu0 %v698
        %1996 = vmatpush.msra.mxu0 %v697
        %1997 = vmatpush.msra.mxu0 %v696
        %1998 = vmatpush.msra.mxu0 %v695
        %1999 = vmatmul.f32.gmra.mxu0 %v1948
        %v2000 = vpop.f32.mrf.mxu0
        %v2001 = vadd.f32 0.0, %v2000
        %2002 = vmatmul.f32.gmra.mxu0 %v1951
        %v2003 = vpop.f32.mrf.mxu0
        %v2004 = vadd.f32 0.0, %v2003
        %2005 = vmatmul.f32.gmra.mxu0 %v1954
        %v2006 = vpop.f32.mrf.mxu0
        %v2007 = vadd.f32 0.0, %v2006
        %2008 = vmatmul.f32.gmra.mxu0 %v1957
        %v2009 = vpop.f32.mrf.mxu0
        %v2010 = vadd.f32 0.0, %v2009
        %2011 = vmatmul.f32.gmra.mxu0 %v1960
        %v2012 = vpop.f32.mrf.mxu0
        %v2013 = vadd.f32 0.0, %v2012
        %2014 = vmatmul.f32.gmra.mxu0 %v1963
        %v2015 = vpop.f32.mrf.mxu0
        %v2016 = vadd.f32 0.0, %v2015
        %2017 = vmatmul.f32.gmra.mxu0 %v1966
        %v2018 = vpop.f32.mrf.mxu0
        %v2019 = vadd.f32 0.0, %v2018
        %2020 = vmatmul.f32.gmra.mxu0 %v1969
        %v2021 = vpop.f32.mrf.mxu0
        %v2022 = vadd.f32 0.0, %v2021
        %2023 = vmatmul.f32.gmra.mxu0 %v1972
        %v2024 = vpop.f32.mrf.mxu0
        %v2025 = vadd.f32 0.0, %v2024
        %2026 = vmatmul.f32.gmra.mxu0 %v1975
        %v2027 = vpop.f32.mrf.mxu0
        %v2028 = vadd.f32 0.0, %v2027
        %2029 = vmatmul.f32.gmra.mxu0 %v1978
        %v2030 = vpop.f32.mrf.mxu0
        %v2031 = vadd.f32 0.0, %v2030
        %2032 = vmatmul.f32.gmra.mxu0 %v1981
        %v2033 = vpop.f32.mrf.mxu0
        %v2034 = vadd.f32 0.0, %v2033
        %2035 = vdwg.mxu0
        %v2036 = vadd.f32 %v1935, %v2001
        %v2037 = vadd.f32 %v1936, %v2004
        %v2038 = vadd.f32 %v1937, %v2007
        %v2039 = vadd.f32 %v1938, %v2010
        %v2040 = vadd.f32 %v1939, %v2013
        %v2041 = vadd.f32 %v1940, %v2016
        %v2042 = vadd.f32 %v1941, %v2019
        %v2043 = vadd.f32 %v1942, %v2022
        %v2044 = vadd.f32 %v1943, %v2025
        %v2045 = vadd.f32 %v1944, %v2028
        %v2046 = vadd.f32 %v1945, %v2031
        %v2047 = vadd.f32 %v1946, %v2034
        %v2049 = vsel %vm1465, %v1406, 0
        %v2052 = vsel %vm1465, %v1408, 0
        %v2055 = vsel %vm1465, %v1411, 0
        %v2058 = vsel %vm1465, %v1413, 0
        %v2061 = vsel %vm1465, %v1416, 0
        %v2064 = vsel %vm1465, %v1418, 0
        %v2067 = vsel %vm1465, %v1421, 0
        %v2070 = vsel %vm1465, %v1423, 0
        %v2073 = vsel %vm1465, %v1426, 0
        %v2076 = vsel %vm1465, %v1428, 0
        %v2079 = vsel %vm1465, %v1431, 0
        %v2082 = vsel %vm1465, %v1433, 0
        %2084 = vmatpush.msra.mxu0 0.0
        %2085 = vmatpush.msra.mxu0 0.0
        %2086 = vmatpush.msra.mxu0 0.0
        %2087 = vmatpush.msra.mxu0 0.0
        %2088 = vmatpush.msra.mxu0 0.0
        %2089 = vmatpush.msra.mxu0 0.0
        %2090 = vmatpush.msra.mxu0 0.0
        %2091 = vmatpush.msra.mxu0 0.0
        %2092 = vmatpush.msra.mxu0 %v710
        %2093 = vmatpush.msra.mxu0 %v709
        %2094 = vmatpush.msra.mxu0 %v708
        %2095 = vmatpush.msra.mxu0 %v707
        %2096 = vmatpush.msra.mxu0 %v706
        %2097 = vmatpush.msra.mxu0 %v705
        %2098 = vmatpush.msra.mxu0 %v704
        %2099 = vmatpush.msra.mxu0 %v703
        %2100 = vmatmul.f32.gmra.mxu0 %v2049
        %v2101 = vpop.f32.mrf.mxu0
        %v2102 = vadd.f32 0.0, %v2101
        %2103 = vmatmul.f32.gmra.mxu0 %v2052
        %v2104 = vpop.f32.mrf.mxu0
        %v2105 = vadd.f32 0.0, %v2104
        %2106 = vmatmul.f32.gmra.mxu0 %v2055
        %v2107 = vpop.f32.mrf.mxu0
        %v2108 = vadd.f32 0.0, %v2107
        %2109 = vmatmul.f32.gmra.mxu0 %v2058
        %v2110 = vpop.f32.mrf.mxu0
        %v2111 = vadd.f32 0.0, %v2110
        %2112 = vmatmul.f32.gmra.mxu0 %v2061
        %v2113 = vpop.f32.mrf.mxu0
        %v2114 = vadd.f32 0.0, %v2113
        %2115 = vmatmul.f32.gmra.mxu0 %v2064
        %v2116 = vpop.f32.mrf.mxu0
        %v2117 = vadd.f32 0.0, %v2116
        %2118 = vmatmul.f32.gmra.mxu0 %v2067
        %v2119 = vpop.f32.mrf.mxu0
        %v2120 = vadd.f32 0.0, %v2119
        %2121 = vmatmul.f32.gmra.mxu0 %v2070
        %v2122 = vpop.f32.mrf.mxu0
        %v2123 = vadd.f32 0.0, %v2122
        %2124 = vmatmul.f32.gmra.mxu0 %v2073
        %v2125 = vpop.f32.mrf.mxu0
        %v2126 = vadd.f32 0.0, %v2125
        %2127 = vmatmul.f32.gmra.mxu0 %v2076
        %v2128 = vpop.f32.mrf.mxu0
        %v2129 = vadd.f32 0.0, %v2128
        %2130 = vmatmul.f32.gmra.mxu0 %v2079
        %v2131 = vpop.f32.mrf.mxu0
        %v2132 = vadd.f32 0.0, %v2131
        %2133 = vmatmul.f32.gmra.mxu0 %v2082
        %v2134 = vpop.f32.mrf.mxu0
        %v2135 = vadd.f32 0.0, %v2134
        %2136 = vdwg.mxu0
        %v2137 = vadd.f32 %v2036, %v2102
        %v2138 = vadd.f32 %v2037, %v2105
        %v2139 = vadd.f32 %v2038, %v2108
        %v2140 = vadd.f32 %v2039, %v2111
        %v2141 = vadd.f32 %v2040, %v2114
        %v2142 = vadd.f32 %v2041, %v2117
        %v2143 = vadd.f32 %v2042, %v2120
        %v2144 = vadd.f32 %v2043, %v2123
        %v2145 = vadd.f32 %v2044, %v2126
        %v2146 = vadd.f32 %v2045, %v2129
        %v2147 = vadd.f32 %v2046, %v2132
        %v2148 = vadd.f32 %v2047, %v2135
        %v2150 = vsel %vm1465, %v1436, 0
        %v2153 = vsel %vm1465, %v1438, 0
        %v2156 = vsel %vm1465, %v1441, 0
        %v2159 = vsel %vm1465, %v1443, 0
        %v2162 = vsel %vm1465, %v1446, 0
        %v2165 = vsel %vm1465, %v1448, 0
        %v2168 = vsel %vm1465, %v1451, 0
        %v2171 = vsel %vm1465, %v1453, 0
        %v2174 = vsel %vm1465, %v1456, 0
        %v2177 = vsel %vm1465, %v1458, 0
        %v2180 = vsel %vm1465, %v1461, 0
        %v2183 = vsel %vm1465, %v1463, 0
        %2185 = vmatpush.msra.mxu0 0.0
        %2186 = vmatpush.msra.mxu0 0.0
        %2187 = vmatpush.msra.mxu0 0.0
        %2188 = vmatpush.msra.mxu0 0.0
        %2189 = vmatpush.msra.mxu0 0.0
        %2190 = vmatpush.msra.mxu0 0.0
        %2191 = vmatpush.msra.mxu0 0.0
        %2192 = vmatpush.msra.mxu0 0.0
        %2193 = vmatpush.msra.mxu0 %v718
        %2194 = vmatpush.msra.mxu0 %v717
        %2195 = vmatpush.msra.mxu0 %v716
        %2196 = vmatpush.msra.mxu0 %v715
        %2197 = vmatpush.msra.mxu0 %v714
        %2198 = vmatpush.msra.mxu0 %v713
        %2199 = vmatpush.msra.mxu0 %v712
        %2200 = vmatpush.msra.mxu0 %v711
        %2201 = vmatmul.f32.gmra.mxu0 %v2150
        %v2202 = vpop.f32.mrf.mxu0
        %v2203 = vadd.f32 0.0, %v2202
        %2204 = vmatmul.f32.gmra.mxu0 %v2153
        %v2205 = vpop.f32.mrf.mxu0
        %v2206 = vadd.f32 0.0, %v2205
        %2207 = vmatmul.f32.gmra.mxu0 %v2156
        %v2208 = vpop.f32.mrf.mxu0
        %v2209 = vadd.f32 0.0, %v2208
        %2210 = vmatmul.f32.gmra.mxu0 %v2159
        %v2211 = vpop.f32.mrf.mxu0
        %v2212 = vadd.f32 0.0, %v2211
        %2213 = vmatmul.f32.gmra.mxu0 %v2162
        %v2214 = vpop.f32.mrf.mxu0
        %v2215 = vadd.f32 0.0, %v2214
        %2216 = vmatmul.f32.gmra.mxu0 %v2165
        %v2217 = vpop.f32.mrf.mxu0
        %v2218 = vadd.f32 0.0, %v2217
        %2219 = vmatmul.f32.gmra.mxu0 %v2168
        %v2220 = vpop.f32.mrf.mxu0
        %v2221 = vadd.f32 0.0, %v2220
        %2222 = vmatmul.f32.gmra.mxu0 %v2171
        %v2223 = vpop.f32.mrf.mxu0
        %v2224 = vadd.f32 0.0, %v2223
        %2225 = vmatmul.f32.gmra.mxu0 %v2174
        %v2226 = vpop.f32.mrf.mxu0
        %v2227 = vadd.f32 0.0, %v2226
        %2228 = vmatmul.f32.gmra.mxu0 %v2177
        %v2229 = vpop.f32.mrf.mxu0
        %v2230 = vadd.f32 0.0, %v2229
        %2231 = vmatmul.f32.gmra.mxu0 %v2180
        %v2232 = vpop.f32.mrf.mxu0
        %v2233 = vadd.f32 0.0, %v2232
        %2234 = vmatmul.f32.gmra.mxu0 %v2183
        %v2235 = vpop.f32.mrf.mxu0
        %v2236 = vadd.f32 0.0, %v2235
        %2237 = vdwg.mxu0
        %v2238 = vadd.f32 %v2137, %v2203
        %v2239 = vadd.f32 %v2138, %v2206
        %v2240 = vadd.f32 %v2139, %v2209
        %v2241 = vadd.f32 %v2140, %v2212
        %v2242 = vadd.f32 %v2141, %v2215
        %v2243 = vadd.f32 %v2142, %v2218
        %v2244 = vadd.f32 %v2143, %v2221
        %v2245 = vadd.f32 %v2144, %v2224
        %v2246 = vadd.f32 %v2145, %v2227
        %v2247 = vadd.f32 %v2146, %v2230
        %v2248 = vadd.f32 %v2147, %v2233
        %v2249 = vadd.f32 %v2148, %v2236
        %v2250 = vperm.slane %v727, 4
        %v2251 = vadd.f32 %v2238, %v2250
        %v2252 = vadd.f32 %v2239, %v2250
        %v2253 = vadd.f32 %v2240, %v2250
        %v2254 = vadd.f32 %v2241, %v2250
        %v2255 = vadd.f32 %v2242, %v2250
        %v2256 = vadd.f32 %v2243, %v2250
        %v2257 = vadd.f32 %v2244, %v2250
        %v2258 = vadd.f32 %v2245, %v2250
        %v2259 = vadd.f32 %v2246, %v2250
        %v2260 = vadd.f32 %v2247, %v2250
        %v2261 = vadd.f32 %v2248, %v2250
        %v2262 = vadd.f32 %v2249, %v2250
        %v2264 = vsel %vm1465, %v611, 0
        %v2267 = vsel %vm1465, %v612, 0
        %v2270 = vsel %vm1465, %v613, 0
        %v2273 = vsel %vm1465, %v614, 0
        %v2276 = vsel %vm1465, %v615, 0
        %v2279 = vsel %vm1465, %v616, 0
        %v2282 = vsel %vm1465, %v617, 0
        %v2285 = vsel %vm1465, %v618, 0
        %v2288 = vsel %vm1465, %v619, 0
        %v2291 = vsel %vm1465, %v620, 0
        %v2294 = vsel %vm1465, %v621, 0
        %v2297 = vsel %vm1465, %v622, 0
        %2299 = vmatpush.msra.mxu0 0.0
        %2300 = vmatpush.msra.mxu0 0.0
        %2301 = vmatpush.msra.mxu0 0.0
        %2302 = vmatpush.msra.mxu0 0.0
        %2303 = vmatpush.msra.mxu0 0.0
        %2304 = vmatpush.msra.mxu0 0.0
        %2305 = vmatpush.msra.mxu0 0.0
        %2306 = vmatpush.msra.mxu0 0.0
        %2307 = vmatpush.msra.mxu0 %v726
        %2308 = vmatpush.msra.mxu0 %v725
        %2309 = vmatpush.msra.mxu0 %v724
        %2310 = vmatpush.msra.mxu0 %v723
        %2311 = vmatpush.msra.mxu0 %v722
        %2312 = vmatpush.msra.mxu0 %v721
        %2313 = vmatpush.msra.mxu0 %v720
        %2314 = vmatpush.msra.mxu0 %v719
        %2315 = vmatmul.f32.gmra.mxu0 %v2264
        %v2316 = vpop.f32.mrf.mxu0
        %v2317 = vadd.f32 0.0, %v2316
        %2318 = vmatmul.f32.gmra.mxu0 %v2267
        %v2319 = vpop.f32.mrf.mxu0
        %v2320 = vadd.f32 0.0, %v2319
        %2321 = vmatmul.f32.gmra.mxu0 %v2270
        %v2322 = vpop.f32.mrf.mxu0
        %v2323 = vadd.f32 0.0, %v2322
        %2324 = vmatmul.f32.gmra.mxu0 %v2273
        %v2325 = vpop.f32.mrf.mxu0
        %v2326 = vadd.f32 0.0, %v2325
        %2327 = vmatmul.f32.gmra.mxu0 %v2276
        %v2328 = vpop.f32.mrf.mxu0
        %v2329 = vadd.f32 0.0, %v2328
        %2330 = vmatmul.f32.gmra.mxu0 %v2279
        %v2331 = vpop.f32.mrf.mxu0
        %v2332 = vadd.f32 0.0, %v2331
        %2333 = vmatmul.f32.gmra.mxu0 %v2282
        %v2334 = vpop.f32.mrf.mxu0
        %v2335 = vadd.f32 0.0, %v2334
        %2336 = vmatmul.f32.gmra.mxu0 %v2285
        %v2337 = vpop.f32.mrf.mxu0
        %v2338 = vadd.f32 0.0, %v2337
        %2339 = vmatmul.f32.gmra.mxu0 %v2288
        %v2340 = vpop.f32.mrf.mxu0
        %v2341 = vadd.f32 0.0, %v2340
        %2342 = vmatmul.f32.gmra.mxu0 %v2291
        %v2343 = vpop.f32.mrf.mxu0
        %v2344 = vadd.f32 0.0, %v2343
        %2345 = vmatmul.f32.gmra.mxu0 %v2294
        %v2346 = vpop.f32.mrf.mxu0
        %v2347 = vadd.f32 0.0, %v2346
        %2348 = vmatmul.f32.gmra.mxu0 %v2297
        %v2349 = vpop.f32.mrf.mxu0
        %v2350 = vadd.f32 0.0, %v2349
        %2351 = vdwg.mxu0
        %v2352 = vadd.f32 %v2251, %v2317
        %v2353 = vadd.f32 %v2252, %v2320
        %v2354 = vadd.f32 %v2253, %v2323
        %v2355 = vadd.f32 %v2254, %v2326
        %v2356 = vadd.f32 %v2255, %v2329
        %v2357 = vadd.f32 %v2256, %v2332
        %v2358 = vadd.f32 %v2257, %v2335
        %v2359 = vadd.f32 %v2258, %v2338
        %v2360 = vadd.f32 %v2259, %v2341
        %v2361 = vadd.f32 %v2260, %v2344
        %v2362 = vadd.f32 %v2261, %v2347
        %v2363 = vadd.f32 %v2262, %v2350
        %v2364 = vperm.slane %v727, 5
        %v2365 = vadd.f32 %v2352, %v2364
        %v2366 = vadd.f32 %v2353, %v2364
        %v2367 = vadd.f32 %v2354, %v2364
        %v2368 = vadd.f32 %v2355, %v2364
        %v2369 = vadd.f32 %v2356, %v2364
        %v2370 = vadd.f32 %v2357, %v2364
        %v2371 = vadd.f32 %v2358, %v2364
        %v2372 = vadd.f32 %v2359, %v2364
        %v2373 = vadd.f32 %v2360, %v2364
        %v2374 = vadd.f32 %v2361, %v2364
        %v2375 = vadd.f32 %v2362, %v2364
        %v2376 = vadd.f32 %v2363, %v2364
        %v2377 = vadd.f32 %v2365, %v2366
        %v2378 = vadd.f32 %v2377, %v2367
        %v2379 = vadd.f32 %v2378, %v2368
        %v2380 = vadd.f32 %v2379, %v2369
        %v2381 = vadd.f32 %v2380, %v2370
        %v2382 = vadd.f32 %v2381, %v2371
        %v2383 = vadd.f32 %v2382, %v2372
        %v2384 = vadd.f32 %v2383, %v2373
        %v2385 = vadd.f32 %v2384, %v2374
        %v2386 = vadd.f32 %v2385, %v2375
        %v2387 = vadd.f32 %v2386, %v2376
        %v2388 = vrot.slane %v2387, 4
        %v2389 = vadd.f32 %v2387, %v2388
        %v2390 = vrot.slane %v2389, 2
        %v2391 = vadd.f32 %v2389, %v2390
        %v2392 = vrot.slane %v2391, 1
        %v2393 = vadd.f32 %v2391, %v2392
        %v2394 = vmul.f32 %v2393, 0.010416667
        %v2395 = vmul.f32 %v2365, %v2365
        %v2396 = vmul.f32 %v2366, %v2366
        %v2397 = vmul.f32 %v2367, %v2367
        %v2398 = vmul.f32 %v2368, %v2368
        %v2399 = vmul.f32 %v2369, %v2369
        %v2400 = vmul.f32 %v2370, %v2370
        %v2401 = vmul.f32 %v2371, %v2371
        %v2402 = vmul.f32 %v2372, %v2372
        %v2403 = vmul.f32 %v2373, %v2373
        %v2404 = vmul.f32 %v2374, %v2374
        %v2405 = vmul.f32 %v2375, %v2375
        %v2406 = vmul.f32 %v2376, %v2376
        %v2407 = vadd.f32 %v2395, %v2396
        %v2408 = vadd.f32 %v2407, %v2397
        %v2409 = vadd.f32 %v2408, %v2398
        %v2410 = vadd.f32 %v2409, %v2399
        %v2411 = vadd.f32 %v2410, %v2400
        %v2412 = vadd.f32 %v2411, %v2401
        %v2413 = vadd.f32 %v2412, %v2402
        %v2414 = vadd.f32 %v2413, %v2403
        %v2415 = vadd.f32 %v2414, %v2404
        %v2416 = vadd.f32 %v2415, %v2405
        %v2417 = vadd.f32 %v2416, %v2406
        %v2418 = vrot.slane %v2417, 4
        %v2419 = vadd.f32 %v2417, %v2418
        %v2420 = vrot.slane %v2419, 2
        %v2421 = vadd.f32 %v2419, %v2420
        %v2422 = vrot.slane %v2421, 1
        %v2423 = vadd.f32 %v2421, %v2422
        %v2424 = vmul.f32 %v2423, 0.010416667
        %v2425 = vmul.f32 %v2394, %v2394
        %v2426 = vsub.f32 %v2424, %v2425
        %v2427 = vmax.f32 %v2426, 0.0
        %v2428 = vsub.f32 %v2365, %v2394
        %v2429 = vsub.f32 %v2366, %v2394
        %v2430 = vsub.f32 %v2367, %v2394
        %v2431 = vsub.f32 %v2368, %v2394
        %v2432 = vsub.f32 %v2369, %v2394
        %v2433 = vsub.f32 %v2370, %v2394
        %v2434 = vsub.f32 %v2371, %v2394
        %v2435 = vsub.f32 %v2372, %v2394
        %v2436 = vsub.f32 %v2373, %v2394
        %v2437 = vsub.f32 %v2374, %v2394
        %v2438 = vsub.f32 %v2375, %v2394
        %v2439 = vsub.f32 %v2376, %v2394
        %v2440 = vperm.slane %v727, 6
        %v2441 = vmul.f32 %v2440, %v2428
        %v2442 = vmul.f32 %v2440, %v2429
        %v2443 = vmul.f32 %v2440, %v2430
        %v2444 = vmul.f32 %v2440, %v2431
        %v2445 = vmul.f32 %v2440, %v2432
        %v2446 = vmul.f32 %v2440, %v2433
        %v2447 = vmul.f32 %v2440, %v2434
        %v2448 = vmul.f32 %v2440, %v2435
        %v2449 = vmul.f32 %v2440, %v2436
        %v2450 = vmul.f32 %v2440, %v2437
        %v2451 = vmul.f32 %v2440, %v2438
        %v2452 = vmul.f32 %v2440, %v2439
        %v2453 = vadd.f32 %v2427, 1e-05
        %v2454 = vrsqrt.pop %v2453
        %v2455 = vmul.f32 %v2454, %v2453
        %v2456 = vmul.f32 %v2455, %v2454
        %v2457 = vmul.f32 0.5, %v2456
        %v2458 = vsub.f32 1.5, %v2457
        %v2459 = vmul.f32 %v2454, %v2458
        %vm2460 = vweird.f32 %v2453
        %vm2461 = vweird.f32 %v2454
        %vm2462 = vmor %vm2460, %vm2461
        %v2463 = vsel %vm2462, %v2454, %v2459
        %v2464 = vmul.f32 %v2441, %v2463
        %v2465 = vmul.f32 %v2442, %v2463
        %v2466 = vmul.f32 %v2443, %v2463
        %v2467 = vmul.f32 %v2444, %v2463
        %v2468 = vmul.f32 %v2445, %v2463
        %v2469 = vmul.f32 %v2446, %v2463
        %v2470 = vmul.f32 %v2447, %v2463
        %v2471 = vmul.f32 %v2448, %v2463
        %v2472 = vmul.f32 %v2449, %v2463
        %v2473 = vmul.f32 %v2450, %v2463
        %v2474 = vmul.f32 %v2451, %v2463
        %v2475 = vmul.f32 %v2452, %v2463
        %v2476 = vperm.slane %v727, 7
        %v2477 = vadd.f32 %v2464, %v2476
        %v2478 = vadd.f32 %v2465, %v2476
        %v2479 = vadd.f32 %v2466, %v2476
        %v2480 = vadd.f32 %v2467, %v2476
        %v2481 = vadd.f32 %v2468, %v2476
        %v2482 = vadd.f32 %v2469, %v2476
        %v2483 = vadd.f32 %v2470, %v2476
        %v2484 = vadd.f32 %v2471, %v2476
        %v2485 = vadd.f32 %v2472, %v2476
        %v2486 = vadd.f32 %v2473, %v2476
        %v2487 = vadd.f32 %v2474, %v2476
        %v2488 = vadd.f32 %v2475, %v2476
        %v2489 = vmax.f32 %v2477, 0.0
        %v2490 = vmax.f32 %v2478, 0.0
        %v2491 = vmax.f32 %v2479, 0.0
        %v2492 = vmax.f32 %v2480, 0.0
        %v2493 = vmax.f32 %v2481, 0.0
        %v2494 = vmax.f32 %v2482, 0.0
        %v2495 = vmax.f32 %v2483, 0.0
        %v2496 = vmax.f32 %v2484, 0.0
        %v2497 = vmax.f32 %v2485, 0.0
        %v2498 = vmax.f32 %v2486, 0.0
        %v2499 = vmax.f32 %v2487, 0.0
        %v2500 = vmax.f32 %v2488, 0.0
        %v2501 = vld [vmem:[%s3] sm:$0xf]
        %v2502 = vld [vmem:[%s3 + $0x4] sm:$0xf]
        %v2503 = vld [vmem:[%s3 + $0x8] sm:$0xf]
        %v2504 = vld [vmem:[%s3 + $0xc] sm:$0xf]
        %v2505 = vld [vmem:[%s3 + $0x10] sm:$0xf]
        %v2506 = vld [vmem:[%s3 + $0x14] sm:$0xf]
        %v2507 = vld [vmem:[%s3 + $0x18] sm:$0xf]
        %v2508 = vld [vmem:[%s3 + $0x1c] sm:$0xf]
        %v2509 = vld [vmem:[%s3 + $0x20] sm:$0xf]
        %v2510 = vld [vmem:[%s3 + $0x24] sm:$0xf]
        %v2511 = vld [vmem:[%s3 + $0x28] sm:$0xf]
        %v2512 = vld [vmem:[%s3 + $0x2c] sm:$0xf]
        %v2513 = vld [vmem:[%s3 + $0x30] sm:$0xf]
        %v2514 = vld [vmem:[%s3 + $0x34] sm:$0xf]
        %v2515 = vld [vmem:[%s3 + $0x38] sm:$0xf]
        %v2516 = vld [vmem:[%s3 + $0x3c] sm:$0xf]
        %v2517 = vld [vmem:[%s3 + $0x40] sm:$0xf]
        %v2518 = vld [vmem:[%s3 + $0x44] sm:$0xf]
        %v2519 = vld [vmem:[%s3 + $0x48] sm:$0xf]
        %v2520 = vld [vmem:[%s3 + $0x4c] sm:$0xf]
        %v2521 = vld [vmem:[%s3 + $0x50] sm:$0xf]
        %v2522 = vld [vmem:[%s3 + $0x54] sm:$0xf]
        %v2523 = vld [vmem:[%s3 + $0x58] sm:$0xf]
        %v2524 = vld [vmem:[%s3 + $0x5c] sm:$0xf]
        %v2525 = vld [vmem:[%s3 + $0x60] sm:$0xf]
        %v2526 = vld [vmem:[%s3 + $0x64] sm:$0xf]
        %v2527 = vld [vmem:[%s3 + $0x68] sm:$0xf]
        %v2528 = vld [vmem:[%s3 + $0x6c] sm:$0xf]
        %v2529 = vpack.c.bf16 %v608, %v607
        %v2530 = vpack.c.bf16 %v610, %v609
        %v2559 = vunpack.c.l.b16 %v2501
        %v2560 = vunpack.c.l.b16 %v2502
        %v2561 = vunpack.c.l.b16 %v2503
        %v2562 = vunpack.c.l.b16 %v2504
        %v2563 = vunpack.c.l.b16 %v2505
        %v2564 = vunpack.c.l.b16 %v2506
        %v2565 = vunpack.c.l.b16 %v2507
        %v2566 = vunpack.c.l.b16 %v2508
        %v2567 = vunpack.c.l.b16 %v2509
        %v2568 = vunpack.c.l.b16 %v2510
        %v2569 = vunpack.c.l.b16 %v2511
        %v2570 = vunpack.c.l.b16 %v2512
        %v2571 = vunpack.c.l.b16 %v2513
        %v2572 = vunpack.c.l.b16 %v2514
        %v2573 = vunpack.c.l.b16 %v2515
        %v2574 = vunpack.c.l.b16 %v2516
        %v2575 = vunpack.c.l.b16 %v2517
        %v2576 = vunpack.c.l.b16 %v2518
        %v2577 = vunpack.c.l.b16 %v2519
        %v2578 = vunpack.c.l.b16 %v2520
        %v2579 = vunpack.c.l.b16 %v2521
        %v2580 = vunpack.c.l.b16 %v2522
        %v2581 = vunpack.c.l.b16 %v2523
        %v2582 = vunpack.c.l.b16 %v2524
        %v2583 = vunpack.c.l.b16 %v2525
        %v2584 = vunpack.c.l.b16 %v2526
        %v2585 = vunpack.c.l.b16 %v2527
        %v2586 = vunpack.c.l.b16 %v2528
        %v2587 = vpack.c.b16 %v2560, %v2559
        %v2588 = vpack.c.b16 %v2562, %v2561
        %v2589 = vpack.c.b16 %v2564, %v2563
        %v2590 = vpack.c.b16 %v2566, %v2565
        %v2591 = vpack.c.b16 %v2568, %v2567
        %v2592 = vpack.c.b16 %v2570, %v2569
        %v2593 = vpack.c.b16 %v2572, %v2571
        %v2594 = vpack.c.b16 %v2574, %v2573
        %v2595 = vpack.c.b16 %v2576, %v2575
        %v2596 = vpack.c.b16 %v2578, %v2577
        %v2597 = vpack.c.b16 %v2580, %v2579
        %v2598 = vpack.c.b16 %v2582, %v2581
        %v2599 = vpack.c.b16 %v2584, %v2583
        %v2600 = vpack.c.b16 %v2586, %v2585
        %vm2601 = vcmask 261120
        %v2603 = vsel %vm2601, %v2587, 0
        %v2606 = vsel %vm2601, %v2588, 0
        %v2609 = vsel %vm2601, %v2589, 0
        %v2612 = vsel %vm2601, %v2590, 0
        %v2615 = vsel %vm2601, %v2591, 0
        %v2618 = vsel %vm2601, %v2592, 0
        %v2621 = vsel %vm2601, %v2593, 0
        %v2624 = vsel %vm2601, %v2594, 0
        %v2627 = vsel %vm2601, %v2595, 0
        %v2630 = vsel %vm2601, %v2596, 0
        %v2633 = vsel %vm2601, %v2597, 0
        %v2636 = vsel %vm2601, %v2598, 0
        %v2639 = vsel %vm2601, %v2599, 0
        %v2642 = vsel %vm2601, %v2600, 0
        %2644 = vmatpush.bf16.msra.mxu0 0
        %2645 = vmatpush.bf16.msra.mxu0 0
        %2646 = vmatpush.bf16.msra.mxu0 0
        %2647 = vmatpush.bf16.msra.mxu0 0
        %2648 = vmatpush.bf16.msra.mxu0 0
        %2649 = vmatpush.bf16.msra.mxu0 0
        %2650 = vmatpush.bf16.msra.mxu0 %v2530
        %2651 = vmatpush.bf16.msra.mxu0 %v2529
        %2652 = vmatmul.bf16.gmra.mxu0 %v2603
        %v2653 = vpop.f32.mrf.mxu0
        %v2654 = vadd.f32 0.0, %v2653
        %v2655 = vpop.f32.mrf.mxu0
        %v2656 = vadd.f32 0.0, %v2655
        %2657 = vmatmul.bf16.gmra.mxu0 %v2606
        %v2658 = vpop.f32.mrf.mxu0
        %v2659 = vadd.f32 0.0, %v2658
        %v2660 = vpop.f32.mrf.mxu0
        %v2661 = vadd.f32 0.0, %v2660
        %2662 = vmatmul.bf16.gmra.mxu0 %v2609
        %v2663 = vpop.f32.mrf.mxu0
        %v2664 = vadd.f32 0.0, %v2663
        %v2665 = vpop.f32.mrf.mxu0
        %v2666 = vadd.f32 0.0, %v2665
        %2667 = vmatmul.bf16.gmra.mxu0 %v2612
        %v2668 = vpop.f32.mrf.mxu0
        %v2669 = vadd.f32 0.0, %v2668
        %v2670 = vpop.f32.mrf.mxu0
        %v2671 = vadd.f32 0.0, %v2670
        %2672 = vmatmul.bf16.gmra.mxu0 %v2615
        %v2673 = vpop.f32.mrf.mxu0
        %v2674 = vadd.f32 0.0, %v2673
        %v2675 = vpop.f32.mrf.mxu0
        %v2676 = vadd.f32 0.0, %v2675
        %2677 = vmatmul.bf16.gmra.mxu0 %v2618
        %v2678 = vpop.f32.mrf.mxu0
        %v2679 = vadd.f32 0.0, %v2678
        %v2680 = vpop.f32.mrf.mxu0
        %v2681 = vadd.f32 0.0, %v2680
        %2682 = vmatmul.bf16.gmra.mxu0 %v2621
        %v2683 = vpop.f32.mrf.mxu0
        %v2684 = vadd.f32 0.0, %v2683
        %v2685 = vpop.f32.mrf.mxu0
        %v2686 = vadd.f32 0.0, %v2685
        %2687 = vmatmul.bf16.gmra.mxu0 %v2624
        %v2688 = vpop.f32.mrf.mxu0
        %v2689 = vadd.f32 0.0, %v2688
        %v2690 = vpop.f32.mrf.mxu0
        %v2691 = vadd.f32 0.0, %v2690
        %2692 = vmatmul.bf16.gmra.mxu0 %v2627
        %v2693 = vpop.f32.mrf.mxu0
        %v2694 = vadd.f32 0.0, %v2693
        %v2695 = vpop.f32.mrf.mxu0
        %v2696 = vadd.f32 0.0, %v2695
        %2697 = vmatmul.bf16.gmra.mxu0 %v2630
        %v2698 = vpop.f32.mrf.mxu0
        %v2699 = vadd.f32 0.0, %v2698
        %v2700 = vpop.f32.mrf.mxu0
        %v2701 = vadd.f32 0.0, %v2700
        %2702 = vmatmul.bf16.gmra.mxu0 %v2633
        %v2703 = vpop.f32.mrf.mxu0
        %v2704 = vadd.f32 0.0, %v2703
        %v2705 = vpop.f32.mrf.mxu0
        %v2706 = vadd.f32 0.0, %v2705
        %2707 = vmatmul.bf16.gmra.mxu0 %v2636
        %v2708 = vpop.f32.mrf.mxu0
        %v2709 = vadd.f32 0.0, %v2708
        %v2710 = vpop.f32.mrf.mxu0
        %v2711 = vadd.f32 0.0, %v2710
        %2712 = vmatmul.bf16.gmra.mxu0 %v2639
        %v2713 = vpop.f32.mrf.mxu0
        %v2714 = vadd.f32 0.0, %v2713
        %v2715 = vpop.f32.mrf.mxu0
        %v2716 = vadd.f32 0.0, %v2715
        %2717 = vmatmul.bf16.gmra.mxu0 %v2642
        %v2718 = vpop.f32.mrf.mxu0
        %v2719 = vadd.f32 0.0, %v2718
        %v2720 = vpop.f32.mrf.mxu0
        %v2721 = vadd.f32 0.0, %v2720
        %2722 = vdwg.mxu0
        %v2723 = vld [vmem:[%s4] sm:$0xf]
        %v2724 = vld [vmem:[%s4 + $0x4] sm:$0xf]
        %v2725 = vld [vmem:[%s4 + $0x8] sm:$0xf]
        %v2726 = vld [vmem:[%s4 + $0xc] sm:$0xf]
        %v2727 = vld [vmem:[%s4 + $0x10] sm:$0xf]
        %v2728 = vld [vmem:[%s4 + $0x14] sm:$0xf]
        %v2729 = vld [vmem:[%s4 + $0x18] sm:$0xf]
        %v2730 = vld [vmem:[%s4 + $0x1c] sm:$0xf]
        %v2731 = vld [vmem:[%s4 + $0x20] sm:$0xf]
        %v2732 = vld [vmem:[%s4 + $0x24] sm:$0xf]
        %v2733 = vld [vmem:[%s4 + $0x28] sm:$0xf]
        %v2734 = vld [vmem:[%s4 + $0x2c] sm:$0xf]
        %v2735 = vld [vmem:[%s4 + $0x30] sm:$0xf]
        %v2736 = vld [vmem:[%s4 + $0x34] sm:$0xf]
        %v2737 = vld [vmem:[%s4 + $0x38] sm:$0xf]
        %v2738 = vld [vmem:[%s4 + $0x3c] sm:$0xf]
        %v2739 = vld [vmem:[%s4 + $0x40] sm:$0xf]
        %v2740 = vld [vmem:[%s4 + $0x44] sm:$0xf]
        %v2741 = vld [vmem:[%s4 + $0x48] sm:$0xf]
        %v2742 = vld [vmem:[%s4 + $0x4c] sm:$0xf]
        %v2743 = vld [vmem:[%s4 + $0x50] sm:$0xf]
        %v2744 = vld [vmem:[%s4 + $0x54] sm:$0xf]
        %v2745 = vld [vmem:[%s4 + $0x58] sm:$0xf]
        %v2746 = vld [vmem:[%s4 + $0x5c] sm:$0xf]
        %v2747 = vld [vmem:[%s4 + $0x60] sm:$0xf]
        %v2748 = vld [vmem:[%s4 + $0x64] sm:$0xf]
        %v2749 = vld [vmem:[%s4 + $0x68] sm:$0xf]
        %v2750 = vld [vmem:[%s4 + $0x6c] sm:$0xf]
        %v2751 = vpack.c.bf16 %v2490, %v2489
        %v2752 = vpack.c.bf16 %v2492, %v2491
        %v2753 = vpack.c.bf16 %v2494, %v2493
        %v2754 = vpack.c.bf16 %v2496, %v2495
        %v2755 = vpack.c.bf16 %v2498, %v2497
        %v2756 = vpack.c.bf16 %v2500, %v2499
        %v2785 = vunpack.c.l.b16 %v2723
        %v2786 = vunpack.c.l.b16 %v2724
        %v2787 = vunpack.c.l.b16 %v2725
        %v2788 = vunpack.c.l.b16 %v2726
        %v2789 = vunpack.c.l.b16 %v2727
        %v2790 = vunpack.c.l.b16 %v2728
        %v2791 = vunpack.c.l.b16 %v2729
        %v2792 = vunpack.c.l.b16 %v2730
        %v2793 = vunpack.c.l.b16 %v2731
        %v2794 = vunpack.c.l.b16 %v2732
        %v2795 = vunpack.c.l.b16 %v2733
        %v2796 = vunpack.c.l.b16 %v2734
        %v2797 = vunpack.c.l.b16 %v2735
        %v2798 = vunpack.c.l.b16 %v2736
        %v2799 = vunpack.c.l.b16 %v2737
        %v2800 = vunpack.c.l.b16 %v2738
        %v2801 = vunpack.c.l.b16 %v2739
        %v2802 = vunpack.c.l.b16 %v2740
        %v2803 = vunpack.c.l.b16 %v2741
        %v2804 = vunpack.c.l.b16 %v2742
        %v2805 = vunpack.c.l.b16 %v2743
        %v2806 = vunpack.c.l.b16 %v2744
        %v2807 = vunpack.c.l.b16 %v2745
        %v2808 = vunpack.c.l.b16 %v2746
        %v2809 = vunpack.c.l.b16 %v2747
        %v2810 = vunpack.c.l.b16 %v2748
        %v2811 = vunpack.c.l.b16 %v2749
        %v2812 = vunpack.c.l.b16 %v2750
        %v2813 = vpack.c.b16 %v2786, %v2785
        %v2814 = vpack.c.b16 %v2788, %v2787
        %v2815 = vpack.c.b16 %v2790, %v2789
        %v2816 = vpack.c.b16 %v2792, %v2791
        %v2817 = vpack.c.b16 %v2794, %v2793
        %v2818 = vpack.c.b16 %v2796, %v2795
        %v2819 = vpack.c.b16 %v2798, %v2797
        %v2820 = vpack.c.b16 %v2800, %v2799
        %v2821 = vpack.c.b16 %v2802, %v2801
        %v2822 = vpack.c.b16 %v2804, %v2803
        %v2823 = vpack.c.b16 %v2806, %v2805
        %v2824 = vpack.c.b16 %v2808, %v2807
        %v2825 = vpack.c.b16 %v2810, %v2809
        %v2826 = vpack.c.b16 %v2812, %v2811
        %v2828 = vsel %vm1071, %v2813, 0
        %v2831 = vsel %vm1071, %v2814, 0
        %v2834 = vsel %vm1071, %v2815, 0
        %v2837 = vsel %vm1071, %v2816, 0
        %v2840 = vsel %vm1071, %v2817, 0
        %v2843 = vsel %vm1071, %v2818, 0
        %v2846 = vsel %vm1071, %v2819, 0
        %v2849 = vsel %vm1071, %v2820, 0
        %v2852 = vsel %vm1071, %v2821, 0
        %v2855 = vsel %vm1071, %v2822, 0
        %v2858 = vsel %vm1071, %v2823, 0
        %v2861 = vsel %vm1071, %v2824, 0
        %v2864 = vsel %vm1071, %v2825, 0
        %v2867 = vsel %vm1071, %v2826, 0
        %2869 = vmatpush.bf16.msra.mxu0 0
        %2870 = vmatpush.bf16.msra.mxu0 0
        %2871 = vmatpush.bf16.msra.mxu0 %v2756
        %2872 = vmatpush.bf16.msra.mxu0 %v2755
        %2873 = vmatpush.bf16.msra.mxu0 %v2754
        %2874 = vmatpush.bf16.msra.mxu0 %v2753
        %2875 = vmatpush.bf16.msra.mxu0 %v2752
        %2876 = vmatpush.bf16.msra.mxu0 %v2751
        %2877 = vmatmul.bf16.gmra.mxu0 %v2828
        %v2878 = vpop.f32.mrf.mxu0
        %v2879 = vadd.f32 0.0, %v2878
        %v2880 = vpop.f32.mrf.mxu0
        %v2881 = vadd.f32 0.0, %v2880
        %2882 = vmatmul.bf16.gmra.mxu0 %v2831
        %v2883 = vpop.f32.mrf.mxu0
        %v2884 = vadd.f32 0.0, %v2883
        %v2885 = vpop.f32.mrf.mxu0
        %v2886 = vadd.f32 0.0, %v2885
        %2887 = vmatmul.bf16.gmra.mxu0 %v2834
        %v2888 = vpop.f32.mrf.mxu0
        %v2889 = vadd.f32 0.0, %v2888
        %v2890 = vpop.f32.mrf.mxu0
        %v2891 = vadd.f32 0.0, %v2890
        %2892 = vmatmul.bf16.gmra.mxu0 %v2837
        %v2893 = vpop.f32.mrf.mxu0
        %v2894 = vadd.f32 0.0, %v2893
        %v2895 = vpop.f32.mrf.mxu0
        %v2896 = vadd.f32 0.0, %v2895
        %2897 = vmatmul.bf16.gmra.mxu0 %v2840
        %v2898 = vpop.f32.mrf.mxu0
        %v2899 = vadd.f32 0.0, %v2898
        %v2900 = vpop.f32.mrf.mxu0
        %v2901 = vadd.f32 0.0, %v2900
        %2902 = vmatmul.bf16.gmra.mxu0 %v2843
        %v2903 = vpop.f32.mrf.mxu0
        %v2904 = vadd.f32 0.0, %v2903
        %v2905 = vpop.f32.mrf.mxu0
        %v2906 = vadd.f32 0.0, %v2905
        %2907 = vmatmul.bf16.gmra.mxu0 %v2846
        %v2908 = vpop.f32.mrf.mxu0
        %v2909 = vadd.f32 0.0, %v2908
        %v2910 = vpop.f32.mrf.mxu0
        %v2911 = vadd.f32 0.0, %v2910
        %2912 = vmatmul.bf16.gmra.mxu0 %v2849
        %v2913 = vpop.f32.mrf.mxu0
        %v2914 = vadd.f32 0.0, %v2913
        %v2915 = vpop.f32.mrf.mxu0
        %v2916 = vadd.f32 0.0, %v2915
        %2917 = vmatmul.bf16.gmra.mxu0 %v2852
        %v2918 = vpop.f32.mrf.mxu0
        %v2919 = vadd.f32 0.0, %v2918
        %v2920 = vpop.f32.mrf.mxu0
        %v2921 = vadd.f32 0.0, %v2920
        %2922 = vmatmul.bf16.gmra.mxu0 %v2855
        %v2923 = vpop.f32.mrf.mxu0
        %v2924 = vadd.f32 0.0, %v2923
        %v2925 = vpop.f32.mrf.mxu0
        %v2926 = vadd.f32 0.0, %v2925
        %2927 = vmatmul.bf16.gmra.mxu0 %v2858
        %v2928 = vpop.f32.mrf.mxu0
        %v2929 = vadd.f32 0.0, %v2928
        %v2930 = vpop.f32.mrf.mxu0
        %v2931 = vadd.f32 0.0, %v2930
        %2932 = vmatmul.bf16.gmra.mxu0 %v2861
        %v2933 = vpop.f32.mrf.mxu0
        %v2934 = vadd.f32 0.0, %v2933
        %v2935 = vpop.f32.mrf.mxu0
        %v2936 = vadd.f32 0.0, %v2935
        %2937 = vmatmul.bf16.gmra.mxu0 %v2864
        %v2938 = vpop.f32.mrf.mxu0
        %v2939 = vadd.f32 0.0, %v2938
        %v2940 = vpop.f32.mrf.mxu0
        %v2941 = vadd.f32 0.0, %v2940
        %2942 = vmatmul.bf16.gmra.mxu0 %v2867
        %v2943 = vpop.f32.mrf.mxu0
        %v2944 = vadd.f32 0.0, %v2943
        %v2945 = vpop.f32.mrf.mxu0
        %v2946 = vadd.f32 0.0, %v2945
        %2947 = vdwg.mxu0
        %v2949 = vsel %vm2601, %v2664, 0
        %v2952 = vsel %vm2601, %v2666, 0
        %v2955 = vsel %vm2601, %v2669, 0
        %v2958 = vsel %vm2601, %v2671, 0
        %v2961 = vsel %vm2601, %v2889, 0
        %v2964 = vsel %vm2601, %v2891, 0
        %v2967 = vsel %vm2601, %v2894, 0
        %v2970 = vsel %vm2601, %v2896, 0
        %2972 = vmatpush.msra.mxu0 0.0
        %2973 = vmatpush.msra.mxu0 0.0
        %2974 = vmatpush.msra.mxu0 0.0
        %2975 = vmatpush.msra.mxu0 0.0
        %2976 = vmatpush.msra.mxu0 0.0
        %2977 = vmatpush.msra.mxu0 0.0
        %2978 = vmatpush.msra.mxu0 0.0
        %2979 = vmatpush.msra.mxu0 0.0
        %2980 = vmatpush.msra.mxu0 0.0
        %2981 = vmatpush.msra.mxu0 0.0
        %2982 = vmatpush.msra.mxu0 0.0
        %2983 = vmatpush.msra.mxu0 0.0
        %2984 = vmatpush.msra.mxu0 %v630
        %2985 = vmatpush.msra.mxu0 %v629
        %2986 = vmatpush.msra.mxu0 %v628
        %2987 = vmatpush.msra.mxu0 %v627
        %2988 = vmatmul.f32.gmra.mxu0 %v2949
        %v2989 = vpop.f32.mrf.mxu0
        %v2990 = vadd.f32 0.0, %v2989
        %2991 = vmatmul.f32.gmra.mxu0 %v2952
        %v2992 = vpop.f32.mrf.mxu0
        %v2993 = vadd.f32 0.0, %v2992
        %2994 = vmatmul.f32.gmra.mxu0 %v2955
        %v2995 = vpop.f32.mrf.mxu0
        %v2996 = vadd.f32 0.0, %v2995
        %2997 = vmatmul.f32.gmra.mxu0 %v2958
        %v2998 = vpop.f32.mrf.mxu0
        %v2999 = vadd.f32 0.0, %v2998
        %3000 = vmatmul.f32.gmra.mxu0 %v2961
        %v3001 = vpop.f32.mrf.mxu0
        %v3002 = vadd.f32 0.0, %v3001
        %3003 = vmatmul.f32.gmra.mxu0 %v2964
        %v3004 = vpop.f32.mrf.mxu0
        %v3005 = vadd.f32 0.0, %v3004
        %3006 = vmatmul.f32.gmra.mxu0 %v2967
        %v3007 = vpop.f32.mrf.mxu0
        %v3008 = vadd.f32 0.0, %v3007
        %3009 = vmatmul.f32.gmra.mxu0 %v2970
        %v3010 = vpop.f32.mrf.mxu0
        %v3011 = vadd.f32 0.0, %v3010
        %3012 = vdwg.mxu0
        %v3014 = vsel %vm2601, %v2654, 0
        %v3017 = vsel %vm2601, %v2656, 0
        %v3020 = vsel %vm2601, %v2659, 0
        %v3023 = vsel %vm2601, %v2661, 0
        %v3026 = vsel %vm2601, %v2879, 0
        %v3029 = vsel %vm2601, %v2881, 0
        %v3032 = vsel %vm2601, %v2884, 0
        %v3035 = vsel %vm2601, %v2886, 0
        %3037 = vmatpush.msra.mxu0 0.0
        %3038 = vmatpush.msra.mxu0 0.0
        %3039 = vmatpush.msra.mxu0 0.0
        %3040 = vmatpush.msra.mxu0 0.0
        %3041 = vmatpush.msra.mxu0 0.0
        %3042 = vmatpush.msra.mxu0 0.0
        %3043 = vmatpush.msra.mxu0 0.0
        %3044 = vmatpush.msra.mxu0 0.0
        %3045 = vmatpush.msra.mxu0 0.0
        %3046 = vmatpush.msra.mxu0 0.0
        %3047 = vmatpush.msra.mxu0 0.0
        %3048 = vmatpush.msra.mxu0 0.0
        %3049 = vmatpush.msra.mxu0 %v626
        %3050 = vmatpush.msra.mxu0 %v625
        %3051 = vmatpush.msra.mxu0 %v624
        %3052 = vmatpush.msra.mxu0 %v623
        %3053 = vmatmul.f32.gmra.mxu0 %v3014
        %v3054 = vpop.f32.mrf.mxu0
        %v3055 = vadd.f32 %v2990, %v3054
        %3056 = vmatmul.f32.gmra.mxu0 %v3017
        %v3057 = vpop.f32.mrf.mxu0
        %v3058 = vadd.f32 %v2993, %v3057
        %3059 = vmatmul.f32.gmra.mxu0 %v3020
        %v3060 = vpop.f32.mrf.mxu0
        %v3061 = vadd.f32 %v2996, %v3060
        %3062 = vmatmul.f32.gmra.mxu0 %v3023
        %v3063 = vpop.f32.mrf.mxu0
        %v3064 = vadd.f32 %v2999, %v3063
        %3065 = vmatmul.f32.gmra.mxu0 %v3026
        %v3066 = vpop.f32.mrf.mxu0
        %v3067 = vadd.f32 %v3002, %v3066
        %3068 = vmatmul.f32.gmra.mxu0 %v3029
        %v3069 = vpop.f32.mrf.mxu0
        %v3070 = vadd.f32 %v3005, %v3069
        %3071 = vmatmul.f32.gmra.mxu0 %v3032
        %v3072 = vpop.f32.mrf.mxu0
        %v3073 = vadd.f32 %v3008, %v3072
        %3074 = vmatmul.f32.gmra.mxu0 %v3035
        %v3075 = vpop.f32.mrf.mxu0
        %v3076 = vadd.f32 %v3011, %v3075
        %3077 = vdwg.mxu0
        %v3079 = vsel %vm2601, %v2674, 0
        %v3082 = vsel %vm2601, %v2676, 0
        %v3085 = vsel %vm2601, %v2679, 0
        %v3088 = vsel %vm2601, %v2681, 0
        %v3091 = vsel %vm2601, %v2899, 0
        %v3094 = vsel %vm2601, %v2901, 0
        %v3097 = vsel %vm2601, %v2904, 0
        %v3100 = vsel %vm2601, %v2906, 0
        %3102 = vmatpush.msra.mxu0 0.0
        %3103 = vmatpush.msra.mxu0 0.0
        %3104 = vmatpush.msra.mxu0 0.0
        %3105 = vmatpush.msra.mxu0 0.0
        %3106 = vmatpush.msra.mxu0 0.0
        %3107 = vmatpush.msra.mxu0 0.0
        %3108 = vmatpush.msra.mxu0 0.0
        %3109 = vmatpush.msra.mxu0 0.0
        %3110 = vmatpush.msra.mxu0 0.0
        %3111 = vmatpush.msra.mxu0 0.0
        %3112 = vmatpush.msra.mxu0 0.0
        %3113 = vmatpush.msra.mxu0 0.0
        %3114 = vmatpush.msra.mxu0 %v634
        %3115 = vmatpush.msra.mxu0 %v633
        %3116 = vmatpush.msra.mxu0 %v632
        %3117 = vmatpush.msra.mxu0 %v631
        %3118 = vmatmul.f32.gmra.mxu0 %v3079
        %v3119 = vpop.f32.mrf.mxu0
        %v3120 = vadd.f32 0.0, %v3119
        %3121 = vmatmul.f32.gmra.mxu0 %v3082
        %v3122 = vpop.f32.mrf.mxu0
        %v3123 = vadd.f32 0.0, %v3122
        %3124 = vmatmul.f32.gmra.mxu0 %v3085
        %v3125 = vpop.f32.mrf.mxu0
        %v3126 = vadd.f32 0.0, %v3125
        %3127 = vmatmul.f32.gmra.mxu0 %v3088
        %v3128 = vpop.f32.mrf.mxu0
        %v3129 = vadd.f32 0.0, %v3128
        %3130 = vmatmul.f32.gmra.mxu0 %v3091
        %v3131 = vpop.f32.mrf.mxu0
        %v3132 = vadd.f32 0.0, %v3131
        %3133 = vmatmul.f32.gmra.mxu0 %v3094
        %v3134 = vpop.f32.mrf.mxu0
        %v3135 = vadd.f32 0.0, %v3134
        %3136 = vmatmul.f32.gmra.mxu0 %v3097
        %v3137 = vpop.f32.mrf.mxu0
        %v3138 = vadd.f32 0.0, %v3137
        %3139 = vmatmul.f32.gmra.mxu0 %v3100
        %v3140 = vpop.f32.mrf.mxu0
        %v3141 = vadd.f32 0.0, %v3140
        %3142 = vdwg.mxu0
        %v3143 = vadd.f32 %v3055, %v3120
        %v3144 = vadd.f32 %v3058, %v3123
        %v3145 = vadd.f32 %v3061, %v3126
        %v3146 = vadd.f32 %v3064, %v3129
        %v3147 = vadd.f32 %v3067, %v3132
        %v3148 = vadd.f32 %v3070, %v3135
        %v3149 = vadd.f32 %v3073, %v3138
        %v3150 = vadd.f32 %v3076, %v3141
        %v3152 = vsel %vm2601, %v2684, 0
        %v3155 = vsel %vm2601, %v2686, 0
        %v3158 = vsel %vm2601, %v2689, 0
        %v3161 = vsel %vm2601, %v2691, 0
        %v3164 = vsel %vm2601, %v2909, 0
        %v3167 = vsel %vm2601, %v2911, 0
        %v3170 = vsel %vm2601, %v2914, 0
        %v3173 = vsel %vm2601, %v2916, 0
        %3175 = vmatpush.msra.mxu0 0.0
        %3176 = vmatpush.msra.mxu0 0.0
        %3177 = vmatpush.msra.mxu0 0.0
        %3178 = vmatpush.msra.mxu0 0.0
        %3179 = vmatpush.msra.mxu0 0.0
        %3180 = vmatpush.msra.mxu0 0.0
        %3181 = vmatpush.msra.mxu0 0.0
        %3182 = vmatpush.msra.mxu0 0.0
        %3183 = vmatpush.msra.mxu0 0.0
        %3184 = vmatpush.msra.mxu0 0.0
        %3185 = vmatpush.msra.mxu0 0.0
        %3186 = vmatpush.msra.mxu0 0.0
        %3187 = vmatpush.msra.mxu0 %v638
        %3188 = vmatpush.msra.mxu0 %v637
        %3189 = vmatpush.msra.mxu0 %v636
        %3190 = vmatpush.msra.mxu0 %v635
        %3191 = vmatmul.f32.gmra.mxu0 %v3152
        %v3192 = vpop.f32.mrf.mxu0
        %v3193 = vadd.f32 0.0, %v3192
        %3194 = vmatmul.f32.gmra.mxu0 %v3155
        %v3195 = vpop.f32.mrf.mxu0
        %v3196 = vadd.f32 0.0, %v3195
        %3197 = vmatmul.f32.gmra.mxu0 %v3158
        %v3198 = vpop.f32.mrf.mxu0
        %v3199 = vadd.f32 0.0, %v3198
        %3200 = vmatmul.f32.gmra.mxu0 %v3161
        %v3201 = vpop.f32.mrf.mxu0
        %v3202 = vadd.f32 0.0, %v3201
        %3203 = vmatmul.f32.gmra.mxu0 %v3164
        %v3204 = vpop.f32.mrf.mxu0
        %v3205 = vadd.f32 0.0, %v3204
        %3206 = vmatmul.f32.gmra.mxu0 %v3167
        %v3207 = vpop.f32.mrf.mxu0
        %v3208 = vadd.f32 0.0, %v3207
        %3209 = vmatmul.f32.gmra.mxu0 %v3170
        %v3210 = vpop.f32.mrf.mxu0
        %v3211 = vadd.f32 0.0, %v3210
        %3212 = vmatmul.f32.gmra.mxu0 %v3173
        %v3213 = vpop.f32.mrf.mxu0
        %v3214 = vadd.f32 0.0, %v3213
        %3215 = vdwg.mxu0
        %v3216 = vadd.f32 %v3143, %v3193
        %v3217 = vadd.f32 %v3144, %v3196
        %v3218 = vadd.f32 %v3145, %v3199
        %v3219 = vadd.f32 %v3146, %v3202
        %v3220 = vadd.f32 %v3147, %v3205
        %v3221 = vadd.f32 %v3148, %v3208
        %v3222 = vadd.f32 %v3149, %v3211
        %v3223 = vadd.f32 %v3150, %v3214
        %v3225 = vsel %vm2601, %v2694, 0
        %v3228 = vsel %vm2601, %v2696, 0
        %v3231 = vsel %vm2601, %v2699, 0
        %v3234 = vsel %vm2601, %v2701, 0
        %v3237 = vsel %vm2601, %v2919, 0
        %v3240 = vsel %vm2601, %v2921, 0
        %v3243 = vsel %vm2601, %v2924, 0
        %v3246 = vsel %vm2601, %v2926, 0
        %3248 = vmatpush.msra.mxu0 0.0
        %3249 = vmatpush.msra.mxu0 0.0
        %3250 = vmatpush.msra.mxu0 0.0
        %3251 = vmatpush.msra.mxu0 0.0
        %3252 = vmatpush.msra.mxu0 0.0
        %3253 = vmatpush.msra.mxu0 0.0
        %3254 = vmatpush.msra.mxu0 0.0
        %3255 = vmatpush.msra.mxu0 0.0
        %3256 = vmatpush.msra.mxu0 0.0
        %3257 = vmatpush.msra.mxu0 0.0
        %3258 = vmatpush.msra.mxu0 0.0
        %3259 = vmatpush.msra.mxu0 0.0
        %3260 = vmatpush.msra.mxu0 %v642
        %3261 = vmatpush.msra.mxu0 %v641
        %3262 = vmatpush.msra.mxu0 %v640
        %3263 = vmatpush.msra.mxu0 %v639
        %3264 = vmatmul.f32.gmra.mxu0 %v3225
        %v3265 = vpop.f32.mrf.mxu0
        %v3266 = vadd.f32 0.0, %v3265
        %3267 = vmatmul.f32.gmra.mxu0 %v3228
        %v3268 = vpop.f32.mrf.mxu0
        %v3269 = vadd.f32 0.0, %v3268
        %3270 = vmatmul.f32.gmra.mxu0 %v3231
        %v3271 = vpop.f32.mrf.mxu0
        %v3272 = vadd.f32 0.0, %v3271
        %3273 = vmatmul.f32.gmra.mxu0 %v3234
        %v3274 = vpop.f32.mrf.mxu0
        %v3275 = vadd.f32 0.0, %v3274
        %3276 = vmatmul.f32.gmra.mxu0 %v3237
        %v3277 = vpop.f32.mrf.mxu0
        %v3278 = vadd.f32 0.0, %v3277
        %3279 = vmatmul.f32.gmra.mxu0 %v3240
        %v3280 = vpop.f32.mrf.mxu0
        %v3281 = vadd.f32 0.0, %v3280
        %3282 = vmatmul.f32.gmra.mxu0 %v3243
        %v3283 = vpop.f32.mrf.mxu0
        %v3284 = vadd.f32 0.0, %v3283
        %3285 = vmatmul.f32.gmra.mxu0 %v3246
        %v3286 = vpop.f32.mrf.mxu0
        %v3287 = vadd.f32 0.0, %v3286
        %3288 = vdwg.mxu0
        %v3289 = vadd.f32 %v3216, %v3266
        %v3290 = vadd.f32 %v3217, %v3269
        %v3291 = vadd.f32 %v3218, %v3272
        %v3292 = vadd.f32 %v3219, %v3275
        %v3293 = vadd.f32 %v3220, %v3278
        %v3294 = vadd.f32 %v3221, %v3281
        %v3295 = vadd.f32 %v3222, %v3284
        %v3296 = vadd.f32 %v3223, %v3287
        %v3298 = vsel %vm2601, %v2704, 0
        %v3301 = vsel %vm2601, %v2706, 0
        %v3304 = vsel %vm2601, %v2709, 0
        %v3307 = vsel %vm2601, %v2711, 0
        %v3310 = vsel %vm2601, %v2929, 0
        %v3313 = vsel %vm2601, %v2931, 0
        %v3316 = vsel %vm2601, %v2934, 0
        %v3319 = vsel %vm2601, %v2936, 0
        %3321 = vmatpush.msra.mxu0 0.0
        %3322 = vmatpush.msra.mxu0 0.0
        %3323 = vmatpush.msra.mxu0 0.0
        %3324 = vmatpush.msra.mxu0 0.0
        %3325 = vmatpush.msra.mxu0 0.0
        %3326 = vmatpush.msra.mxu0 0.0
        %3327 = vmatpush.msra.mxu0 0.0
        %3328 = vmatpush.msra.mxu0 0.0
        %3329 = vmatpush.msra.mxu0 0.0
        %3330 = vmatpush.msra.mxu0 0.0
        %3331 = vmatpush.msra.mxu0 0.0
        %3332 = vmatpush.msra.mxu0 0.0
        %3333 = vmatpush.msra.mxu0 %v646
        %3334 = vmatpush.msra.mxu0 %v645
        %3335 = vmatpush.msra.mxu0 %v644
        %3336 = vmatpush.msra.mxu0 %v643
        %3337 = vmatmul.f32.gmra.mxu0 %v3298
        %v3338 = vpop.f32.mrf.mxu0
        %v3339 = vadd.f32 0.0, %v3338
        %3340 = vmatmul.f32.gmra.mxu0 %v3301
        %v3341 = vpop.f32.mrf.mxu0
        %v3342 = vadd.f32 0.0, %v3341
        %3343 = vmatmul.f32.gmra.mxu0 %v3304
        %v3344 = vpop.f32.mrf.mxu0
        %v3345 = vadd.f32 0.0, %v3344
        %3346 = vmatmul.f32.gmra.mxu0 %v3307
        %v3347 = vpop.f32.mrf.mxu0
        %v3348 = vadd.f32 0.0, %v3347
        %3349 = vmatmul.f32.gmra.mxu0 %v3310
        %v3350 = vpop.f32.mrf.mxu0
        %v3351 = vadd.f32 0.0, %v3350
        %3352 = vmatmul.f32.gmra.mxu0 %v3313
        %v3353 = vpop.f32.mrf.mxu0
        %v3354 = vadd.f32 0.0, %v3353
        %3355 = vmatmul.f32.gmra.mxu0 %v3316
        %v3356 = vpop.f32.mrf.mxu0
        %v3357 = vadd.f32 0.0, %v3356
        %3358 = vmatmul.f32.gmra.mxu0 %v3319
        %v3359 = vpop.f32.mrf.mxu0
        %v3360 = vadd.f32 0.0, %v3359
        %3361 = vdwg.mxu0
        %v3362 = vadd.f32 %v3289, %v3339
        %v3363 = vadd.f32 %v3290, %v3342
        %v3364 = vadd.f32 %v3291, %v3345
        %v3365 = vadd.f32 %v3292, %v3348
        %v3366 = vadd.f32 %v3293, %v3351
        %v3367 = vadd.f32 %v3294, %v3354
        %v3368 = vadd.f32 %v3295, %v3357
        %v3369 = vadd.f32 %v3296, %v3360
        %v3371 = vsel %vm2601, %v2714, 0
        %v3374 = vsel %vm2601, %v2716, 0
        %v3377 = vsel %vm2601, %v2719, 0
        %v3380 = vsel %vm2601, %v2721, 0
        %v3383 = vsel %vm2601, %v2939, 0
        %v3386 = vsel %vm2601, %v2941, 0
        %v3389 = vsel %vm2601, %v2944, 0
        %v3392 = vsel %vm2601, %v2946, 0
        %3394 = vmatpush.msra.mxu0 0.0
        %3395 = vmatpush.msra.mxu0 0.0
        %3396 = vmatpush.msra.mxu0 0.0
        %3397 = vmatpush.msra.mxu0 0.0
        %3398 = vmatpush.msra.mxu0 0.0
        %3399 = vmatpush.msra.mxu0 0.0
        %3400 = vmatpush.msra.mxu0 0.0
        %3401 = vmatpush.msra.mxu0 0.0
        %3402 = vmatpush.msra.mxu0 0.0
        %3403 = vmatpush.msra.mxu0 0.0
        %3404 = vmatpush.msra.mxu0 0.0
        %3405 = vmatpush.msra.mxu0 0.0
        %3406 = vmatpush.msra.mxu0 %v650
        %3407 = vmatpush.msra.mxu0 %v649
        %3408 = vmatpush.msra.mxu0 %v648
        %3409 = vmatpush.msra.mxu0 %v647
        %3410 = vmatmul.f32.gmra.mxu0 %v3371
        %v3411 = vpop.f32.mrf.mxu0
        %v3412 = vadd.f32 0.0, %v3411
        %3413 = vmatmul.f32.gmra.mxu0 %v3374
        %v3414 = vpop.f32.mrf.mxu0
        %v3415 = vadd.f32 0.0, %v3414
        %3416 = vmatmul.f32.gmra.mxu0 %v3377
        %v3417 = vpop.f32.mrf.mxu0
        %v3418 = vadd.f32 0.0, %v3417
        %3419 = vmatmul.f32.gmra.mxu0 %v3380
        %v3420 = vpop.f32.mrf.mxu0
        %v3421 = vadd.f32 0.0, %v3420
        %3422 = vmatmul.f32.gmra.mxu0 %v3383
        %v3423 = vpop.f32.mrf.mxu0
        %v3424 = vadd.f32 0.0, %v3423
        %3425 = vmatmul.f32.gmra.mxu0 %v3386
        %v3426 = vpop.f32.mrf.mxu0
        %v3427 = vadd.f32 0.0, %v3426
        %3428 = vmatmul.f32.gmra.mxu0 %v3389
        %v3429 = vpop.f32.mrf.mxu0
        %v3430 = vadd.f32 0.0, %v3429
        %3431 = vmatmul.f32.gmra.mxu0 %v3392
        %v3432 = vpop.f32.mrf.mxu0
        %v3433 = vadd.f32 0.0, %v3432
        %3434 = vdwg.mxu0
        %v3435 = vadd.f32 %v3362, %v3412
        %v3436 = vadd.f32 %v3363, %v3415
        %v3437 = vadd.f32 %v3364, %v3418
        %v3438 = vadd.f32 %v3365, %v3421
        %v3439 = vadd.f32 %v3366, %v3424
        %v3440 = vadd.f32 %v3367, %v3427
        %v3441 = vadd.f32 %v3368, %v3430
        %v3442 = vadd.f32 %v3369, %v3433
        %v3443 = vperm.slane %v727, 0
        %v3444 = vadd.f32 %v3435, %v3443
        %v3445 = vadd.f32 %v3436, %v3443
        %v3446 = vadd.f32 %v3437, %v3443
        %v3447 = vadd.f32 %v3438, %v3443
        %v3449 = vsel %vm2601, %v607, 0
        %v3452 = vsel %vm2601, %v608, 0
        %v3455 = vsel %vm2601, %v609, 0
        %v3458 = vsel %vm2601, %v610, 0
        %3460 = vmatpush.msra.mxu0 0.0
        %3461 = vmatpush.msra.mxu0 0.0
        %3462 = vmatpush.msra.mxu0 0.0
        %3463 = vmatpush.msra.mxu0 0.0
        %3464 = vmatpush.msra.mxu0 0.0
        %3465 = vmatpush.msra.mxu0 0.0
        %3466 = vmatpush.msra.mxu0 0.0
        %3467 = vmatpush.msra.mxu0 0.0
        %3468 = vmatpush.msra.mxu0 0.0
        %3469 = vmatpush.msra.mxu0 0.0
        %3470 = vmatpush.msra.mxu0 0.0
        %3471 = vmatpush.msra.mxu0 0.0
        %3472 = vmatpush.msra.mxu0 %v654
        %3473 = vmatpush.msra.mxu0 %v653
        %3474 = vmatpush.msra.mxu0 %v652
        %3475 = vmatpush.msra.mxu0 %v651
        %3476 = vmatmul.f32.gmra.mxu0 %v3449
        %v3477 = vpop.f32.mrf.mxu0
        %v3478 = vadd.f32 0.0, %v3477
        %3479 = vmatmul.f32.gmra.mxu0 %v3452
        %v3480 = vpop.f32.mrf.mxu0
        %v3481 = vadd.f32 0.0, %v3480
        %3482 = vmatmul.f32.gmra.mxu0 %v3455
        %v3483 = vpop.f32.mrf.mxu0
        %v3484 = vadd.f32 0.0, %v3483
        %3485 = vmatmul.f32.gmra.mxu0 %v3458
        %v3486 = vpop.f32.mrf.mxu0
        %v3487 = vadd.f32 0.0, %v3486
        %3488 = vdwg.mxu0
        %v3489 = vadd.f32 %v3444, %v3478
        %v3490 = vadd.f32 %v3445, %v3481
        %v3491 = vadd.f32 %v3446, %v3484
        %v3492 = vadd.f32 %v3447, %v3487
        %v3493 = vperm.slane %v727, 1
        %v3494 = vadd.f32 %v3489, %v3493
        %v3495 = vadd.f32 %v3490, %v3493
        %v3496 = vadd.f32 %v3491, %v3493
        %v3497 = vadd.f32 %v3492, %v3493
        %v3498 = vadd.f32 %v3494, %v3495
        %v3499 = vadd.f32 %v3498, %v3496
        %v3500 = vadd.f32 %v3499, %v3497
        %v3501 = vrot.slane %v3500, 4
        %v3502 = vadd.f32 %v3500, %v3501
        %v3503 = vrot.slane %v3502, 2
        %v3504 = vadd.f32 %v3502, %v3503
        %v3505 = vrot.slane %v3504, 1
        %v3506 = vadd.f32 %v3504, %v3505
        %v3507 = vmul.f32 %v3506, 0.03125
        %v3508 = vmul.f32 %v3494, %v3494
        %v3509 = vmul.f32 %v3495, %v3495
        %v3510 = vmul.f32 %v3496, %v3496
        %v3511 = vmul.f32 %v3497, %v3497
        %v3512 = vadd.f32 %v3508, %v3509
        %v3513 = vadd.f32 %v3512, %v3510
        %v3514 = vadd.f32 %v3513, %v3511
        %v3515 = vrot.slane %v3514, 4
        %v3516 = vadd.f32 %v3514, %v3515
        %v3517 = vrot.slane %v3516, 2
        %v3518 = vadd.f32 %v3516, %v3517
        %v3519 = vrot.slane %v3518, 1
        %v3520 = vadd.f32 %v3518, %v3519
        %v3521 = vmul.f32 %v3520, 0.03125
        %v3522 = vmul.f32 %v3507, %v3507
        %v3523 = vsub.f32 %v3521, %v3522
        %v3524 = vmax.f32 %v3523, 0.0
        %v3525 = vsub.f32 %v3494, %v3507
        %v3526 = vsub.f32 %v3495, %v3507
        %v3527 = vsub.f32 %v3496, %v3507
        %v3528 = vsub.f32 %v3497, %v3507
        %v3529 = vperm.slane %v727, 2
        %v3530 = vmul.f32 %v3529, %v3525
        %v3531 = vmul.f32 %v3529, %v3526
        %v3532 = vmul.f32 %v3529, %v3527
        %v3533 = vmul.f32 %v3529, %v3528
        %v3534 = vadd.f32 %v3524, 1e-05
        %v3535 = vrsqrt.pop %v3534
        %v3536 = vmul.f32 %v3535, %v3534
        %v3537 = vmul.f32 %v3536, %v3535
        %v3538 = vmul.f32 0.5, %v3537
        %v3539 = vsub.f32 1.5, %v3538
        %v3540 = vmul.f32 %v3535, %v3539
        %vm3541 = vweird.f32 %v3534
        %vm3542 = vweird.f32 %v3535
        %vm3543 = vmor %vm3541, %vm3542
        %v3544 = vsel %vm3543, %v3535, %v3540
        %v3545 = vmul.f32 %v3530, %v3544
        %v3546 = vmul.f32 %v3531, %v3544
        %v3547 = vmul.f32 %v3532, %v3544
        %v3548 = vmul.f32 %v3533, %v3544
        %v3549 = vperm.slane %v727, 3
        %v3550 = vadd.f32 %v3545, %v3549
        %v3551 = vadd.f32 %v3546, %v3549
        %v3552 = vadd.f32 %v3547, %v3549
        %v3553 = vadd.f32 %v3548, %v3549
        %v3554 = vmax.f32 %v3550, 0.0
        %v3555 = vmax.f32 %v3551, 0.0
        %v3556 = vmax.f32 %v3552, 0.0
        %v3557 = vmax.f32 %v3553, 0.0
        %s3558 = sld [smem:[#allocation5 + %s43]]
        %s3559 = scvt.s32.f32 %s3558
        %v3560 = vstv %s3559
        %v3561 = vmul.f32 %v3560, %v607
        %v3562 = vmul.f32 %v3560, %v608
        %v3563 = vmul.f32 %v3560, %v609
        %v3564 = vmul.f32 %v3560, %v610
        %v3565 = vadd.f32 %v3554, %v3561
        %v3566 = vadd.f32 %v3555, %v3562
        %v3567 = vadd.f32 %v3556, %v3563
        %v3568 = vadd.f32 %v3557, %v3564
        %v3569 = vadd.f32 %v3439, %v3443
        %v3570 = vadd.f32 %v3440, %v3443
        %v3571 = vadd.f32 %v3441, %v3443
        %v3572 = vadd.f32 %v3442, %v3443
        %v3573 = vmax.f32 %v3569, 0.0
        %v3574 = vmax.f32 %v3570, 0.0
        %v3575 = vmax.f32 %v3571, 0.0
        %v3576 = vmax.f32 %v3572, 0.0
        %v3577 = vadd.f32 %v3565, %v3573
        %v3578 = vadd.f32 %v3566, %v3574
        %v3579 = vadd.f32 %v3567, %v3575
        %v3580 = vadd.f32 %v3568, %v3576
        %v3581 = vadd.f32 %v3577, %v3578
        %v3582 = vadd.f32 %v3581, %v3579
        %v3583 = vadd.f32 %v3582, %v3580
        %v3584 = vrot.slane %v3583, 4
        %v3585 = vadd.f32 %v3583, %v3584
        %v3586 = vrot.slane %v3585, 2
        %v3587 = vadd.f32 %v3585, %v3586
        %v3588 = vrot.slane %v3587, 1
        %v3589 = vadd.f32 %v3587, %v3588
        %v3590 = vmul.f32 %v3589, 0.03125
        %v3591 = vmul.f32 %v3577, %v3577
        %v3592 = vmul.f32 %v3578, %v3578
        %v3593 = vmul.f32 %v3579, %v3579
        %v3594 = vmul.f32 %v3580, %v3580
        %v3595 = vadd.f32 %v3591, %v3592
        %v3596 = vadd.f32 %v3595, %v3593
        %v3597 = vadd.f32 %v3596, %v3594
        %v3598 = vrot.slane %v3597, 4
        %v3599 = vadd.f32 %v3597, %v3598
        %v3600 = vrot.slane %v3599, 2
        %v3601 = vadd.f32 %v3599, %v3600
        %v3602 = vrot.slane %v3601, 1
        %v3603 = vadd.f32 %v3601, %v3602
        %v3604 = vmul.f32 %v3603, 0.03125
        %v3605 = vmul.f32 %v3590, %v3590
        %v3606 = vsub.f32 %v3604, %v3605
        %v3607 = vmax.f32 %v3606, 0.0
        %v3608 = vsub.f32 %v3577, %v3590
        %v3609 = vsub.f32 %v3578, %v3590
        %v3610 = vsub.f32 %v3579, %v3590
        %v3611 = vsub.f32 %v3580, %v3590
        %v3612 = vperm.slane %v728, 0
        %v3613 = vmul.f32 %v3612, %v3608
        %v3614 = vmul.f32 %v3612, %v3609
        %v3615 = vmul.f32 %v3612, %v3610
        %v3616 = vmul.f32 %v3612, %v3611
        %v3617 = vadd.f32 %v3607, 1e-05
        %v3618 = vrsqrt.pop %v3617
        %v3619 = vmul.f32 %v3618, %v3617
        %v3620 = vmul.f32 %v3619, %v3618
        %v3621 = vmul.f32 0.5, %v3620
        %v3622 = vsub.f32 1.5, %v3621
        %v3623 = vmul.f32 %v3618, %v3622
        %vm3624 = vweird.f32 %v3617
        %vm3625 = vweird.f32 %v3618
        %vm3626 = vmor %vm3624, %vm3625
        %v3627 = vsel %vm3626, %v3618, %v3623
        %v3628 = vmul.f32 %v3613, %v3627
        %v3629 = vmul.f32 %v3614, %v3627
        %v3630 = vmul.f32 %v3615, %v3627
        %v3631 = vmul.f32 %v3616, %v3627
        %v3632 = vperm.slane %v728, 1
        %v3633 = vadd.f32 %v3628, %v3632
        %v3634 = vadd.f32 %v3629, %v3632
        %v3635 = vadd.f32 %v3630, %v3632
        %v3636 = vadd.f32 %v3631, %v3632
        %3637 = vst [vmem:[#allocation2] sm:$0xff] %v3633
        %3638 = vst [vmem:[#allocation2 + $0x8] sm:$0xff] %v3634
        %3639 = vst [vmem:[#allocation2 + $0x10] sm:$0xff] %v3635
        %3640 = vst [vmem:[#allocation2 + $0x18] sm:$0xff] %v3636
        %3641 = vst.msk [vmem:[#allocation3] sm:$0xff] %vm1465, %v2489
        %3642 = vst.msk [vmem:[#allocation3 + $0x8] sm:$0xff] %vm1465, %v2490
        %3643 = vst.msk [vmem:[#allocation3 + $0x10] sm:$0xff] %vm1465, %v2491
        %3644 = vst.msk [vmem:[#allocation3 + $0x18] sm:$0xff] %vm1465, %v2492
        %3645 = vst.msk [vmem:[#allocation3 + $0x20] sm:$0xff] %vm1465, %v2493
        %3646 = vst.msk [vmem:[#allocation3 + $0x28] sm:$0xff] %vm1465, %v2494
        %3647 = vst.msk [vmem:[#allocation3 + $0x30] sm:$0xff] %vm1465, %v2495
        %3648 = vst.msk [vmem:[#allocation3 + $0x38] sm:$0xff] %vm1465, %v2496
        %3649 = vst.msk [vmem:[#allocation3 + $0x40] sm:$0xff] %vm1465, %v2497
        %3650 = vst.msk [vmem:[#allocation3 + $0x48] sm:$0xff] %vm1465, %v2498
        %3651 = vst.msk [vmem:[#allocation3 + $0x50] sm:$0xff] %vm1465, %v2499
        %3652 = vst.msk [vmem:[#allocation3 + $0x58] sm:$0xff] %vm1465, %v2500
        %v3653 = vpack.c.bf16 %v3633, %v3633
        %v3654 = vpack.c.bf16 %v3634, %v3634
        %v3655 = vpack.c.bf16 %v3635, %v3635
        %v3656 = vpack.c.bf16 %v3636, %v3636
        %3657 = vst [vmem:[%s547] sm:$0xf] %v3653
        %3658 = vst [vmem:[%s547 + $0x4] sm:$0xf] %v3654
        %3659 = vst [vmem:[%s547 + $0x8] sm:$0xf] %v3655
        %3660 = vst [vmem:[%s547 + $0xc] sm:$0xf] %v3656
        %v3661 = vld [vmem:[%s6] sm:$0x3]
        %v3663 = vsel %vm2601, %v3661, 0
        %3665 = vmatpush.msra.mxu0 0.0
        %3666 = vmatpush.msra.mxu0 0.0
        %3667 = vmatpush.msra.mxu0 0.0
        %3668 = vmatpush.msra.mxu0 0.0
        %3669 = vmatpush.msra.mxu0 0.0
        %3670 = vmatpush.msra.mxu0 0.0
        %3671 = vmatpush.msra.mxu0 0.0
        %3672 = vmatpush.msra.mxu0 0.0
        %3673 = vmatpush.msra.mxu0 0.0
        %3674 = vmatpush.msra.mxu0 0.0
        %3675 = vmatpush.msra.mxu0 0.0
        %3676 = vmatpush.msra.mxu0 0.0
        %3677 = vmatpush.msra.mxu0 %v3636
        %3678 = vmatpush.msra.mxu0 %v3635
        %3679 = vmatpush.msra.mxu0 %v3634
        %3680 = vmatpush.msra.mxu0 %v3633
        %3681 = vmatmul.f32.gmra.mxu0 %v3663
        %v3682 = vpop.f32.mrf.mxu0
        %v3683 = vadd.f32 0.0, %v3682
        %3684 = vdwg.mxu0
        %v3685 = vpack.c.bf16 %v3683, %v3683
        %3686 = vst [vmem:[%s553] sm:$0x1] %v3685
        %s3687 = sand.u32 %s307, 1
        %s3688 = scalar_lea.sflag [#allocation8], %s3687
        %s3689 = sand.u32 %s307, 1
        %s3690 = smul.addr %s3689, 16
        %s3691 = scalar_lea.vmem [#allocation12], %s3690
        %s3692 = sand.u32 %s333, 1
        %s3693 = scalar_lea.sflag [#allocation14], %s3692
        %s3694 = sand.u32 %s333, 1
        %s3695 = scalar_lea.vmem [#allocation13], %s3694
        // Predicated region
        $region81: #{tpu_custom_call.1} parent=63 // pred_check
          %p3696 = pneg %p317
        $region82: #{tpu_custom_call.1} parent=63 // pred_check_branch
          %3698 = sbr.rel (%p3696) target = $region84
        $region83: #{tpu_custom_call.1} parent=63 // pred_region
          %3700 = vsyncadd %s3688, 0
          %s3701 = smul.addr %s43, 4
          %s3702 = smul.addr %s3701, 4
          %s3703 = scalar_lea.hbm %s12, %s3702
          %s3704 = sshll.u32 %s3691, 4
          %s3705 = int_to_ptr.vmem [resolvable:$true] %s3704
          %s3706 = sshll.u32 %s3703, 4
          %s3707 = int_to_ptr.hbm [resolvable:$true] %s3706
          %3712 = dma.vmem_to_hbm [thread:$0]  %s3705, 256, %s3707, %s3688, 64, 64, 4
        $region84: #{tpu_custom_call.1} parent=63 // pred_fallthru
          _
        // Predicated region
        $region85: #{tpu_custom_call.1} parent=63 // pred_check
          %p3713 = pneg %p343
        $region86: #{tpu_custom_call.1} parent=63 // pred_check_branch
          %3715 = sbr.rel (%p3713) target = $region88
        $region87: #{tpu_custom_call.1} parent=63 // pred_region
          %3717 = vsyncadd %s3693, 0
          %s3718 = scalar_lea.hbm %s13, %s43
          %s3720 = sshll.u32 %s3695, 4
          %s3721 = int_to_ptr.vmem [resolvable:$true] %s3720
          %s3722 = sshll.u32 %s3718, 4
          %s3723 = int_to_ptr.hbm [resolvable:$true] %s3722
          %3725 = dma.vmem_to_hbm [thread:$0]  %s3721, 16, %s3723, %s3693
        $region88: #{tpu_custom_call.1} parent=63 // pred_fallthru
          _
      $region64: #{tpu_custom_call.1} parent=5 // pred_fallthru
        _
      %p3726 = scmp.le.s32.totalorder 2, %s38
      // Predicated region
      $region89: #{tpu_custom_call.1} parent=5 // pred_check
        %p3727 = pneg %p3726
      $region90: #{tpu_custom_call.1} parent=5 // pred_check_branch
        %3729 = sbr.rel (%p3727) target = $region92
      $region91: #{tpu_custom_call.1} parent=5 // pred_region
        %s3730 = ssub.s32 %s38, 2
        // Predicated region
        $region93: #{tpu_custom_call.1} parent=91 // pred_check
          %p3731 = pneg %p323
        $region94: #{tpu_custom_call.1} parent=91 // pred_check_branch
          %3733 = sbr.rel (%p3731) target = $region96
        $region95: #{tpu_custom_call.1} parent=91 // pred_region
          %s3734 = sand.u32 %s308, 1
          %s3735 = scalar_lea.sflag [#allocation8], %s3734
          %s3736 = sand.u32 %s308, 1
          %s3737 = smul.addr %s3736, 16
          %s3738 = scalar_lea.vmem [#allocation12], %s3737
          %3740 = dma.done %s3735, 256
        $region96: #{tpu_custom_call.1} parent=91 // pred_fallthru
          _
        // Predicated region
        $region97: #{tpu_custom_call.1} parent=91 // pred_check
          %p3741 = pneg %p349
        $region98: #{tpu_custom_call.1} parent=91 // pred_check_branch
          %3743 = sbr.rel (%p3741) target = $region100
        $region99: #{tpu_custom_call.1} parent=91 // pred_region
          %s3744 = sand.u32 %s334, 1
          %s3745 = scalar_lea.sflag [#allocation14], %s3744
          %s3746 = sand.u32 %s334, 1
          %s3747 = scalar_lea.vmem [#allocation13], %s3746
          %3749 = dma.done %s3745, 16
        $region100: #{tpu_custom_call.1} parent=91 // pred_fallthru
          _
      $region92: #{tpu_custom_call.1} parent=5 // pred_fallthru
        _
    $region6: #{tpu_custom_call.1} parent=1 // loop_footer
      %s42 = sadd.s32 1, %s38
    $region7: #{tpu_custom_call.1} parent=1 // loop_footer_branch
      %37 = sbr.rel target = $region3
    $region8: #{tpu_custom_call.1} parent=1 // loop_exit
      _
    %3750 = vsyncpa [#allocation7], 1
    %s3751 = scalar_lea.sflag [#allocation7], 1
    %3752 = vsyncpa %s3751, 1
    %3753 = vsyncpa [#allocation10], 1
    %s3754 = scalar_lea.sflag [#allocation10], 1
    %3755 = vsyncpa %s3754, 1
    %3756 = vsyncpa [#allocation8], 1
    %s3757 = scalar_lea.sflag [#allocation8], 1
    %3758 = vsyncpa %s3757, 1
    %3759 = vsyncpa [#allocation14], 1
    %s3760 = scalar_lea.sflag [#allocation14], 1
    %3761 = vsyncpa %s3760, 1

</llo_original>
